<compile_context>
chip_gen: v7x
topology: tpu7x:2x2x1
jax: 0.10.0
libtpu: 0.0.40
codegen_flags: <defaults>
</compile_context>

<pallas_src>
import numpy as np
import jax
import jax.numpy as jnp
from jax.experimental import pallas as pl
from jax.experimental.pallas import tpu as pltpu

F32 = jnp.float32


# ---------------------------------------------------------------- kernel utils
def _dot(a, b, contract, cdt):
    """MXU matmul: operands cast to the compute dtype (bf16), f32 accumulation.
    Only NN / NT orientations are used (native MXU, no lhs transposes)."""
    return jax.lax.dot_general(
        a.astype(cdt), b.astype(cdt),
        dimension_numbers=(contract, ((), ())),
        preferred_element_type=F32)


def _dot_f32(a, b, contract):
    """f32 matmul for the tiny 24-token dots (avoids bf16 24-row repacking)."""
    return jax.lax.dot_general(
        a, b, dimension_numbers=(contract, ((), ())),
        preferred_element_type=F32)


def _softmax_lastdim(x):
    m = jnp.max(x, axis=-1, keepdims=True)
    e = jnp.exp(x - m)
    return e * pl.reciprocal(jnp.sum(e, axis=-1, keepdims=True), approx=True)


def _layernorm2d(x, gamma, beta, eps=1e-5):
    # torch.nn.LayerNorm([C_v, N_tok]): normalize jointly over BOTH trailing dims.
    mu = jnp.mean(x)
    var = jnp.mean((x - mu) ** 2)
    return (x - mu) * jax.lax.rsqrt(var + eps) * gamma + beta


# ------------------------------------------------- kernel 1: tokenizer + xformer
def tok_tf_kernel(x_ref,            # (1, C_fm, TL)   f32 (cast in-kernel)
                  wav_ref,          # (N_tok + C_v, C_fm) bf16, fused [W_a/sqrt(C_fm); W_v]
                  wkqv_ref,         # (3*C_v, C_v)    bf16, fused [W_k; W_q/sqrt(C_v); W_v]
                  f1_ref, f2_ref,   # (C_v, C_v)      bf16
                  lng_ref, lnb_ref, # (N_tok, C_v)    f32 (transposed LN affine)
                  tout_ref,         # (1, N_tok, C_v) f32  rows-of-tokens (lane-dense)
                  m_sc, s_sc, acc_sc):
    cdt = wav_ref.dtype
    n_tok, c_v = lng_ref.shape
    l = pl.program_id(1)
    nl = pl.num_programs(1)

    @pl.when(l == 0)
    def _():
        m_sc[...] = jnp.full_like(m_sc, -jnp.inf)
        s_sc[...] = jnp.zeros_like(s_sc)
        acc_sc[...] = jnp.zeros_like(acc_sc)

    # ---- FilterBasedTokenizer: online (flash-style) softmax over L tiles ----
    x = x_ref[0]                                            # (C_fm, TL) f32
    av = _dot(wav_ref[...], x, ((1,), (0,)), cdt)           # (N_tok + C_v, TL)
    a = av[:n_tok]                                          # scale folded into W_a
    v = av[n_tok:]                                          # (C_v, TL)
    m_prev = m_sc[...]
    m_new = jnp.maximum(m_prev, jnp.max(a, axis=-1, keepdims=True))
    alpha = jnp.exp(m_prev - m_new)
    p = jnp.exp(a - m_new)                                  # (N_tok, TL) f32
    s_sc[...] = alpha * s_sc[...] + jnp.sum(p, axis=-1, keepdims=True)
    acc_sc[...] = alpha * acc_sc[...] + _dot(p, v, ((1,), (1,)), cdt)
    m_sc[...] = m_new

    # ---- Transformer (runs once, after the last L tile) ----------------------
    @pl.when(l == nl - 1)
    def _():
        t = acc_sc[...] * pl.reciprocal(s_sc[...], approx=True)   # (N_tok, C_v)
        kqv = _dot(t, wkqv_ref[...], ((1,), (1,)), cdt)           # (N_tok, 3*C_v)
        k = kqv[:, :c_v]
        q = kqv[:, c_v:2 * c_v]                                   # scale folded into W_q
        vv = kqv[:, 2 * c_v:]
        # kqT[u,t] = sum_c K[c,t] Q[c,u]; torch softmax(dim=1) == last dim here.
        kqT = _dot_f32(q, k, ((1,), (1,)))                        # (N_tok, N_tok) f32
        attnT = _softmax_lastdim(kqT)
        sa = _dot_f32(attnT, vv, ((1,), (0,)))                    # (N_tok, C_v)
        td = _layernorm2d(t + sa, lng_ref[...], lnb_ref[...])
        h = jnp.maximum(_dot(td, f1_ref[...], ((1,), (1,)), cdt), 0.0)
        tout = _layernorm2d(td + _dot(h, f2_ref[...], ((1,), (1,)), cdt),
                            lng_ref[...], lnb_ref[...])
        tout_ref[0] = tout.astype(tout_ref.dtype)                 # lane-dense store


# --------------------------------------------------------- kernel 2: projector
def projector_kernel(x_ref,          # (1, C_fm, TL)   f32
                     t_ref,          # (1, N_tok, C_v) f32 rows-of-tokens
                     pq_ref,         # (C_fm, C_fm)    bf16
                     pk_ref, pv_ref, # (C_fm, C_v)     bf16 (p_k pre-scaled)
                     xout_ref):      # (1, C_fm, TL)
    cdt = pq_ref.dtype
    xf = x_ref[0]                                           # (C_fm, TL) f32
    t = t_ref[0]                                            # (N_tok, C_v)
    qx = _dot(pq_ref[...], xf, ((1,), (0,)), cdt)           # (C_fm, TL)
    kt = _dot(t, pk_ref[...], ((1,), (1,)), cdt)            # (N_tok, C_fm)
    vals = _dot(pv_ref[...], t, ((1,), (1,)), cdt)          # (C_fm, N_tok)
    # simT[t,l] = sim[l,t] (already scaled via p_k); torch softmax(dim=2) over
    # tokens == axis 0 here, keeping the big L dim on the lanes.
    simT = _dot(kt, qx, ((1,), (0,)), cdt)                  # (N_tok, TL)
    m = jnp.max(simT, axis=0, keepdims=True)
    e = jnp.exp(simT - m)
    aw2T = e / jnp.sum(e, axis=0, keepdims=True)            # exact recip: feeds X_out
    delta = _dot(vals, aw2T, ((1,), (0,)), cdt)             # (C_fm, TL)
    xout_ref[0] = (xf + delta).astype(xout_ref.dtype)       # f32 residual


# -------------------------------------------------------------------- wrapper
def pack_params(params, compute_dtype=jnp.bfloat16):
    """One-time weight packing (fusion + layout + scale folding + dtype).
    Call ONCE at init and reuse the result for every forward call."""
    cdt = compute_dtype
    c_fm = params["w_a"].shape[1]
    c_v = params["w_key"].shape[1]
    inv_s_fm = 1.0 / np.sqrt(c_fm)
    inv_s_cv = 1.0 / np.sqrt(c_v)
    return {
        "w_av":  jnp.concatenate([params["w_a"] * inv_s_fm,
                                  params["w_v_tok"]], axis=0).astype(cdt),
        "w_kqv": jnp.concatenate([params["w_key"],
                                  params["w_query"] * inv_s_cv,
                                  params["w_value"]], axis=0).astype(cdt),
        "f1":    params["f1"].astype(cdt),
        "f2":    params["f2"].astype(cdt),
        "ln_g":  params["ln_gamma"].T.astype(F32),           # (N_tok, C_v)
        "ln_b":  params["ln_beta"].T.astype(F32),
        "p_q":   params["p_q"].astype(cdt),
        "p_k":   (params["p_k"] * inv_s_fm).astype(cdt),
        "p_v":   params["p_v"].astype(cdt),
    }


def _const_spec(arr):
    """Full-array weight block, constant across the grid, single-buffered."""
    nd = arr.ndim
    idx = lambda b, l, _nd=nd: (0,) * _nd
    try:
        return pl.BlockSpec(arr.shape, idx, pipeline_mode=pl.Buffered(1))
    except TypeError:   # fallback if pipeline_mode kwarg is unavailable
        return pl.BlockSpec(arr.shape, idx)


def _vmem_limit_bytes():
    """Most of VMEM, with headroom for Mosaic internal scratch:
    ~48 MiB on v7x (64 MiB/core), ~100 MiB on v5e/v6e (128 MiB)."""
    cap = 128 * 1024 * 1024
    try:
        cap = int(pltpu.get_tpu_info().vmem_capacity_bytes)
    except Exception:
        pass
    return max(32 * 1024 * 1024, min(cap - 16 * 1024 * 1024, 100 * 1024 * 1024))


def _pick_l_tile(length, target=512):
    """Largest multiple-of-128 tile <= target dividing L (>=512 lanes keeps the
    projector near HBM roofline); fall back to the full length."""
    if length <= target:
        return length
    for t in range(target, 127, -128):
        if length % t == 0:
            return t
    return length


def visual_transformer_forward(x, packed, l_tile=None, x_out_dtype=jnp.float32):
    """x: (B, C_fm, L) f32 (NOT pre-cast; matmul operands are cast in-kernel).
    packed: cached result of pack_params().
    Returns (X_out (B, C_fm, L), T_out (B, C_v, N_tok) f32) like the torch
    module with use_projector=True."""
    B, C_fm, L = x.shape
    N_tok, C_v = packed["ln_g"].shape
    TL = _pick_l_tile(L) if l_tile is None else l_tile
    assert (L % TL == 0 and TL % 128 == 0) or TL == L
    nL = L // TL
    vmem_limit = _vmem_limit_bytes()

    w1 = [packed["w_av"], packed["w_kqv"], packed["f1"], packed["f2"],
          packed["ln_g"], packed["ln_b"]]
    w2 = [packed["p_q"], packed["p_k"], packed["p_v"]]
    bytes_w1 = sum(int(np.prod(a.shape)) * a.dtype.itemsize for a in w1)
    bytes_w2 = sum(int(np.prod(a.shape)) * a.dtype.itemsize for a in w2)
    bytes_x = 4 * B * C_fm * L
    bytes_t = 4 * B * N_tok * C_v

    # --------- kernel 1: tokenizer (online softmax over L tiles) + transformer
    flops1 = B * (2 * (N_tok + C_v) * C_fm * L + 2 * N_tok * C_v * L
                  + 2 * N_tok * 3 * C_v * C_v + 4 * N_tok * N_tok * C_v
                  + 4 * N_tok * C_v * C_v)
    trans1 = B * (N_tok * L + N_tok * N_tok + N_tok * nL)
    t_rows = pl.pallas_call(
        tok_tf_kernel,
        grid=(B, nL),
        in_specs=[pl.BlockSpec((1, C_fm, TL), lambda b, l: (b, 0, l))]
                 + [_const_spec(a) for a in w1],
        out_specs=pl.BlockSpec((1, N_tok, C_v), lambda b, l: (b, 0, 0)),
        out_shape=jax.ShapeDtypeStruct((B, N_tok, C_v), F32),
        scratch_shapes=[pltpu.VMEM((N_tok, 1), F32),      # running max
                        pltpu.VMEM((N_tok, 1), F32),      # running sum
                        pltpu.VMEM((N_tok, C_v), F32)],   # running T accumulator
        compiler_params=pltpu.CompilerParams(
            dimension_semantics=("parallel", "arbitrary"),
            vmem_limit_bytes=vmem_limit),
        cost_estimate=pl.CostEstimate(
            flops=int(flops1), transcendentals=int(trans1),
            bytes_accessed=int(bytes_x + bytes_w1 + bytes_t)),
    )(x, *w1)

    # --------- kernel 2: projector, tiled over L (columns are independent)
    flops2 = B * (2 * C_fm * C_fm * L + 4 * N_tok * C_fm * L
                  + nL * 4 * N_tok * C_v * C_fm)
    trans2 = B * N_tok * L
    x_out = pl.pallas_call(
        projector_kernel,
        grid=(B, nL),
        in_specs=[pl.BlockSpec((1, C_fm, TL), lambda b, l: (b, 0, l)),
                  pl.BlockSpec((1, N_tok, C_v), lambda b, l: (b, 0, 0))]
                 + [_const_spec(a) for a in w2],
        out_specs=pl.BlockSpec((1, C_fm, TL), lambda b, l: (b, 0, l)),
        out_shape=jax.ShapeDtypeStruct((B, C_fm, L), x_out_dtype),
        compiler_params=pltpu.CompilerParams(
            dimension_semantics=("parallel", "parallel"),
            vmem_limit_bytes=vmem_limit),
        cost_estimate=pl.CostEstimate(
            flops=int(flops2), transcendentals=int(trans2),
            bytes_accessed=int(2 * bytes_x + bytes_w2 + bytes_t)),
    )(x, t_rows, *w2)

    # Module contract: visual tokens are (B, C_v, N_tok); the kernels keep the
    # lane-dense rows-of-tokens layout, transpose outside (layout plumbing).
    return x_out, jnp.swapaxes(t_rows, 1, 2)


# ------------------------------------------------------------- pure-JAX ref
def ref_forward(x, p, compute_dtype=jnp.bfloat16):
    """Reference of the torch semantics at the kernel's precision policy
    (bf16 matmul operands, f32 accumulation, f32 residual add)."""
    cdt = compute_dtype

    def ein(eq, a, b):
        return jnp.einsum(eq, a.astype(cdt), b.astype(cdt),
                          preferred_element_type=F32)

    c_fm = x.shape[1]
    A = ein("oi,bil->bol", p["w_a"], x) / np.sqrt(c_fm)
    V = ein("oi,bil->bol", p["w_v_tok"], x)
    aw = jax.nn.softmax(A, axis=2)
    T = ein("btl,bcl->bct", aw, V)                        # (B, C_v, N_tok)
    c_v = T.shape[1]
    K = ein("oi,bil->bol", p["w_key"], T)
    Q = ein("oi,bil->bol", p["w_query"], T)
    kq = ein("bct,bcu->btu", K, Q)
    attn = jax.nn.softmax(kq / np.sqrt(c_v), axis=1)
    Vals = ein("oi,bil->bol", p["w_value"], T)

    def ln(z):
        mu = jnp.mean(z, axis=(1, 2), keepdims=True)
        var = jnp.mean((z - mu) ** 2, axis=(1, 2), keepdims=True)
        return (z - mu) * jax.lax.rsqrt(var + 1e-5) * p["ln_gamma"] + p["ln_beta"]

    Td = ln(T + ein("bct,btu->bcu", Vals, attn))
    Tout = ln(Td + ein("oi,bil->bol", p["f2"],
                       jnp.maximum(ein("oi,bil->bol", p["f1"], Td), 0.0)))
    Qx = ein("oi,bil->bol", p["p_q"], x)
    Kt = ein("oi,bil->bol", p["p_k"], Tout)
    sim = ein("bcl,bct->blt", Qx, Kt)
    aw2 = jax.nn.softmax(sim / np.sqrt(c_fm), axis=2)
    vals = ein("oi,bil->bol", p["p_v"], Tout)
    Xout = x + ein("bct,blt->bcl", vals, aw2)             # f32 residual
    return Xout, Tout


# ------------------------------------------------------------------- main
if __name__ == "__main__":
    # Small, lane-friendly shapes.  NOTE: the torch Transformer hard-codes
    # nn.LayerNorm([visual_tokens_cs, 24]), so the tokenizer must produce
    # exactly 24 visual tokens.
    B, C_fm, H, W = 2, 128, 16, 16
    L = H * W                     # 256  (Conv1d length = flattened spatial)
    C_v = 128                     # visual_tokens_cs (small stand-in for 1024)
    N_tok = 24                    # n_visual_tokens (forced by LayerNorm([C_v, 24]))

    key = jax.random.PRNGKey(0)
    ks = jax.random.split(key, 16)

    def mkw(k, out_c, in_c):
        # Conv1d(out, in, kernel_size=1, bias=False) weight, squeezed to (out, in).
        return jax.random.normal(k, (out_c, in_c), jnp.float32) / np.sqrt(in_c)

    params = {
        # FilterBasedTokenizer
        "w_a":     mkw(ks[0], N_tok, C_fm),
        "w_v_tok": mkw(ks[1], C_v, C_fm),
        # Transformer
        "w_key":   mkw(ks[2], C_v, C_v),
        "w_query": mkw(ks[3], C_v, C_v),
        "w_value": mkw(ks[4], C_v, C_v),
        "f1":      mkw(ks[5], C_v, C_v),
        "f2":      mkw(ks[6], C_v, C_v),
        "ln_gamma": 1.0 + 0.1 * jax.random.normal(ks[7], (C_v, N_tok), jnp.float32),
        "ln_beta":  0.1 * jax.random.normal(ks[8], (C_v, N_tok), jnp.float32),
        # Projector
        "p_q":     mkw(ks[9],  C_fm, C_fm),
        "p_k":     mkw(ks[10], C_fm, C_v),
        "p_v":     mkw(ks[11], C_fm, C_v),
    }

    # feature_map: (B, C_fm, H*W)   (NCHW with spatial flattened, per Conv1d)
    x = jax.random.normal(ks[12], (B, C_fm, L), jnp.float32)

    # Weight packing done ONCE (cached) — not on the per-call path.
    packed = pack_params(params)

    fwd = jax.jit(visual_transformer_forward,
                  static_argnames=("l_tile", "x_out_dtype"))
    # l_tile=128 exercises the L-tiled (online-softmax / pipelined) path: nL=2.
    x_out, t_out = fwd(x, packed, l_tile=128)
    jax.block_until_ready((x_out, t_out))

    # Correctness check against a pure-JAX reference of the torch semantics at
    # matching precision.  Tolerance covers approx-reciprocal softmaxes (~1e-3).
    x_ref, t_ref = ref_forward(x, params)
    assert x_out.shape == (B, C_fm, L) and t_out.shape == (B, C_v, N_tok)
    ok_x = np.allclose(np.asarray(x_out), np.asarray(x_ref), rtol=2e-2, atol=2e-2)
    ok_t = np.allclose(np.asarray(t_out), np.asarray(t_ref), rtol=2e-2, atol=2e-2)
    assert ok_x and ok_t, "Pallas kernel output mismatch vs reference"

    print("KERNEL_OK")
</pallas_src>

<mosaic_0001>
module attributes {stable_mosaic.version = 11 : i64} {
  func.func @projector_kernel(%arg0: i32, %arg1: i32, %arg2: memref<1x128x128xf32, #tpu.memory_space<vmem>>, %arg3: memref<1x24x128xf32, #tpu.memory_space<vmem>>, %arg4: memref<128x128xbf16, #tpu.memory_space<vmem>>, %arg5: memref<128x128xbf16, #tpu.memory_space<vmem>>, %arg6: memref<128x128xbf16, #tpu.memory_space<vmem>>, %arg7: memref<1x128x128xf32, #tpu.memory_space<vmem>>) attributes {dimension_semantics = [#tpu.dimension_semantics<parallel>, #tpu.dimension_semantics<parallel>], iteration_bounds = array<i64: 2, 2>, scalar_prefetch = 0 : i64, scratch_operands = 0 : i64, tpu.core_type = #tpu.core_type<tc>, window_params = [{transform_indices = @transform_0, window_bounds = array<i64: 1, 128, 128>}, {transform_indices = @transform_1, window_bounds = array<i64: 1, 24, 128>}, {pipeline_mode = #tpu.pipeline_mode<synchronous>, transform_indices = @transform_2, window_bounds = array<i64: 128, 128>}, {pipeline_mode = #tpu.pipeline_mode<synchronous>, transform_indices = @transform_3, window_bounds = array<i64: 128, 128>}, {pipeline_mode = #tpu.pipeline_mode<synchronous>, transform_indices = @transform_4, window_bounds = array<i64: 128, 128>}, {transform_indices = @transform_5, window_bounds = array<i64: 1, 128, 128>}]} {
    %c0 = arith.constant 0 : index
    %c0_0 = arith.constant 0 : index
    %c0_1 = arith.constant 0 : index
    %0 = vector.load %arg2[%c0, %c0_0, %c0_1] : memref<1x128x128xf32, #tpu.memory_space<vmem>>, vector<1x128x128xf32>
    %1 = vector.shape_cast %0 : vector<1x128x128xf32> to vector<128x128xf32>
    %c0_2 = arith.constant 0 : index
    %c0_3 = arith.constant 0 : index
    %c0_4 = arith.constant 0 : index
    %2 = vector.load %arg3[%c0_2, %c0_3, %c0_4] : memref<1x24x128xf32, #tpu.memory_space<vmem>>, vector<1x24x128xf32>
    %3 = vector.shape_cast %2 : vector<1x24x128xf32> to vector<24x128xf32>
    %c0_5 = arith.constant 0 : index
    %c0_6 = arith.constant 0 : index
    %4 = vector.load %arg4[%c0_5, %c0_6] : memref<128x128xbf16, #tpu.memory_space<vmem>>, vector<128x128xbf16>
    %5 = arith.truncf %1 : vector<128x128xf32> to vector<128x128xbf16>
    %cst = arith.constant dense<0.000000e+00> : vector<128x128xf32>
    %6 = tpu.matmul %4, %5, %cst {dimension_numbers = #tpu.dot_dimension_numbers<[1], [0], [0], [1], [0, 0, 1, 1], [], []>} : vector<128x128xbf16>, vector<128x128xbf16>, vector<128x128xf32> -> vector<128x128xf32>
    %c0_7 = arith.constant 0 : index
    %c0_8 = arith.constant 0 : index
    %7 = vector.load %arg5[%c0_7, %c0_8] : memref<128x128xbf16, #tpu.memory_space<vmem>>, vector<128x128xbf16>
    %8 = arith.truncf %3 : vector<24x128xf32> to vector<24x128xbf16>
    %cst_9 = arith.constant dense<0.000000e+00> : vector<24x128xf32>
    %9 = tpu.matmul %8, %7, %cst_9 {dimension_numbers = #tpu.dot_dimension_numbers<[1], [1], [0], [0], [0, 0, 1, 0], [], []>} : vector<24x128xbf16>, vector<128x128xbf16>, vector<24x128xf32> -> vector<24x128xf32>
    %c0_10 = arith.constant 0 : index
    %c0_11 = arith.constant 0 : index
    %10 = vector.load %arg6[%c0_10, %c0_11] : memref<128x128xbf16, #tpu.memory_space<vmem>>, vector<128x128xbf16>
    %11 = arith.truncf %3 : vector<24x128xf32> to vector<24x128xbf16>
    %cst_12 = arith.constant dense<0.000000e+00> : vector<128x24xf32>
    %12 = tpu.matmul %10, %11, %cst_12 {dimension_numbers = #tpu.dot_dimension_numbers<[1], [1], [0], [0], [0, 0, 1, 0], [], []>} : vector<128x128xbf16>, vector<24x128xbf16>, vector<128x24xf32> -> vector<128x24xf32>
    %13 = arith.truncf %9 : vector<24x128xf32> to vector<24x128xbf16>
    %14 = arith.truncf %6 : vector<128x128xf32> to vector<128x128xbf16>
    %cst_13 = arith.constant dense<0.000000e+00> : vector<24x128xf32>
    %15 = tpu.matmul %13, %14, %cst_13 {dimension_numbers = #tpu.dot_dimension_numbers<[1], [0], [0], [1], [0, 0, 1, 1], [], []>} : vector<24x128xbf16>, vector<128x128xbf16>, vector<24x128xf32> -> vector<24x128xf32>
    %cst_14 = arith.constant dense<0xFF800000> : vector<128xf32>
    %16 = vector.multi_reduction <maximumf>, %15, %cst_14 [0] : vector<24x128xf32> to vector<128xf32>
    %17 = vector.shape_cast %16 : vector<128xf32> to vector<1x128xf32>
    %18 = vector.broadcast %17 : vector<1x128xf32> to vector<24x128xf32>
    %19 = arith.subf %15, %18 : vector<24x128xf32>
    %20 = math.exp %19 : vector<24x128xf32>
    %cst_15 = arith.constant dense<0.000000e+00> : vector<128xf32>
    %21 = vector.multi_reduction <add>, %20, %cst_15 [0] : vector<24x128xf32> to vector<128xf32>
    %22 = vector.shape_cast %21 : vector<128xf32> to vector<1x128xf32>
    %23 = vector.broadcast %22 : vector<1x128xf32> to vector<24x128xf32>
    %24 = arith.divf %20, %23 : vector<24x128xf32>
    %25 = arith.truncf %12 : vector<128x24xf32> to vector<128x24xbf16>
    %26 = arith.truncf %24 : vector<24x128xf32> to vector<24x128xbf16>
    %cst_16 = arith.constant dense<0.000000e+00> : vector<128x128xf32>
    %27 = tpu.matmul %25, %26, %cst_16 {dimension_numbers = #tpu.dot_dimension_numbers<[1], [0], [0], [1], [0, 0, 1, 1], [], []>} : vector<128x24xbf16>, vector<24x128xbf16>, vector<128x128xf32> -> vector<128x128xf32>
    %28 = arith.addf %1, %27 : vector<128x128xf32>
    %c0_17 = arith.constant 0 : index
    %c0_18 = arith.constant 0 : index
    %c0_19 = arith.constant 0 : index
    %29 = vector.load %arg7[%c0_17, %c0_18, %c0_19] : memref<1x128x128xf32, #tpu.memory_space<vmem>>, vector<1x128x128xf32>
    %30 = vector.shape_cast %29 : vector<1x128x128xf32> to vector<128x128xf32>
    %31 = vector.shape_cast %28 : vector<128x128xf32> to vector<1x128x128xf32>
    tpu.vector_store %arg7[%c0_17, %c0_18, %c0_19], %31 {strides = array<i32>} : memref<1x128x128xf32, #tpu.memory_space<vmem>>, vector<1x128x128xf32>,
    return
  }
  func.func @transform_0(%arg0: i32, %arg1: i32) -> (i32, i32, i32) {
    %c0_i32 = arith.constant 0 : i32
    %c0_i32_0 = arith.constant 0 : i32
    return %arg0, %c0_i32, %arg1 : i32, i32, i32
  }
  func.func @transform_1(%arg0: i32, %arg1: i32) -> (i32, i32, i32) {
    %c0_i32 = arith.constant 0 : i32
    %c0_i32_0 = arith.constant 0 : i32
    %c0_i32_1 = arith.constant 0 : i32
    return %arg0, %c0_i32, %c0_i32_0 : i32, i32, i32
  }
  func.func @transform_2(%arg0: i32, %arg1: i32) -> (i32, i32) {
    %c0_i32 = arith.constant 0 : i32
    %c0_i32_0 = arith.constant 0 : i32
    %c0_i32_1 = arith.constant 0 : i32
    return %c0_i32, %c0_i32_0 : i32, i32
  }
  func.func @transform_3(%arg0: i32, %arg1: i32) -> (i32, i32) {
    %c0_i32 = arith.constant 0 : i32
    %c0_i32_0 = arith.constant 0 : i32
    %c0_i32_1 = arith.constant 0 : i32
    return %c0_i32, %c0_i32_0 : i32, i32
  }
  func.func @transform_4(%arg0: i32, %arg1: i32) -> (i32, i32) {
    %c0_i32 = arith.constant 0 : i32
    %c0_i32_0 = arith.constant 0 : i32
    %c0_i32_1 = arith.constant 0 : i32
    return %c0_i32, %c0_i32_0 : i32, i32
  }
  func.func @transform_5(%arg0: i32, %arg1: i32) -> (i32, i32, i32) {
    %c0_i32 = arith.constant 0 : i32
    %c0_i32_0 = arith.constant 0 : i32
    return %arg0, %c0_i32, %arg1 : i32, i32, i32
  }
}

module attributes {stable_mosaic.version = 11 : i64} {
  func.func @tok_tf_kernel(%arg0: i32, %arg1: i32, %arg2: memref<1x128x128xf32, #tpu.memory_space<vmem>>, %arg3: memref<152x128xbf16, #tpu.memory_space<vmem>>, %arg4: memref<384x128xbf16, #tpu.memory_space<vmem>>, %arg5: memref<128x128xbf16, #tpu.memory_space<vmem>>, %arg6: memref<128x128xbf16, #tpu.memory_space<vmem>>, %arg7: memref<24x128xf32, #tpu.memory_space<vmem>>, %arg8: memref<24x128xf32, #tpu.memory_space<vmem>>, %arg9: memref<1x24x128xf32, #tpu.memory_space<vmem>>, %arg10: memref<24x1xf32, #tpu.memory_space<vmem>>, %arg11: memref<24x1xf32, #tpu.memory_space<vmem>>, %arg12: memref<24x128xf32, #tpu.memory_space<vmem>>) attributes {dimension_semantics = [#tpu.dimension_semantics<parallel>, #tpu.dimension_semantics<arbitrary>], iteration_bounds = array<i64: 2, 2>, scalar_prefetch = 0 : i64, scratch_operands = 3 : i64, tpu.core_type = #tpu.core_type<tc>, window_params = [{transform_indices = @transform_0, window_bounds = array<i64: 1, 128, 128>}, {pipeline_mode = #tpu.pipeline_mode<synchronous>, transform_indices = @transform_1, window_bounds = array<i64: 152, 128>}, {pipeline_mode = #tpu.pipeline_mode<synchronous>, transform_indices = @transform_2, window_bounds = array<i64: 384, 128>}, {pipeline_mode = #tpu.pipeline_mode<synchronous>, transform_indices = @transform_3, window_bounds = array<i64: 128, 128>}, {pipeline_mode = #tpu.pipeline_mode<synchronous>, transform_indices = @transform_4, window_bounds = array<i64: 128, 128>}, {pipeline_mode = #tpu.pipeline_mode<synchronous>, transform_indices = @transform_5, window_bounds = array<i64: 24, 128>}, {pipeline_mode = #tpu.pipeline_mode<synchronous>, transform_indices = @transform_6, window_bounds = array<i64: 24, 128>}, {transform_indices = @transform_7, window_bounds = array<i64: 1, 24, 128>}]} {
    %c0_i32 = arith.constant 0 : i32
    %0 = arith.cmpi eq, %arg1, %c0_i32 : i32
    %1 = arith.extui %0 : i1 to i32
    %c0_i32_0 = arith.constant 0 : i32
    %2 = arith.cmpi ne, %1, %c0_i32_0 : i32
    scf.if %2 {
      %cst_21 = arith.constant 0xFF800000 : f32
      %37 = vector.broadcast %cst_21 : f32 to vector<24x1xf32>
      %c0_22 = arith.constant 0 : index
      %c0_23 = arith.constant 0 : index
      %38 = vector.load %arg10[%c0_22, %c0_23] : memref<24x1xf32, #tpu.memory_space<vmem>>, vector<24x1xf32>
      tpu.vector_store %arg10[%c0_22, %c0_23], %37 {strides = array<i32>} : memref<24x1xf32, #tpu.memory_space<vmem>>, vector<24x1xf32>,
      %cst_24 = arith.constant 0.000000e+00 : f32
      %39 = vector.broadcast %cst_24 : f32 to vector<24x1xf32>
      %c0_25 = arith.constant 0 : index
      %c0_26 = arith.constant 0 : index
      %40 = vector.load %arg11[%c0_25, %c0_26] : memref<24x1xf32, #tpu.memory_space<vmem>>, vector<24x1xf32>
      tpu.vector_store %arg11[%c0_25, %c0_26], %39 {strides = array<i32>} : memref<24x1xf32, #tpu.memory_space<vmem>>, vector<24x1xf32>,
      %cst_27 = arith.constant 0.000000e+00 : f32
      %41 = vector.broadcast %cst_27 : f32 to vector<24x128xf32>
      %c0_28 = arith.constant 0 : index
      %c0_29 = arith.constant 0 : index
      %42 = vector.load %arg12[%c0_28, %c0_29] : memref<24x128xf32, #tpu.memory_space<vmem>>, vector<24x128xf32>
      tpu.vector_store %arg12[%c0_28, %c0_29], %41 {strides = array<i32>} : memref<24x128xf32, #tpu.memory_space<vmem>>, vector<24x128xf32>,
    } else {
    }
    %c0 = arith.constant 0 : index
    %c0_1 = arith.constant 0 : index
    %c0_2 = arith.constant 0 : index
    %3 = vector.load %arg2[%c0, %c0_1, %c0_2] : memref<1x128x128xf32, #tpu.memory_space<vmem>>, vector<1x128x128xf32>
    %4 = vector.shape_cast %3 : vector<1x128x128xf32> to vector<128x128xf32>
    %c0_3 = arith.constant 0 : index
    %c0_4 = arith.constant 0 : index
    %5 = vector.load %arg3[%c0_3, %c0_4] : memref<152x128xbf16, #tpu.memory_space<vmem>>, vector<152x128xbf16>
    %6 = arith.truncf %4 : vector<128x128xf32> to vector<128x128xbf16>
    %cst = arith.constant dense<0.000000e+00> : vector<152x128xf32>
    %7 = tpu.matmul %5, %6, %cst {dimension_numbers = #tpu.dot_dimension_numbers<[1], [0], [0], [1], [0, 0, 1, 1], [], []>} : vector<152x128xbf16>, vector<128x128xbf16>, vector<152x128xf32> -> vector<152x128xf32>
    %8 = vector.extract_strided_slice %7 {offsets = [0, 0], sizes = [24, 128], strides = [1, 1]} : vector<152x128xf32> to vector<24x128xf32>
    %9 = vector.extract_strided_slice %7 {offsets = [24, 0], sizes = [128, 128], strides = [1, 1]} : vector<152x128xf32> to vector<128x128xf32>
    %c0_5 = arith.constant 0 : index
    %c0_6 = arith.constant 0 : index
    %10 = vector.load %arg10[%c0_5, %c0_6] : memref<24x1xf32, #tpu.memory_space<vmem>>, vector<24x1xf32>
    %cst_7 = arith.constant dense<0xFF800000> : vector<24xf32>
    %11 = vector.multi_reduction <maximumf>, %8, %cst_7 [1] : vector<24x128xf32> to vector<24xf32>
    %12 = vector.shape_cast %11 : vector<24xf32> to vector<24x1xf32>
    %13 = arith.maximumf %10, %12 : vector<24x1xf32>
    %14 = arith.subf %10, %13 : vector<24x1xf32>
    %15 = math.exp %14 : vector<24x1xf32>
    %16 = vector.broadcast %13 : vector<24x1xf32> to vector<24x128xf32>
    %17 = arith.subf %8, %16 : vector<24x128xf32>
    %18 = math.exp %17 : vector<24x128xf32>
    %c0_8 = arith.constant 0 : index
    %c0_9 = arith.constant 0 : index
    %19 = vector.load %arg11[%c0_8, %c0_9] : memref<24x1xf32, #tpu.memory_space<vmem>>, vector<24x1xf32>
    %20 = arith.mulf %15, %19 : vector<24x1xf32>
    %cst_10 = arith.constant dense<0.000000e+00> : vector<24xf32>
    %21 = vector.multi_reduction <add>, %18, %cst_10 [1] : vector<24x128xf32> to vector<24xf32>
    %22 = vector.shape_cast %21 : vector<24xf32> to vector<24x1xf32>
    %23 = arith.addf %20, %22 : vector<24x1xf32>
    %c0_11 = arith.constant 0 : index
    %c0_12 = arith.constant 0 : index
    %24 = vector.load %arg11[%c0_11, %c0_12] : memref<24x1xf32, #tpu.memory_space<vmem>>, vector<24x1xf32>
    tpu.vector_store %arg11[%c0_11, %c0_12], %23 {strides = array<i32>} : memref<24x1xf32, #tpu.memory_space<vmem>>, vector<24x1xf32>,
    %c0_13 = arith.constant 0 : index
    %c0_14 = arith.constant 0 : index
    %25 = vector.load %arg12[%c0_13, %c0_14] : memref<24x128xf32, #tpu.memory_space<vmem>>, vector<24x128xf32>
    %26 = vector.broadcast %15 : vector<24x1xf32> to vector<24x128xf32>
    %27 = arith.mulf %26, %25 : vector<24x128xf32>
    %28 = arith.truncf %18 : vector<24x128xf32> to vector<24x128xbf16>
    %29 = arith.truncf %9 : vector<128x128xf32> to vector<128x128xbf16>
    %cst_15 = arith.constant dense<0.000000e+00> : vector<24x128xf32>
    %30 = tpu.matmul %28, %29, %cst_15 {dimension_numbers = #tpu.dot_dimension_numbers<[1], [1], [0], [0], [0, 0, 1, 0], [], []>} : vector<24x128xbf16>, vector<128x128xbf16>, vector<24x128xf32> -> vector<24x128xf32>
    %31 = arith.addf %27, %30 : vector<24x128xf32>
    %c0_16 = arith.constant 0 : index
    %c0_17 = arith.constant 0 : index
    %32 = vector.load %arg12[%c0_16, %c0_17] : memref<24x128xf32, #tpu.memory_space<vmem>>, vector<24x128xf32>
    tpu.vector_store %arg12[%c0_16, %c0_17], %31 {strides = array<i32>} : memref<24x128xf32, #tpu.memory_space<vmem>>, vector<24x128xf32>,
    %c0_18 = arith.constant 0 : index
    %c0_19 = arith.constant 0 : index
    %33 = vector.load %arg10[%c0_18, %c0_19] : memref<24x1xf32, #tpu.memory_space<vmem>>, vector<24x1xf32>
    tpu.vector_store %arg10[%c0_18, %c0_19], %13 {strides = array<i32>} : memref<24x1xf32, #tpu.memory_space<vmem>>, vector<24x1xf32>,
    %c1_i32 = arith.constant 1 : i32
    %34 = arith.cmpi eq, %arg1, %c1_i32 : i32
    %35 = arith.extui %34 : i1 to i32
    %c0_i32_20 = arith.constant 0 : i32
    %36 = arith.cmpi ne, %35, %c0_i32_20 : i32
    scf.if %36 {
      %c0_21 = arith.constant 0 : index
      %c0_22 = arith.constant 0 : index
      %37 = vector.load %arg12[%c0_21, %c0_22] : memref<24x128xf32, #tpu.memory_space<vmem>>, vector<24x128xf32>
      %c0_23 = arith.constant 0 : index
      %c0_24 = arith.constant 0 : index
      %38 = vector.load %arg11[%c0_23, %c0_24] : memref<24x1xf32, #tpu.memory_space<vmem>>, vector<24x1xf32>
      %39 = tpu.reciprocal %38 {approx = true} : vector<24x1xf32> -> vector<24x1xf32>
      %40 = vector.broadcast %39 : vector<24x1xf32> to vector<24x128xf32>
      %41 = arith.mulf %37, %40 : vector<24x128xf32>
      %c0_25 = arith.constant 0 : index
      %c0_26 = arith.constant 0 : index
      %42 = vector.load %arg4[%c0_25, %c0_26] : memref<384x128xbf16, #tpu.memory_space<vmem>>, vector<384x128xbf16>
      %43 = arith.truncf %41 : vector<24x128xf32> to vector<24x128xbf16>
      %cst_27 = arith.constant dense<0.000000e+00> : vector<24x384xf32>
      %44 = tpu.matmul %43, %42, %cst_27 {dimension_numbers = #tpu.dot_dimension_numbers<[1], [1], [0], [0], [0, 0, 1, 0], [], []>} : vector<24x128xbf16>, vector<384x128xbf16>, vector<24x384xf32> -> vector<24x384xf32>
      %45 = vector.extract_strided_slice %44 {offsets = [0, 0], sizes = [24, 128], strides = [1, 1]} : vector<24x384xf32> to vector<24x128xf32>
      %46 = vector.extract_strided_slice %44 {offsets = [0, 128], sizes = [24, 128], strides = [1, 1]} : vector<24x384xf32> to vector<24x128xf32>
      %47 = vector.extract_strided_slice %44 {offsets = [0, 256], sizes = [24, 128], strides = [1, 1]} : vector<24x384xf32> to vector<24x128xf32>
      %cst_28 = arith.constant dense<0.000000e+00> : vector<24x24xf32>
      %48 = tpu.matmul %46, %45, %cst_28 {dimension_numbers = #tpu.dot_dimension_numbers<[1], [1], [0], [0], [0, 0, 1, 0], [], []>} : vector<24x128xf32>, vector<24x128xf32>, vector<24x24xf32> -> vector<24x24xf32>
      %cst_29 = arith.constant dense<0xFF800000> : vector<24xf32>
      %49 = vector.multi_reduction <maximumf>, %48, %cst_29 [1] : vector<24x24xf32> to vector<24xf32>
      %50 = vector.shape_cast %49 : vector<24xf32> to vector<24x1xf32>
      %51 = vector.broadcast %50 : vector<24x1xf32> to vector<24x24xf32>
      %52 = arith.subf %48, %51 : vector<24x24xf32>
      %53 = math.exp %52 : vector<24x24xf32>
      %cst_30 = arith.constant dense<0.000000e+00> : vector<24xf32>
      %54 = vector.multi_reduction <add>, %53, %cst_30 [1] : vector<24x24xf32> to vector<24xf32>
      %55 = vector.shape_cast %54 : vector<24xf32> to vector<24x1xf32>
      %56 = tpu.reciprocal %55 {approx = true} : vector<24x1xf32> -> vector<24x1xf32>
      %57 = vector.broadcast %56 : vector<24x1xf32> to vector<24x24xf32>
      %58 = arith.mulf %53, %57 : vector<24x24xf32>
      %cst_31 = arith.constant dense<0.000000e+00> : vector<24x128xf32>
      %59 = tpu.matmul %58, %47, %cst_31 {dimension_numbers = #tpu.dot_dimension_numbers<[1], [0], [0], [1], [0, 0, 1, 1], [], []>} : vector<24x24xf32>, vector<24x128xf32>, vector<24x128xf32> -> vector<24x128xf32>
      %60 = arith.addf %41, %59 : vector<24x128xf32>
      %c0_32 = arith.constant 0 : index
      %c0_33 = arith.constant 0 : index
      %61 = vector.load %arg7[%c0_32, %c0_33] : memref<24x128xf32, #tpu.memory_space<vmem>>, vector<24x128xf32>
      %c0_34 = arith.constant 0 : index
      %c0_35 = arith.constant 0 : index
      %62 = vector.load %arg8[%c0_34, %c0_35] : memref<24x128xf32, #tpu.memory_space<vmem>>, vector<24x128xf32>
      %63 = vector.shape_cast %60 : vector<24x128xf32> to vector<1x24x128xf32>
      %cst_36 = arith.constant dense<0.000000e+00> : vector<1xf32>
      %64 = vector.multi_reduction <add>, %63, %cst_36 [1, 2] : vector<1x24x128xf32> to vector<1xf32>
      %65 = vector.shape_cast %64 : vector<1xf32> to vector<1x1x1xf32>
      %66 = vector.extract %65[0, 0, 0] : f32 from vector<1x1x1xf32>
      %cst_37 = arith.constant 3.072000e+03 : f32
      %67 = arith.divf %66, %cst_37 : f32
      %68 = vector.broadcast %67 : f32 to vector<24x128xf32>
      %69 = arith.subf %60, %68 : vector<24x128xf32>
      %70 = arith.mulf %69, %69 : vector<24x128xf32>
      %71 = vector.shape_cast %70 : vector<24x128xf32> to vector<1x24x128xf32>
      %cst_38 = arith.constant dense<0.000000e+00> : vector<1xf32>
      %72 = vector.multi_reduction <add>, %71, %cst_38 [1, 2] : vector<1x24x128xf32> to vector<1xf32>
      %73 = vector.shape_cast %72 : vector<1xf32> to vector<1x1x1xf32>
      %74 = vector.extract %73[0, 0, 0] : f32 from vector<1x1x1xf32>
      %cst_39 = arith.constant 3.072000e+03 : f32
      %75 = arith.divf %74, %cst_39 : f32
      %76 = vector.broadcast %67 : f32 to vector<24x128xf32>
      %77 = arith.subf %60, %76 : vector<24x128xf32>
      %cst_40 = arith.constant 9.99999974E-6 : f32
      %78 = arith.addf %75, %cst_40 : f32
      %79 = math.rsqrt %78 : f32
      %80 = vector.broadcast %79 : f32 to vector<24x128xf32>
      %81 = arith.mulf %77, %80 : vector<24x128xf32>
      %82 = arith.mulf %81, %61 : vector<24x128xf32>
      %83 = arith.addf %82, %62 : vector<24x128xf32>
      %c0_41 = arith.constant 0 : index
      %c0_42 = arith.constant 0 : index
      %84 = vector.load %arg5[%c0_41, %c0_42] : memref<128x128xbf16, #tpu.memory_space<vmem>>, vector<128x128xbf16>
      %85 = arith.truncf %83 : vector<24x128xf32> to vector<24x128xbf16>
      %cst_43 = arith.constant dense<0.000000e+00> : vector<24x128xf32>
      %86 = tpu.matmul %85, %84, %cst_43 {dimension_numbers = #tpu.dot_dimension_numbers<[1], [1], [0], [0], [0, 0, 1, 0], [], []>} : vector<24x128xbf16>, vector<128x128xbf16>, vector<24x128xf32> -> vector<24x128xf32>
      %cst_44 = arith.constant 0.000000e+00 : f32
      %87 = vector.broadcast %cst_44 : f32 to vector<24x128xf32>
      %88 = arith.maximumf %86, %87 : vector<24x128xf32>
      %c0_45 = arith.constant 0 : index
      %c0_46 = arith.constant 0 : index
      %89 = vector.load %arg6[%c0_45, %c0_46] : memref<128x128xbf16, #tpu.memory_space<vmem>>, vector<128x128xbf16>
      %90 = arith.truncf %88 : vector<24x128xf32> to vector<24x128xbf16>
      %cst_47 = arith.constant dense<0.000000e+00> : vector<24x128xf32>
      %91 = tpu.matmul %90, %89, %cst_47 {dimension_numbers = #tpu.dot_dimension_numbers<[1], [1], [0], [0], [0, 0, 1, 0], [], []>} : vector<24x128xbf16>, vector<128x128xbf16>, vector<24x128xf32> -> vector<24x128xf32>
      %92 = arith.addf %83, %91 : vector<24x128xf32>
      %c0_48 = arith.constant 0 : index
      %c0_49 = arith.constant 0 : index
      %93 = vector.load %arg7[%c0_48, %c0_49] : memref<24x128xf32, #tpu.memory_space<vmem>>, vector<24x128xf32>
      %c0_50 = arith.constant 0 : index
      %c0_51 = arith.constant 0 : index
      %94 = vector.load %arg8[%c0_50, %c0_51] : memref<24x128xf32, #tpu.memory_space<vmem>>, vector<24x128xf32>
      %95 = vector.shape_cast %92 : vector<24x128xf32> to vector<1x24x128xf32>
      %cst_52 = arith.constant dense<0.000000e+00> : vector<1xf32>
      %96 = vector.multi_reduction <add>, %95, %cst_52 [1, 2] : vector<1x24x128xf32> to vector<1xf32>
      %97 = vector.shape_cast %96 : vector<1xf32> to vector<1x1x1xf32>
      %98 = vector.extract %97[0, 0, 0] : f32 from vector<1x1x1xf32>
      %cst_53 = arith.constant 3.072000e+03 : f32
      %99 = arith.divf %98, %cst_53 : f32
      %100 = vector.broadcast %99 : f32 to vector<24x128xf32>
      %101 = arith.subf %92, %100 : vector<24x128xf32>
      %102 = arith.mulf %101, %101 : vector<24x128xf32>
      %103 = vector.shape_cast %102 : vector<24x128xf32> to vector<1x24x128xf32>
      %cst_54 = arith.constant dense<0.000000e+00> : vector<1xf32>
      %104 = vector.multi_reduction <add>, %103, %cst_54 [1, 2] : vector<1x24x128xf32> to vector<1xf32>
      %105 = vector.shape_cast %104 : vector<1xf32> to vector<1x1x1xf32>
      %106 = vector.extract %105[0, 0, 0] : f32 from vector<1x1x1xf32>
      %cst_55 = arith.constant 3.072000e+03 : f32
      %107 = arith.divf %106, %cst_55 : f32
      %108 = vector.broadcast %99 : f32 to vector<24x128xf32>
      %109 = arith.subf %92, %108 : vector<24x128xf32>
      %cst_56 = arith.constant 9.99999974E-6 : f32
      %110 = arith.addf %107, %cst_56 : f32
      %111 = math.rsqrt %110 : f32
      %112 = vector.broadcast %111 : f32 to vector<24x128xf32>
      %113 = arith.mulf %109, %112 : vector<24x128xf32>
      %114 = arith.mulf %113, %93 : vector<24x128xf32>
      %115 = arith.addf %114, %94 : vector<24x128xf32>
      %c0_57 = arith.constant 0 : index
      %c0_58 = arith.constant 0 : index
      %c0_59 = arith.constant 0 : index
      %116 = vector.load %arg9[%c0_57, %c0_58, %c0_59] : memref<1x24x128xf32, #tpu.memory_space<vmem>>, vector<1x24x128xf32>
      %117 = vector.shape_cast %116 : vector<1x24x128xf32> to vector<24x128xf32>
      %118 = vector.shape_cast %115 : vector<24x128xf32> to vector<1x24x128xf32>
      tpu.vector_store %arg9[%c0_57, %c0_58, %c0_59], %118 {strides = array<i32>} : memref<1x24x128xf32, #tpu.memory_space<vmem>>, vector<1x24x128xf32>,
    } else {
    }
    return
  }
  func.func @transform_0(%arg0: i32, %arg1: i32) -> (i32, i32, i32) {
    %c0_i32 = arith.constant 0 : i32
    %c0_i32_0 = arith.constant 0 : i32
    return %arg0, %c0_i32, %arg1 : i32, i32, i32
  }
  func.func @transform_1(%arg0: i32, %arg1: i32) -> (i32, i32) {
    %c0_i32 = arith.constant 0 : i32
    %c0_i32_0 = arith.constant 0 : i32
    %c0_i32_1 = arith.constant 0 : i32
    return %c0_i32, %c0_i32_0 : i32, i32
  }
  func.func @transform_2(%arg0: i32, %arg1: i32) -> (i32, i32) {
    %c0_i32 = arith.constant 0 : i32
    %c0_i32_0 = arith.constant 0 : i32
    %c0_i32_1 = arith.constant 0 : i32
    return %c0_i32, %c0_i32_0 : i32, i32
  }
  func.func @transform_3(%arg0: i32, %arg1: i32) -> (i32, i32) {
    %c0_i32 = arith.constant 0 : i32
    %c0_i32_0 = arith.constant 0 : i32
    %c0_i32_1 = arith.constant 0 : i32
    return %c0_i32, %c0_i32_0 : i32, i32
  }
  func.func @transform_4(%arg0: i32, %arg1: i32) -> (i32, i32) {
    %c0_i32 = arith.constant 0 : i32
    %c0_i32_0 = arith.constant 0 : i32
    %c0_i32_1 = arith.constant 0 : i32
    return %c0_i32, %c0_i32_0 : i32, i32
  }
  func.func @transform_5(%arg0: i32, %arg1: i32) -> (i32, i32) {
    %c0_i32 = arith.constant 0 : i32
    %c0_i32_0 = arith.constant 0 : i32
    %c0_i32_1 = arith.constant 0 : i32
    return %c0_i32, %c0_i32_0 : i32, i32
  }
  func.func @transform_6(%arg0: i32, %arg1: i32) -> (i32, i32) {
    %c0_i32 = arith.constant 0 : i32
    %c0_i32_0 = arith.constant 0 : i32
    %c0_i32_1 = arith.constant 0 : i32
    return %c0_i32, %c0_i32_0 : i32, i32
  }
  func.func @transform_7(%arg0: i32, %arg1: i32) -> (i32, i32, i32) {
    %c0_i32 = arith.constant 0 : i32
    %c0_i32_0 = arith.constant 0 : i32
    %c0_i32_1 = arith.constant 0 : i32
    return %arg0, %c0_i32, %c0_i32_0 : i32, i32, i32
  }
}

</mosaic_0001>

<llo_original>
// kernel: visual_transformer_forward.3
$region0: #{visual_transformer_forward.3}
  #allocation0 [shape = 'u32[]', space=smem, size = 0x4, offset = 0x4, fixed_abs, tag = 'smem constant byte address 0x4 - core index']
  #allocation1 [shape = 'u32[144,128]{1,0:T(1,128)}', space=vmem, size = 0x12000, scoped, tag = 'internal scratch']
  %s0 = inlined_call_operand.hbm [shape: f32[2,128,256], index: 0, kind: input, shape index: {}]
  %s1 = inlined_call_operand.hbm [shape: f32[2,24,128], index: 1, kind: input, shape index: {}]
  %s2 = inlined_call_operand.hbm [shape: bf16[128,128], index: 2, kind: input, shape index: {}]
  %s3 = inlined_call_operand.hbm [shape: bf16[128,128], index: 3, kind: input, shape index: {}]
  %s4 = inlined_call_operand.hbm [shape: bf16[128,128], index: 4, kind: input, shape index: {}]
  %s5 = inlined_call_operand.hbm [shape: f32[2,128,256], index: 5, kind: output, shape index: {}]
  %s6 = sld [smem:[#allocation0]]
  $region73: #{visual_transformer_forward.3} parent=0
    _
  %s8 = ssub.s32 1, %s6
  %s9 = scalar_select 0, %s8, %s6
  $region1: #{visual_transformer_forward.3} parent=0
    #allocation2 [shape = 'u8[131072]{0}', space=vmem, size = 0x20000, scoped, tag = 'input window, operand 0']
    #allocation3 [shape = 's32[2]{0}', space=sflag, size = 0x8, scoped, tag = 'scoped memory for visual_transformer_forward.3']
    #allocation4 [shape = 's32[2]{0}', space=sflag, size = 0x8, scoped, tag = 'scoped memory for visual_transformer_forward.3']
    #allocation5 [shape = 'u8[24576]{0}', space=vmem, size = 0x6000, scoped, tag = 'input window, operand 1']
    #allocation6 [shape = 's32[2]{0}', space=sflag, size = 0x8, scoped, tag = 'scoped memory for visual_transformer_forward.3']
    #allocation7 [shape = 'u8[32768]{0}', space=vmem, size = 0x8000, scoped, tag = 'input window, operand 2, single buffered']
    #allocation8 [shape = 'u8[32768]{0}', space=vmem, size = 0x8000, scoped, tag = 'input window, operand 3, single buffered']
    #allocation9 [shape = 's32[1]{0}', space=sflag, size = 0x4, scoped, tag = 'scoped memory for visual_transformer_forward.3']
    #allocation10 [shape = 'u8[32768]{0}', space=vmem, size = 0x8000, scoped, tag = 'input window, operand 4, single buffered']
    #allocation11 [shape = 'u8[131072]{0}', space=vmem, size = 0x20000, scoped, tag = 'output window, operand 0']
    %10 = vsyncpa [#allocation3], 0
    %s11 = scalar_lea.sflag [#allocation3], 1
    %12 = vsyncpa %s11, 0
    %13 = vsyncpa [#allocation6], 0
    %s14 = scalar_lea.sflag [#allocation6], 1
    %15 = vsyncpa %s14, 0
    %16 = vsyncpa [#allocation9], 0
    %17 = vsyncpa [#allocation4], 0
    %s18 = scalar_lea.sflag [#allocation4], 1
    %19 = vsyncpa %s18, 0
    loop: start=0, step=1, limit=6
    $region2: #{visual_transformer_forward.3} parent=1 // loop_pre_header
      _
    $region3: #{visual_transformer_forward.3} parent=1 // loop_header
      %s21 = sphi 0, %s25
      %p22 = scmp.ge.s32.totalorder %s21, 6
      %s28 = sphi 0, %s40
      %s29 = sphi 0, %s36
      %s30 = sphi 0, %s28
      %s31 = sphi 0, %s29
      %s32 = sphi 0, %s30
      %s33 = sphi 0, %s31
      %s45 = sphi 0, %s47
      %s48 = sphi 0, %s45
      %s49 = sphi 0, %s48
      %s65 = sphi 0, %s49
      %s71 = sphi 0, %s73
      %s74 = sphi 0, %s71
      %s75 = sphi 0, %s74
      %s91 = sphi 0, %s75
      %s95 = sphi 0, %s95
      %s97 = sphi 0, %s95
      %s98 = sphi 0, %s97
      %s112 = sphi 0, %s98
      %s116 = sphi 0, %s116
      %s118 = sphi 0, %s116
      %s119 = sphi 0, %s118
      %s133 = sphi 0, %s119
      %s137 = sphi 0, %s137
      %s139 = sphi 0, %s137
      %s140 = sphi 0, %s139
      %s154 = sphi 0, %s140
      %s162 = sphi 0, %s164
      %s165 = sphi 0, %s162
      %s166 = sphi 0, %s165
      %s182 = sphi 0, %s166
    $region4: #{visual_transformer_forward.3} parent=1 // loop_header_branch
      %24 = sbr.rel (%p22) target = $region8
    $region5: #{visual_transformer_forward.3} parent=1 // loop_body
      %s26 = ssub.s32 %s21, 1
      %s27 = ssub.s32 %s21, 2
      %s34 = sadd.s32 1, %s29
      %p35 = scmp.ge.s32.totalorder %s34, 2
      %s36 = scalar_select %p35, 0, %s34
      %s37 = sadd.s32 1, %s28
      %s38 = scalar_select %p35, %s37, %s28
      %p39 = scmp.ge.s32.totalorder %s38, 2
      %s40 = scalar_select %p39, 0, %s38
      %s41 = ssub.s32 %s28, %s40
      %s42 = ssub.s32 %s29, %s36
      %s43 = sor.u32 %s41, %s42
      %p44 = scmp.eq.s32.totalorder %s43, 0
      %s46 = sadd.s32 %s45, 1
      %s47 = scalar_select %p44, %s45, %s46
      %p50 = pneg %p44
      %p51 = scmp.eq.s32.totalorder %s21, 3
      %p52 = por %p50, %p51
      %p53 = scmp.ne.s32.totalorder %s45, %s48
      %p54 = scmp.eq.s32.totalorder %s21, 0
      %p55 = por %p53, %p54
      %p56 = scmp.ne.s32.totalorder %s45, %s48
      %p57 = scmp.eq.s32.totalorder %s26, 3
      %p58 = por %p56, %p57
      %p59 = scmp.ne.s32.totalorder %s48, %s49
      %p60 = scmp.eq.s32.totalorder %s26, 0
      %p61 = por %p59, %p60
      %p62 = scmp.ne.s32.totalorder %s48, %s49
      %p63 = scmp.eq.s32.totalorder %s27, 3
      %p64 = por %p62, %p63
      %p66 = scmp.ne.s32.totalorder %s49, %s65
      %p67 = scmp.eq.s32.totalorder %s27, 0
      %p68 = por %p66, %p67
      %s69 = ssub.s32 %s28, %s40
      %p70 = scmp.eq.s32.totalorder %s69, 0
      %s72 = sadd.s32 %s71, 1
      %s73 = scalar_select %p70, %s71, %s72
      %p76 = pneg %p70
      %p77 = scmp.eq.s32.totalorder %s21, 3
      %p78 = por %p76, %p77
      %p79 = scmp.ne.s32.totalorder %s71, %s74
      %p80 = scmp.eq.s32.totalorder %s21, 0
      %p81 = por %p79, %p80
      %p82 = scmp.ne.s32.totalorder %s71, %s74
      %p83 = scmp.eq.s32.totalorder %s26, 3
      %p84 = por %p82, %p83
      %p85 = scmp.ne.s32.totalorder %s74, %s75
      %p86 = scmp.eq.s32.totalorder %s26, 0
      %p87 = por %p85, %p86
      %p88 = scmp.ne.s32.totalorder %s74, %s75
      %p89 = scmp.eq.s32.totalorder %s27, 3
      %p90 = por %p88, %p89
      %p92 = scmp.ne.s32.totalorder %s75, %s91
      %p93 = scmp.eq.s32.totalorder %s27, 0
      %p94 = por %p92, %p93
      %s96 = sadd.s32 %s95, 1
      %p99 = scmp.eq.s32.totalorder %s21, 3
      %p100 = scmp.ne.s32.totalorder %s95, %s97
      %p101 = scmp.eq.s32.totalorder %s21, 0
      %p102 = por %p100, %p101
      %p103 = scmp.ne.s32.totalorder %s95, %s97
      %p104 = scmp.eq.s32.totalorder %s26, 3
      %p105 = por %p103, %p104
      %p106 = scmp.ne.s32.totalorder %s97, %s98
      %p107 = scmp.eq.s32.totalorder %s26, 0
      %p108 = por %p106, %p107
      %p109 = scmp.ne.s32.totalorder %s97, %s98
      %p110 = scmp.eq.s32.totalorder %s27, 3
      %p111 = por %p109, %p110
      %p113 = scmp.ne.s32.totalorder %s98, %s112
      %p114 = scmp.eq.s32.totalorder %s27, 0
      %p115 = por %p113, %p114
      %s117 = sadd.s32 %s116, 1
      %p120 = scmp.eq.s32.totalorder %s21, 3
      %p121 = scmp.ne.s32.totalorder %s116, %s118
      %p122 = scmp.eq.s32.totalorder %s21, 0
      %p123 = por %p121, %p122
      %p124 = scmp.ne.s32.totalorder %s116, %s118
      %p125 = scmp.eq.s32.totalorder %s26, 3
      %p126 = por %p124, %p125
      %p127 = scmp.ne.s32.totalorder %s118, %s119
      %p128 = scmp.eq.s32.totalorder %s26, 0
      %p129 = por %p127, %p128
      %p130 = scmp.ne.s32.totalorder %s118, %s119
      %p131 = scmp.eq.s32.totalorder %s27, 3
      %p132 = por %p130, %p131
      %p134 = scmp.ne.s32.totalorder %s119, %s133
      %p135 = scmp.eq.s32.totalorder %s27, 0
      %p136 = por %p134, %p135
      %s138 = sadd.s32 %s137, 1
      %p141 = scmp.eq.s32.totalorder %s21, 3
      %p142 = scmp.ne.s32.totalorder %s137, %s139
      %p143 = scmp.eq.s32.totalorder %s21, 0
      %p144 = por %p142, %p143
      %p145 = scmp.ne.s32.totalorder %s137, %s139
      %p146 = scmp.eq.s32.totalorder %s26, 3
      %p147 = por %p145, %p146
      %p148 = scmp.ne.s32.totalorder %s139, %s140
      %p149 = scmp.eq.s32.totalorder %s26, 0
      %p150 = por %p148, %p149
      %p151 = scmp.ne.s32.totalorder %s139, %s140
      %p152 = scmp.eq.s32.totalorder %s27, 3
      %p153 = por %p151, %p152
      %p155 = scmp.ne.s32.totalorder %s140, %s154
      %p156 = scmp.eq.s32.totalorder %s27, 0
      %p157 = por %p155, %p156
      %s158 = ssub.s32 %s28, %s40
      %s159 = ssub.s32 %s29, %s36
      %s160 = sor.u32 %s158, %s159
      %p161 = scmp.eq.s32.totalorder %s160, 0
      %s163 = sadd.s32 %s162, 1
      %s164 = scalar_select %p161, %s162, %s163
      %p167 = pneg %p161
      %p168 = scmp.eq.s32.totalorder %s21, 3
      %p169 = por %p167, %p168
      %p170 = scmp.ne.s32.totalorder %s162, %s165
      %p171 = scmp.eq.s32.totalorder %s21, 0
      %p172 = por %p170, %p171
      %p173 = scmp.ne.s32.totalorder %s162, %s165
      %p174 = scmp.eq.s32.totalorder %s26, 3
      %p175 = por %p173, %p174
      %p176 = scmp.ne.s32.totalorder %s165, %s166
      %p177 = scmp.eq.s32.totalorder %s26, 0
      %p178 = por %p176, %p177
      %p179 = scmp.ne.s32.totalorder %s165, %s166
      %p180 = scmp.eq.s32.totalorder %s27, 3
      %p181 = por %p179, %p180
      %p183 = scmp.ne.s32.totalorder %s166, %s182
      %p184 = scmp.eq.s32.totalorder %s27, 0
      %p185 = por %p183, %p184
      %p186 = scmp.le.s32.totalorder 1, %s21
      %p187 = scmp.lt.s32.totalorder %s21, 5
      %p188 = pnand %p186, %p187
      %p189 = pneg %p188
      // Predicated region
      $region9: #{visual_transformer_forward.3} parent=5 // pred_check
        _
      $region10: #{visual_transformer_forward.3} parent=5 // pred_check_branch
        %191 = sbr.rel (%p188) target = $region12
      $region11: #{visual_transformer_forward.3} parent=5 // pred_region
        %s192 = ssub.s32 %s21, 1
        // Predicated region
        $region13: #{visual_transformer_forward.3} parent=11 // pred_check
          %p193 = pneg %p108
        $region14: #{visual_transformer_forward.3} parent=11 // pred_check_branch
          %195 = sbr.rel (%p193) target = $region16
        $region15: #{visual_transformer_forward.3} parent=11 // pred_region
          %s197 = ssub.s32 1024, 1024
          %198 = vsyncadd [#allocation6], %s197
          %s199 = sshll.u32 [#allocation7], 4
          %s200 = int_to_ptr.vmem [resolvable:$true] %s199
          %205 = dma.hbm_to_vmem [thread:$0]  %s2, 1024, %s200, [#allocation6], 64, 64, 4
        $region16: #{visual_transformer_forward.3} parent=11 // pred_fallthru
          _
        // Predicated region
        $region17: #{visual_transformer_forward.3} parent=11 // pred_check
          %p206 = pneg %p129
        $region18: #{visual_transformer_forward.3} parent=11 // pred_check_branch
          %208 = sbr.rel (%p206) target = $region20
        $region19: #{visual_transformer_forward.3} parent=11 // pred_region
          %s210 = ssub.s32 1024, 1024
          %211 = vsyncadd [#allocation9], %s210
          %s212 = sshll.u32 [#allocation8], 4
          %s213 = int_to_ptr.vmem [resolvable:$true] %s212
          %218 = dma.hbm_to_vmem [thread:$0]  %s3, 1024, %s213, [#allocation9], 64, 64, 4
        $region20: #{visual_transformer_forward.3} parent=11 // pred_fallthru
          _
        // Predicated region
        $region21: #{visual_transformer_forward.3} parent=11 // pred_check
          %p219 = pneg %p150
        $region22: #{visual_transformer_forward.3} parent=11 // pred_check_branch
          %221 = sbr.rel (%p219) target = $region24
        $region23: #{visual_transformer_forward.3} parent=11 // pred_region
          %s223 = ssub.s32 1024, 1024
          %224 = vsyncadd [#allocation9], %s223
          %s225 = sshll.u32 [#allocation10], 4
          %s226 = int_to_ptr.vmem [resolvable:$true] %s225
          %231 = dma.hbm_to_vmem [thread:$0]  %s4, 1024, %s226, [#allocation9], 64, 64, 4
        $region24: #{visual_transformer_forward.3} parent=11 // pred_fallthru
          _
      $region12: #{visual_transformer_forward.3} parent=5 // pred_fallthru
        _
      %p232 = scmp.lt.s32.totalorder %s21, 4
      // Predicated region
      $region25: #{visual_transformer_forward.3} parent=5 // pred_check
        %p233 = pneg %p232
      $region26: #{visual_transformer_forward.3} parent=5 // pred_check_branch
        %235 = sbr.rel (%p233) target = $region28
      $region27: #{visual_transformer_forward.3} parent=5 // pred_region
        // Predicated region
        $region29: #{visual_transformer_forward.3} parent=27 // pred_check
          %p236 = pneg %p55
        $region30: #{visual_transformer_forward.3} parent=27 // pred_check_branch
          %238 = sbr.rel (%p236) target = $region32
        $region31: #{visual_transformer_forward.3} parent=27 // pred_region
          %s239 = sand.u32 %s45, 1
          %s240 = scalar_lea.sflag [#allocation3], %s239
          %s241 = sand.u32 %s45, 1
          %s242 = smul.addr %s241, 128
          %s243 = scalar_lea.vmem [#allocation2], %s242
          %s245 = ssub.s32 2048, 2048
          %246 = vsyncadd %s240, %s245
          %s247 = smul.addr %s28, 32
          %s248 = sadd.s32 %s29, %s247
          %s249 = smul.addr %s248, 128
          %s250 = scalar_lea.hbm %s0, %s249
          %s251 = sshll.u32 %s243, 4
          %s252 = int_to_ptr.vmem [resolvable:$true] %s251
          %257 = dma.hbm_to_vmem [thread:$0]  %s250, 2048, %s252, %s240, 256, 128, 8
        $region32: #{visual_transformer_forward.3} parent=27 // pred_fallthru
          _
        // Predicated region
        $region33: #{visual_transformer_forward.3} parent=27 // pred_check
          %p258 = pneg %p81
        $region34: #{visual_transformer_forward.3} parent=27 // pred_check_branch
          %260 = sbr.rel (%p258) target = $region36
        $region35: #{visual_transformer_forward.3} parent=27 // pred_region
          %s261 = sand.u32 %s21, 1
          %s262 = scalar_lea.sflag [#allocation6], %s261
          %s263 = sand.u32 %s71, 1
          %s264 = smul.addr %s263, 24
          %s265 = scalar_lea.vmem [#allocation5], %s264
          %s267 = ssub.s32 384, 384
          %268 = vsyncadd %s262, %s267
          %s269 = smul.addr %s28, 3
          %s270 = smul.addr %s269, 128
          %s271 = scalar_lea.hbm %s1, %s270
          %s272 = sshll.u32 %s265, 4
          %s273 = int_to_ptr.vmem [resolvable:$true] %s272
          %278 = dma.hbm_to_vmem [thread:$0]  %s271, 384, %s273, %s262, 128, 128, 8
        $region36: #{visual_transformer_forward.3} parent=27 // pred_fallthru
          _
      $region28: #{visual_transformer_forward.3} parent=5 // pred_fallthru
        _
      %p279 = scmp.le.s32.totalorder 1, %s21
      %p280 = scmp.lt.s32.totalorder %s21, 5
      %p281 = pnand %p279, %p280
      %p282 = pneg %p281
      // Predicated region
      $region37: #{visual_transformer_forward.3} parent=5 // pred_check
        _
      $region38: #{visual_transformer_forward.3} parent=5 // pred_check_branch
        %284 = sbr.rel (%p281) target = $region40
      $region39: #{visual_transformer_forward.3} parent=5 // pred_region
        %s285 = ssub.s32 %s21, 1
        %s286 = sand.u32 %s48, 1
        %s287 = scalar_lea.sflag [#allocation3], %s286
        %s288 = sand.u32 %s48, 1
        %s289 = smul.addr %s288, 128
        %s290 = scalar_lea.vmem [#allocation2], %s289
        // Predicated region
        $region41: #{visual_transformer_forward.3} parent=39 // pred_check
          %p291 = pneg %p61
        $region42: #{visual_transformer_forward.3} parent=39 // pred_check_branch
          %293 = sbr.rel (%p291) target = $region44
        $region43: #{visual_transformer_forward.3} parent=39 // pred_region
          %294 = dma.done %s287, 2048
        $region44: #{visual_transformer_forward.3} parent=39 // pred_fallthru
          _
        %s295 = sand.u32 %s26, 1
        %s296 = scalar_lea.sflag [#allocation6], %s295
        %s297 = sand.u32 %s74, 1
        %s298 = smul.addr %s297, 24
        %s299 = scalar_lea.vmem [#allocation5], %s298
        // Predicated region
        $region45: #{visual_transformer_forward.3} parent=39 // pred_check
          %p300 = pneg %p87
        $region46: #{visual_transformer_forward.3} parent=39 // pred_check_branch
          %302 = sbr.rel (%p300) target = $region48
        $region47: #{visual_transformer_forward.3} parent=39 // pred_region
          %303 = dma.done %s296, 384
        $region48: #{visual_transformer_forward.3} parent=39 // pred_fallthru
          _
        // Predicated region
        $region49: #{visual_transformer_forward.3} parent=39 // pred_check
          %p304 = pneg %p108
        $region50: #{visual_transformer_forward.3} parent=39 // pred_check_branch
          %306 = sbr.rel (%p304) target = $region52
        $region51: #{visual_transformer_forward.3} parent=39 // pred_region
          %307 = dma.done [#allocation6], 1024
        $region52: #{visual_transformer_forward.3} parent=39 // pred_fallthru
          _
        // Predicated region
        $region53: #{visual_transformer_forward.3} parent=39 // pred_check
          %p308 = pneg %p129
        $region54: #{visual_transformer_forward.3} parent=39 // pred_check_branch
          %310 = sbr.rel (%p308) target = $region56
        $region55: #{visual_transformer_forward.3} parent=39 // pred_region
          %311 = dma.done [#allocation9], 1024
        $region56: #{visual_transformer_forward.3} parent=39 // pred_fallthru
          _
        // Predicated region
        $region57: #{visual_transformer_forward.3} parent=39 // pred_check
          %p312 = pneg %p150
        $region58: #{visual_transformer_forward.3} parent=39 // pred_check_branch
          %314 = sbr.rel (%p312) target = $region60
        $region59: #{visual_transformer_forward.3} parent=39 // pred_region
          %315 = dma.done [#allocation9], 1024
        $region60: #{visual_transformer_forward.3} parent=39 // pred_fallthru
          _
        %s316 = sand.u32 %s48, 1
        %s317 = scalar_lea.sflag [#allocation3], %s316
        %s318 = sand.u32 %s48, 1
        %s319 = smul.addr %s318, 128
        %s320 = scalar_lea.vmem [#allocation2], %s319
        %p321 = pneg %p61
        %p322 = pneg %p58
        %s323 = sand.u32 %s26, 1
        %s324 = scalar_lea.sflag [#allocation6], %s323
        %s325 = sand.u32 %s74, 1
        %s326 = smul.addr %s325, 24
        %s327 = scalar_lea.vmem [#allocation5], %s326
        %p328 = pneg %p87
        %p329 = pneg %p84
        %p330 = pneg %p108
        %p331 = pneg %p105
        %p332 = pneg %p129
        %p333 = pneg %p126
        %p334 = pneg %p150
        %p335 = pneg %p147
        %p336 = pneg %p178
        %p337 = pneg %p175
        %s338 = sand.u32 %s165, 1
        %s339 = scalar_lea.sflag [#allocation4], %s338
        %s340 = sand.u32 %s165, 1
        %s341 = smul.addr %s340, 128
        %s342 = scalar_lea.vmem [#allocation11], %s341
        %v344 = vld [vmem:[%s290] sm:$0xff]
        %v345 = vld [vmem:[%s290 + $0x8] sm:$0xff]
        %v346 = vld [vmem:[%s290 + $0x10] sm:$0xff]
        %v347 = vld [vmem:[%s290 + $0x18] sm:$0xff]
        %v348 = vld [vmem:[%s290 + $0x20] sm:$0xff]
        %v349 = vld [vmem:[%s290 + $0x28] sm:$0xff]
        %v350 = vld [vmem:[%s290 + $0x30] sm:$0xff]
        %v351 = vld [vmem:[%s290 + $0x38] sm:$0xff]
        %v352 = vld [vmem:[%s290 + $0x40] sm:$0xff]
        %v353 = vld [vmem:[%s290 + $0x48] sm:$0xff]
        %v354 = vld [vmem:[%s290 + $0x50] sm:$0xff]
        %v355 = vld [vmem:[%s290 + $0x58] sm:$0xff]
        %v356 = vld [vmem:[%s290 + $0x60] sm:$0xff]
        %v357 = vld [vmem:[%s290 + $0x68] sm:$0xff]
        %v358 = vld [vmem:[%s290 + $0x70] sm:$0xff]
        %v359 = vld [vmem:[%s290 + $0x78] sm:$0xff]
        %v360 = vld [vmem:[%s299] sm:$0xff]
        %v361 = vld [vmem:[%s299 + $0x8] sm:$0xff]
        %v362 = vld [vmem:[%s299 + $0x10] sm:$0xff]
        %v363 = vld [vmem:[#allocation7] sm:$0xf]
        %v364 = vld [vmem:[#allocation7 + $0x4] sm:$0xf]
        %v365 = vld [vmem:[#allocation7 + $0x8] sm:$0xf]
        %v366 = vld [vmem:[#allocation7 + $0xc] sm:$0xf]
        %v367 = vld [vmem:[#allocation7 + $0x10] sm:$0xf]
        %v368 = vld [vmem:[#allocation7 + $0x14] sm:$0xf]
        %v369 = vld [vmem:[#allocation7 + $0x18] sm:$0xf]
        %v370 = vld [vmem:[#allocation7 + $0x1c] sm:$0xf]
        %v371 = vld [vmem:[#allocation7 + $0x20] sm:$0xf]
        %v372 = vld [vmem:[#allocation7 + $0x24] sm:$0xf]
        %v373 = vld [vmem:[#allocation7 + $0x28] sm:$0xf]
        %v374 = vld [vmem:[#allocation7 + $0x2c] sm:$0xf]
        %v375 = vld [vmem:[#allocation7 + $0x30] sm:$0xf]
        %v376 = vld [vmem:[#allocation7 + $0x34] sm:$0xf]
        %v377 = vld [vmem:[#allocation7 + $0x38] sm:$0xf]
        %v378 = vld [vmem:[#allocation7 + $0x3c] sm:$0xf]
        %v379 = vpack.c.bf16 %v345, %v344
        %v380 = vpack.c.bf16 %v347, %v346
        %v381 = vpack.c.bf16 %v349, %v348
        %v382 = vpack.c.bf16 %v351, %v350
        %v383 = vpack.c.bf16 %v353, %v352
        %v384 = vpack.c.bf16 %v355, %v354
        %v385 = vpack.c.bf16 %v357, %v356
        %v386 = vpack.c.bf16 %v359, %v358
        %v403 = vunpack.c.l.b16 %v363
        %v404 = vunpack.c.l.b16 %v364
        %v405 = vunpack.c.l.b16 %v365
        %v406 = vunpack.c.l.b16 %v366
        %v407 = vunpack.c.l.b16 %v367
        %v408 = vunpack.c.l.b16 %v368
        %v409 = vunpack.c.l.b16 %v369
        %v410 = vunpack.c.l.b16 %v370
        %v411 = vunpack.c.l.b16 %v371
        %v412 = vunpack.c.l.b16 %v372
        %v413 = vunpack.c.l.b16 %v373
        %v414 = vunpack.c.l.b16 %v374
        %v415 = vunpack.c.l.b16 %v375
        %v416 = vunpack.c.l.b16 %v376
        %v417 = vunpack.c.l.b16 %v377
        %v418 = vunpack.c.l.b16 %v378
        %v419 = vpack.c.b16 %v404, %v403
        %v420 = vpack.c.b16 %v406, %v405
        %v421 = vpack.c.b16 %v408, %v407
        %v422 = vpack.c.b16 %v410, %v409
        %v423 = vpack.c.b16 %v412, %v411
        %v424 = vpack.c.b16 %v414, %v413
        %v425 = vpack.c.b16 %v416, %v415
        %v426 = vpack.c.b16 %v418, %v417
        %435 = vmatprep.subr.bf16.mxu0 0
        %436 = vmatpush1.bf16.msra.mxu0 %v379
        %437 = vmatprep.subr.bf16.mxu0 0
        %438 = vmatpush1.bf16.msra.mxu0 %v380
        %439 = vmatprep.subr.bf16.mxu0 0
        %440 = vmatpush1.bf16.msra.mxu0 %v381
        %441 = vmatprep.subr.bf16.mxu0 0
        %442 = vmatpush1.bf16.msra.mxu0 %v382
        %443 = vmatprep.subr.bf16.mxu0 0
        %444 = vmatpush1.bf16.msra.mxu0 %v383
        %445 = vmatprep.subr.bf16.mxu0 0
        %446 = vmatpush1.bf16.msra.mxu0 %v384
        %447 = vmatprep.subr.bf16.mxu0 0
        %448 = vmatpush1.bf16.msra.mxu0 %v385
        %449 = vmatprep.subr.bf16.mxu0 0
        %450 = vmatpush1.bf16.msra.mxu0 %v386
        %451 = vmatprep.subr.bf16.mxu0 0
        %452 = vmatpush1.bf16.msra.mxu0 0
        %453 = vmatprep.subr.bf16.mxu0 0
        %454 = vmatpush1.bf16.msra.mxu0 0
        %455 = vmatprep.subr.bf16.mxu0 0
        %456 = vmatpush1.bf16.msra.mxu0 0
        %457 = vmatprep.subr.bf16.mxu0 0
        %458 = vmatpush1.bf16.msra.mxu0 0
        %459 = vmatprep.subr.bf16.mxu0 0
        %460 = vmatpush1.bf16.msra.mxu0 0
        %461 = vmatprep.subr.bf16.mxu0 0
        %462 = vmatpush1.bf16.msra.mxu0 0
        %463 = vmatprep.subr.bf16.mxu0 0
        %464 = vmatpush1.bf16.msra.mxu0 0
        %465 = vmatprep.subr.bf16.mxu0 0
        %466 = vmatpush1.bf16.msra.mxu0 0
        %467 = vmatprep.mubr.bf16.mxu0 0
        %468 = vmatmul.mubr.bf16.gmra.mrb[0].mxu0 %v419
        %v469 = vpop.f32.mrb[0].mxu0
        %v470 = vadd.f32 0.0, %v469
        %v471 = vpop.f32.mrb[0].mxu0
        %v472 = vpop.f32.mrb[0].mxu0
        %v473 = vadd.f32 0.0, %v472
        %v474 = vpop.f32.mrb[0].mxu0
        %475 = vmatprep.mubr.bf16.mxu0 0
        %476 = vmatmul.mubr.bf16.gmra.mrb[0].mxu0 %v420
        %v477 = vpop.f32.mrb[0].mxu0
        %v478 = vadd.f32 0.0, %v477
        %v479 = vpop.f32.mrb[0].mxu0
        %v480 = vpop.f32.mrb[0].mxu0
        %v481 = vadd.f32 0.0, %v480
        %v482 = vpop.f32.mrb[0].mxu0
        %483 = vmatprep.mubr.bf16.mxu0 0
        %484 = vmatmul.mubr.bf16.gmra.mrb[0].mxu0 %v421
        %v485 = vpop.f32.mrb[0].mxu0
        %v486 = vadd.f32 0.0, %v485
        %v487 = vpop.f32.mrb[0].mxu0
        %v488 = vpop.f32.mrb[0].mxu0
        %v489 = vadd.f32 0.0, %v488
        %v490 = vpop.f32.mrb[0].mxu0
        %491 = vmatprep.mubr.bf16.mxu0 0
        %492 = vmatmul.mubr.bf16.gmra.mrb[0].mxu0 %v422
        %v493 = vpop.f32.mrb[0].mxu0
        %v494 = vadd.f32 0.0, %v493
        %v495 = vpop.f32.mrb[0].mxu0
        %v496 = vpop.f32.mrb[0].mxu0
        %v497 = vadd.f32 0.0, %v496
        %v498 = vpop.f32.mrb[0].mxu0
        %499 = vmatprep.mubr.bf16.mxu0 0
        %500 = vmatmul.mubr.bf16.gmra.mrb[0].mxu0 %v423
        %v501 = vpop.f32.mrb[0].mxu0
        %v502 = vadd.f32 0.0, %v501
        %v503 = vpop.f32.mrb[0].mxu0
        %v504 = vpop.f32.mrb[0].mxu0
        %v505 = vadd.f32 0.0, %v504
        %v506 = vpop.f32.mrb[0].mxu0
        %507 = vmatprep.mubr.bf16.mxu0 0
        %508 = vmatmul.mubr.bf16.gmra.mrb[0].mxu0 %v424
        %v509 = vpop.f32.mrb[0].mxu0
        %v510 = vadd.f32 0.0, %v509
        %v511 = vpop.f32.mrb[0].mxu0
        %v512 = vpop.f32.mrb[0].mxu0
        %v513 = vadd.f32 0.0, %v512
        %v514 = vpop.f32.mrb[0].mxu0
        %515 = vmatprep.mubr.bf16.mxu0 0
        %516 = vmatmul.mubr.bf16.gmra.mrb[0].mxu0 %v425
        %v517 = vpop.f32.mrb[0].mxu0
        %v518 = vadd.f32 0.0, %v517
        %v519 = vpop.f32.mrb[0].mxu0
        %v520 = vpop.f32.mrb[0].mxu0
        %v521 = vadd.f32 0.0, %v520
        %v522 = vpop.f32.mrb[0].mxu0
        %523 = vmatprep.mubr.bf16.mxu0 0
        %524 = vmatmul.mubr.bf16.gmra.mrb[0].mxu0 %v426
        %v525 = vpop.f32.mrb[0].mxu0
        %v526 = vadd.f32 0.0, %v525
        %v527 = vpop.f32.mrb[0].mxu0
        %v528 = vpop.f32.mrb[0].mxu0
        %v529 = vadd.f32 0.0, %v528
        %v530 = vpop.f32.mrb[0].mxu0
        %531 = vdwg.mxu0
        %v532 = vld [vmem:[#allocation8] sm:$0xf]
        %v533 = vld [vmem:[#allocation8 + $0x4] sm:$0xf]
        %v534 = vld [vmem:[#allocation8 + $0x8] sm:$0xf]
        %v535 = vld [vmem:[#allocation8 + $0xc] sm:$0xf]
        %v536 = vld [vmem:[#allocation8 + $0x10] sm:$0xf]
        %v537 = vld [vmem:[#allocation8 + $0x14] sm:$0xf]
        %v538 = vld [vmem:[#allocation8 + $0x18] sm:$0xf]
        %v539 = vld [vmem:[#allocation8 + $0x1c] sm:$0xf]
        %v540 = vld [vmem:[#allocation8 + $0x20] sm:$0xf]
        %v541 = vld [vmem:[#allocation8 + $0x24] sm:$0xf]
        %v542 = vld [vmem:[#allocation8 + $0x28] sm:$0xf]
        %v543 = vld [vmem:[#allocation8 + $0x2c] sm:$0xf]
        %v544 = vld [vmem:[#allocation8 + $0x30] sm:$0xf]
        %v545 = vld [vmem:[#allocation8 + $0x34] sm:$0xf]
        %v546 = vld [vmem:[#allocation8 + $0x38] sm:$0xf]
        %v547 = vld [vmem:[#allocation8 + $0x3c] sm:$0xf]
        %v548 = vpack.c.bf16 %v361, %v360
        %v549 = vpack.c.bf16 %v362, %v362
        %v566 = vunpack.c.l.b16 %v532
        %v567 = vunpack.c.l.b16 %v533
        %v568 = vunpack.c.l.b16 %v534
        %v569 = vunpack.c.l.b16 %v535
        %v570 = vunpack.c.l.b16 %v536
        %v571 = vunpack.c.l.b16 %v537
        %v572 = vunpack.c.l.b16 %v538
        %v573 = vunpack.c.l.b16 %v539
        %v574 = vunpack.c.l.b16 %v540
        %v575 = vunpack.c.l.b16 %v541
        %v576 = vunpack.c.l.b16 %v542
        %v577 = vunpack.c.l.b16 %v543
        %v578 = vunpack.c.l.b16 %v544
        %v579 = vunpack.c.l.b16 %v545
        %v580 = vunpack.c.l.b16 %v546
        %v581 = vunpack.c.l.b16 %v547
        %v582 = vpack.c.b16 %v567, %v566
        %v583 = vpack.c.b16 %v569, %v568
        %v584 = vpack.c.b16 %v571, %v570
        %v585 = vpack.c.b16 %v573, %v572
        %v586 = vpack.c.b16 %v575, %v574
        %v587 = vpack.c.b16 %v577, %v576
        %v588 = vpack.c.b16 %v579, %v578
        %v589 = vpack.c.b16 %v581, %v580
        %598 = vmatprep.subr.bf16.mxu0 0
        %599 = vmatpush1.bf16.xpose.msra.mxu0 %v582
        %600 = vmatprep.subr.bf16.mxu0 0
        %601 = vmatpush1.bf16.xpose.msra.mxu0 %v583
        %602 = vmatprep.subr.bf16.mxu0 0
        %603 = vmatpush1.bf16.xpose.msra.mxu0 %v584
        %604 = vmatprep.subr.bf16.mxu0 0
        %605 = vmatpush1.bf16.xpose.msra.mxu0 %v585
        %606 = vmatprep.subr.bf16.mxu0 0
        %607 = vmatpush1.bf16.xpose.msra.mxu0 %v586
        %608 = vmatprep.subr.bf16.mxu0 0
        %609 = vmatpush1.bf16.xpose.msra.mxu0 %v587
        %610 = vmatprep.subr.bf16.mxu0 0
        %611 = vmatpush1.bf16.xpose.msra.mxu0 %v588
        %612 = vmatprep.subr.bf16.mxu0 0
        %613 = vmatpush1.bf16.xpose.msra.mxu0 %v589
        %614 = vmatprep.subr.bf16.mxu0 0
        %615 = vmatpush1.bf16.xpose.msra.mxu0 0
        %616 = vmatprep.subr.bf16.mxu0 0
        %617 = vmatpush1.bf16.xpose.msra.mxu0 0
        %618 = vmatprep.subr.bf16.mxu0 0
        %619 = vmatpush1.bf16.xpose.msra.mxu0 0
        %620 = vmatprep.subr.bf16.mxu0 0
        %621 = vmatpush1.bf16.xpose.msra.mxu0 0
        %622 = vmatprep.subr.bf16.mxu0 0
        %623 = vmatpush1.bf16.xpose.msra.mxu0 0
        %624 = vmatprep.subr.bf16.mxu0 0
        %625 = vmatpush1.bf16.xpose.msra.mxu0 0
        %626 = vmatprep.subr.bf16.mxu0 0
        %627 = vmatpush1.bf16.xpose.msra.mxu0 0
        %628 = vmatprep.subr.bf16.mxu0 0
        %629 = vmatpush1.bf16.xpose.msra.mxu0 0
        %630 = vmatprep.mubr.bf16.mxu0 0
        %631 = vmatmul.mubr.bf16.gmra.mrb[0].mxu0 %v548
        %v632 = vpop.f32.mrb[0].mxu0
        %v633 = vadd.f32 0.0, %v632
        %v634 = vpop.f32.mrb[0].mxu0
        %v635 = vpop.f32.mrb[0].mxu0
        %v636 = vadd.f32 0.0, %v635
        %v637 = vpop.f32.mrb[0].mxu0
        %638 = vmatprep.mubr.bf16.mxu0 0
        %639 = vmatmul.mubr.bf16.gmra.mrb[0].mxu0 %v549
        %v640 = vpop.f32.mrb[0].mxu0
        %v641 = vadd.f32 0.0, %v640
        %v642 = vpop.f32.mrb[0].mxu0
        %v643 = vpop.f32.mrb[0].mxu0
        %v644 = vpop.f32.mrb[0].mxu0
        %645 = vdwg.mxu0
        %v646 = vld [vmem:[#allocation10] sm:$0xf]
        %v647 = vld [vmem:[#allocation10 + $0x4] sm:$0xf]
        %v648 = vld [vmem:[#allocation10 + $0x8] sm:$0xf]
        %v649 = vld [vmem:[#allocation10 + $0xc] sm:$0xf]
        %v650 = vld [vmem:[#allocation10 + $0x10] sm:$0xf]
        %v651 = vld [vmem:[#allocation10 + $0x14] sm:$0xf]
        %v652 = vld [vmem:[#allocation10 + $0x18] sm:$0xf]
        %v653 = vld [vmem:[#allocation10 + $0x1c] sm:$0xf]
        %v654 = vld [vmem:[#allocation10 + $0x20] sm:$0xf]
        %v655 = vld [vmem:[#allocation10 + $0x24] sm:$0xf]
        %v656 = vld [vmem:[#allocation10 + $0x28] sm:$0xf]
        %v657 = vld [vmem:[#allocation10 + $0x2c] sm:$0xf]
        %v658 = vld [vmem:[#allocation10 + $0x30] sm:$0xf]
        %v659 = vld [vmem:[#allocation10 + $0x34] sm:$0xf]
        %v660 = vld [vmem:[#allocation10 + $0x38] sm:$0xf]
        %v661 = vld [vmem:[#allocation10 + $0x3c] sm:$0xf]
        %v678 = vunpack.c.l.b16 %v646
        %v679 = vunpack.c.l.b16 %v647
        %v680 = vunpack.c.l.b16 %v648
        %v681 = vunpack.c.l.b16 %v649
        %v682 = vunpack.c.l.b16 %v650
        %v683 = vunpack.c.l.b16 %v651
        %v684 = vunpack.c.l.b16 %v652
        %v685 = vunpack.c.l.b16 %v653
        %v686 = vunpack.c.l.b16 %v654
        %v687 = vunpack.c.l.b16 %v655
        %v688 = vunpack.c.l.b16 %v656
        %v689 = vunpack.c.l.b16 %v657
        %v690 = vunpack.c.l.b16 %v658
        %v691 = vunpack.c.l.b16 %v659
        %v692 = vunpack.c.l.b16 %v660
        %v693 = vunpack.c.l.b16 %v661
        %v694 = vpack.c.b16 %v679, %v678
        %v695 = vpack.c.b16 %v681, %v680
        %v696 = vpack.c.b16 %v683, %v682
        %v697 = vpack.c.b16 %v685, %v684
        %v698 = vpack.c.b16 %v687, %v686
        %v699 = vpack.c.b16 %v689, %v688
        %v700 = vpack.c.b16 %v691, %v690
        %v701 = vpack.c.b16 %v693, %v692
        %710 = vmatprep.subr.bf16.mxu0 0
        %711 = vmatpush1.bf16.xpose.msra.mxu0 %v548
        %712 = vmatprep.subr.bf16.mxu0 0
        %713 = vmatpush1.bf16.xpose.msra.mxu0 %v549
        %714 = vmatprep.subr.bf16.mxu0 0
        %715 = vmatpush1.bf16.xpose.msra.mxu0 0
        %716 = vmatprep.subr.bf16.mxu0 0
        %717 = vmatpush1.bf16.xpose.msra.mxu0 0
        %718 = vmatprep.subr.bf16.mxu0 0
        %719 = vmatpush1.bf16.xpose.msra.mxu0 0
        %720 = vmatprep.subr.bf16.mxu0 0
        %721 = vmatpush1.bf16.xpose.msra.mxu0 0
        %722 = vmatprep.subr.bf16.mxu0 0
        %723 = vmatpush1.bf16.xpose.msra.mxu0 0
        %724 = vmatprep.subr.bf16.mxu0 0
        %725 = vmatpush1.bf16.xpose.msra.mxu0 0
        %726 = vmatprep.subr.bf16.mxu0 0
        %727 = vmatpush1.bf16.xpose.msra.mxu0 0
        %728 = vmatprep.subr.bf16.mxu0 0
        %729 = vmatpush1.bf16.xpose.msra.mxu0 0
        %730 = vmatprep.subr.bf16.mxu0 0
        %731 = vmatpush1.bf16.xpose.msra.mxu0 0
        %732 = vmatprep.subr.bf16.mxu0 0
        %733 = vmatpush1.bf16.xpose.msra.mxu0 0
        %734 = vmatprep.subr.bf16.mxu0 0
        %735 = vmatpush1.bf16.xpose.msra.mxu0 0
        %736 = vmatprep.subr.bf16.mxu0 0
        %737 = vmatpush1.bf16.xpose.msra.mxu0 0
        %738 = vmatprep.subr.bf16.mxu0 0
        %739 = vmatpush1.bf16.xpose.msra.mxu0 0
        %740 = vmatprep.subr.bf16.mxu0 0
        %741 = vmatpush1.bf16.xpose.msra.mxu0 0
        %742 = vmatprep.mubr.bf16.mxu0 0
        %743 = vmatmul.mubr.bf16.gmra.mrb[0].mxu0 %v694
        %v744 = vpop.f32.mrb[0].mxu0
        %v745 = vadd.f32 0.0, %v744
        %v746 = vpop.f32.mrb[0].mxu0
        %v747 = vpop.f32.mrb[0].mxu0
        %v748 = vadd.f32 0.0, %v747
        %v749 = vpop.f32.mrb[0].mxu0
        %750 = vmatprep.mubr.bf16.mxu0 0
        %751 = vmatmul.mubr.bf16.gmra.mrb[0].mxu0 %v695
        %v752 = vpop.f32.mrb[0].mxu0
        %v753 = vadd.f32 0.0, %v752
        %v754 = vpop.f32.mrb[0].mxu0
        %v755 = vpop.f32.mrb[0].mxu0
        %v756 = vadd.f32 0.0, %v755
        %v757 = vpop.f32.mrb[0].mxu0
        %758 = vmatprep.mubr.bf16.mxu0 0
        %759 = vmatmul.mubr.bf16.gmra.mrb[0].mxu0 %v696
        %v760 = vpop.f32.mrb[0].mxu0
        %v761 = vadd.f32 0.0, %v760
        %v762 = vpop.f32.mrb[0].mxu0
        %v763 = vpop.f32.mrb[0].mxu0
        %v764 = vadd.f32 0.0, %v763
        %v765 = vpop.f32.mrb[0].mxu0
        %766 = vmatprep.mubr.bf16.mxu0 0
        %767 = vmatmul.mubr.bf16.gmra.mrb[0].mxu0 %v697
        %v768 = vpop.f32.mrb[0].mxu0
        %v769 = vadd.f32 0.0, %v768
        %v770 = vpop.f32.mrb[0].mxu0
        %v771 = vpop.f32.mrb[0].mxu0
        %v772 = vadd.f32 0.0, %v771
        %v773 = vpop.f32.mrb[0].mxu0
        %774 = vmatprep.mubr.bf16.mxu0 0
        %775 = vmatmul.mubr.bf16.gmra.mrb[0].mxu0 %v698
        %v776 = vpop.f32.mrb[0].mxu0
        %v777 = vadd.f32 0.0, %v776
        %v778 = vpop.f32.mrb[0].mxu0
        %v779 = vpop.f32.mrb[0].mxu0
        %v780 = vadd.f32 0.0, %v779
        %v781 = vpop.f32.mrb[0].mxu0
        %782 = vmatprep.mubr.bf16.mxu0 0
        %783 = vmatmul.mubr.bf16.gmra.mrb[0].mxu0 %v699
        %v784 = vpop.f32.mrb[0].mxu0
        %v785 = vadd.f32 0.0, %v784
        %v786 = vpop.f32.mrb[0].mxu0
        %v787 = vpop.f32.mrb[0].mxu0
        %v788 = vadd.f32 0.0, %v787
        %v789 = vpop.f32.mrb[0].mxu0
        %790 = vmatprep.mubr.bf16.mxu0 0
        %791 = vmatmul.mubr.bf16.gmra.mrb[0].mxu0 %v700
        %v792 = vpop.f32.mrb[0].mxu0
        %v793 = vadd.f32 0.0, %v792
        %v794 = vpop.f32.mrb[0].mxu0
        %v795 = vpop.f32.mrb[0].mxu0
        %v796 = vadd.f32 0.0, %v795
        %v797 = vpop.f32.mrb[0].mxu0
        %798 = vmatprep.mubr.bf16.mxu0 0
        %799 = vmatmul.mubr.bf16.gmra.mrb[0].mxu0 %v701
        %v800 = vpop.f32.mrb[0].mxu0
        %v801 = vadd.f32 0.0, %v800
        %v802 = vpop.f32.mrb[0].mxu0
        %v803 = vpop.f32.mrb[0].mxu0
        %v804 = vadd.f32 0.0, %v803
        %v805 = vpop.f32.mrb[0].mxu0
        %806 = vdwg.mxu0
        %v807 = vpack.c.bf16 %v636, %v633
        %v808 = vpack.c.bf16 %v641, %v641
        %v809 = vpack.c.bf16 %v473, %v470
        %v810 = vpack.c.bf16 %v481, %v478
        %v811 = vpack.c.bf16 %v489, %v486
        %v812 = vpack.c.bf16 %v497, %v494
        %v813 = vpack.c.bf16 %v505, %v502
        %v814 = vpack.c.bf16 %v513, %v510
        %v815 = vpack.c.bf16 %v521, %v518
        %v816 = vpack.c.bf16 %v529, %v526
        %817 = vmatprep.subr.bf16.mxu0 0
        %818 = vmatpush1.bf16.msra.mxu0 %v809
        %819 = vmatprep.subr.bf16.mxu0 0
        %820 = vmatpush1.bf16.msra.mxu0 %v810
        %821 = vmatprep.subr.bf16.mxu0 0
        %822 = vmatpush1.bf16.msra.mxu0 %v811
        %823 = vmatprep.subr.bf16.mxu0 0
        %824 = vmatpush1.bf16.msra.mxu0 %v812
        %825 = vmatprep.subr.bf16.mxu0 0
        %826 = vmatpush1.bf16.msra.mxu0 %v813
        %827 = vmatprep.subr.bf16.mxu0 0
        %828 = vmatpush1.bf16.msra.mxu0 %v814
        %829 = vmatprep.subr.bf16.mxu0 0
        %830 = vmatpush1.bf16.msra.mxu0 %v815
        %831 = vmatprep.subr.bf16.mxu0 0
        %832 = vmatpush1.bf16.msra.mxu0 %v816
        %833 = vmatprep.subr.bf16.mxu0 0
        %834 = vmatpush1.bf16.msra.mxu0 0
        %835 = vmatprep.subr.bf16.mxu0 0
        %836 = vmatpush1.bf16.msra.mxu0 0
        %837 = vmatprep.subr.bf16.mxu0 0
        %838 = vmatpush1.bf16.msra.mxu0 0
        %839 = vmatprep.subr.bf16.mxu0 0
        %840 = vmatpush1.bf16.msra.mxu0 0
        %841 = vmatprep.subr.bf16.mxu0 0
        %842 = vmatpush1.bf16.msra.mxu0 0
        %843 = vmatprep.subr.bf16.mxu0 0
        %844 = vmatpush1.bf16.msra.mxu0 0
        %845 = vmatprep.subr.bf16.mxu0 0
        %846 = vmatpush1.bf16.msra.mxu0 0
        %847 = vmatprep.subr.bf16.mxu0 0
        %848 = vmatpush1.bf16.msra.mxu0 0
        %849 = vmatprep.mubr.bf16.mxu0 0
        %850 = vmatmul.mubr.bf16.gmra.mrb[0].mxu0 %v807
        %v851 = vpop.f32.mrb[0].mxu0
        %v852 = vadd.f32 0.0, %v851
        %v853 = vpop.f32.mrb[0].mxu0
        %v854 = vpop.f32.mrb[0].mxu0
        %v855 = vadd.f32 0.0, %v854
        %v856 = vpop.f32.mrb[0].mxu0
        %857 = vmatprep.mubr.bf16.mxu0 0
        %858 = vmatmul.mubr.bf16.gmra.mrb[0].mxu0 %v808
        %v859 = vpop.f32.mrb[0].mxu0
        %v860 = vadd.f32 0.0, %v859
        %v861 = vpop.f32.mrb[0].mxu0
        %v862 = vpop.f32.mrb[0].mxu0
        %v863 = vpop.f32.mrb[0].mxu0
        %864 = vdwg.mxu0
        %v865 = vmax.f32 %v852, %v855
        %v866 = vmax.f32 %v865, %v860
        %v867 = vrot.slane %v866, 4
        %v868 = vmax.f32 %v866, %v867
        %v869 = vrot.slane %v868, 2
        %v870 = vmax.f32 %v868, %v869
        %v871 = vrot.slane %v870, 1
        %v872 = vmax.f32 %v870, %v871
        %v873 = vsub.f32 %v852, %v872
        %v874 = vsub.f32 %v855, %v872
        %v875 = vsub.f32 %v860, %v872
        %v876 = vmul.f32 %v873, 1.442695
        %v877 = vpow.pop %v876
        %v878 = vmul.f32 %v874, 1.442695
        %v879 = vpow.pop %v878
        %v880 = vmul.f32 %v875, 1.442695
        %v881 = vpow.pop %v880
        %v882 = vadd.f32 %v877, %v879
        %v883 = vadd.f32 %v882, %v881
        %v884 = vrot.slane %v883, 4
        %v885 = vadd.f32 %v883, %v884
        %v886 = vrot.slane %v885, 2
        %v887 = vadd.f32 %v885, %v886
        %v888 = vrot.slane %v887, 1
        %v889 = vadd.f32 %v887, %v888
        %v890 = vrcp.pop %v889
        %v891 = vmul.f32 %v877, %v890
        %v892 = vmul.f32 %v879, %v890
        %v893 = vmul.f32 %v881, %v890
        %v894 = vpack.c.bf16 %v748, %v745
        %v895 = vpack.c.bf16 %v756, %v753
        %v896 = vpack.c.bf16 %v764, %v761
        %v897 = vpack.c.bf16 %v772, %v769
        %v898 = vpack.c.bf16 %v780, %v777
        %v899 = vpack.c.bf16 %v788, %v785
        %v900 = vpack.c.bf16 %v796, %v793
        %v901 = vpack.c.bf16 %v804, %v801
        %v902 = vpack.c.bf16 %v892, %v891
        %v903 = vpack.c.bf16 %v893, %v893
        %vm904 = vcmask 195584
        %v906 = vsel %vm904, %v894, 0
        %v909 = vsel %vm904, %v895, 0
        %v912 = vsel %vm904, %v896, 0
        %v915 = vsel %vm904, %v897, 0
        %v918 = vsel %vm904, %v898, 0
        %v921 = vsel %vm904, %v899, 0
        %v924 = vsel %vm904, %v900, 0
        %v927 = vsel %vm904, %v901, 0
        %vm929 = vcmask 1043456
        %v931 = vsel %vm929, %v903, 0
        %933 = vmatprep.subr.bf16.mxu0 0
        %934 = vmatpush1.bf16.msra.mxu0 %v902
        %935 = vmatprep.subr.bf16.mxu0 0
        %936 = vmatpush1.bf16.msra.mxu0 %v931
        %937 = vmatprep.subr.bf16.mxu0 0
        %938 = vmatpush1.bf16.msra.mxu0 0
        %939 = vmatprep.subr.bf16.mxu0 0
        %940 = vmatpush1.bf16.msra.mxu0 0
        %941 = vmatprep.subr.bf16.mxu0 0
        %942 = vmatpush1.bf16.msra.mxu0 0
        %943 = vmatprep.subr.bf16.mxu0 0
        %944 = vmatpush1.bf16.msra.mxu0 0
        %945 = vmatprep.subr.bf16.mxu0 0
        %946 = vmatpush1.bf16.msra.mxu0 0
        %947 = vmatprep.subr.bf16.mxu0 0
        %948 = vmatpush1.bf16.msra.mxu0 0
        %949 = vmatprep.subr.bf16.mxu0 0
        %950 = vmatpush1.bf16.msra.mxu0 0
        %951 = vmatprep.subr.bf16.mxu0 0
        %952 = vmatpush1.bf16.msra.mxu0 0
        %953 = vmatprep.subr.bf16.mxu0 0
        %954 = vmatpush1.bf16.msra.mxu0 0
        %955 = vmatprep.subr.bf16.mxu0 0
        %956 = vmatpush1.bf16.msra.mxu0 0
        %957 = vmatprep.subr.bf16.mxu0 0
        %958 = vmatpush1.bf16.msra.mxu0 0
        %959 = vmatprep.subr.bf16.mxu0 0
        %960 = vmatpush1.bf16.msra.mxu0 0
        %961 = vmatprep.subr.bf16.mxu0 0
        %962 = vmatpush1.bf16.msra.mxu0 0
        %963 = vmatprep.subr.bf16.mxu0 0
        %964 = vmatpush1.bf16.msra.mxu0 0
        %965 = vmatprep.mubr.bf16.mxu0 0
        %966 = vmatmul.mubr.bf16.gmra.mrb[0].mxu0 %v906
        %v967 = vpop.f32.mrb[0].mxu0
        %v968 = vadd.f32 0.0, %v967
        %v969 = vpop.f32.mrb[0].mxu0
        %v970 = vpop.f32.mrb[0].mxu0
        %v971 = vadd.f32 0.0, %v970
        %v972 = vpop.f32.mrb[0].mxu0
        %973 = vmatprep.mubr.bf16.mxu0 0
        %974 = vmatmul.mubr.bf16.gmra.mrb[0].mxu0 %v909
        %v975 = vpop.f32.mrb[0].mxu0
        %v976 = vadd.f32 0.0, %v975
        %v977 = vpop.f32.mrb[0].mxu0
        %v978 = vpop.f32.mrb[0].mxu0
        %v979 = vadd.f32 0.0, %v978
        %v980 = vpop.f32.mrb[0].mxu0
        %981 = vmatprep.mubr.bf16.mxu0 0
        %982 = vmatmul.mubr.bf16.gmra.mrb[0].mxu0 %v912
        %v983 = vpop.f32.mrb[0].mxu0
        %v984 = vadd.f32 0.0, %v983
        %v985 = vpop.f32.mrb[0].mxu0
        %v986 = vpop.f32.mrb[0].mxu0
        %v987 = vadd.f32 0.0, %v986
        %v988 = vpop.f32.mrb[0].mxu0
        %989 = vmatprep.mubr.bf16.mxu0 0
        %990 = vmatmul.mubr.bf16.gmra.mrb[0].mxu0 %v915
        %v991 = vpop.f32.mrb[0].mxu0
        %v992 = vadd.f32 0.0, %v991
        %v993 = vpop.f32.mrb[0].mxu0
        %v994 = vpop.f32.mrb[0].mxu0
        %v995 = vadd.f32 0.0, %v994
        %v996 = vpop.f32.mrb[0].mxu0
        %997 = vmatprep.mubr.bf16.mxu0 0
        %998 = vmatmul.mubr.bf16.gmra.mrb[0].mxu0 %v918
        %v999 = vpop.f32.mrb[0].mxu0
        %v1000 = vadd.f32 0.0, %v999
        %v1001 = vpop.f32.mrb[0].mxu0
        %v1002 = vpop.f32.mrb[0].mxu0
        %v1003 = vadd.f32 0.0, %v1002
        %v1004 = vpop.f32.mrb[0].mxu0
        %1005 = vmatprep.mubr.bf16.mxu0 0
        %1006 = vmatmul.mubr.bf16.gmra.mrb[0].mxu0 %v921
        %v1007 = vpop.f32.mrb[0].mxu0
        %v1008 = vadd.f32 0.0, %v1007
        %v1009 = vpop.f32.mrb[0].mxu0
        %v1010 = vpop.f32.mrb[0].mxu0
        %v1011 = vadd.f32 0.0, %v1010
        %v1012 = vpop.f32.mrb[0].mxu0
        %1013 = vmatprep.mubr.bf16.mxu0 0
        %1014 = vmatmul.mubr.bf16.gmra.mrb[0].mxu0 %v924
        %v1015 = vpop.f32.mrb[0].mxu0
        %v1016 = vadd.f32 0.0, %v1015
        %v1017 = vpop.f32.mrb[0].mxu0
        %v1018 = vpop.f32.mrb[0].mxu0
        %v1019 = vadd.f32 0.0, %v1018
        %v1020 = vpop.f32.mrb[0].mxu0
        %1021 = vmatprep.mubr.bf16.mxu0 0
        %1022 = vmatmul.mubr.bf16.gmra.mrb[0].mxu0 %v927
        %v1023 = vpop.f32.mrb[0].mxu0
        %v1024 = vadd.f32 0.0, %v1023
        %v1025 = vpop.f32.mrb[0].mxu0
        %v1026 = vpop.f32.mrb[0].mxu0
        %v1027 = vadd.f32 0.0, %v1026
        %v1028 = vpop.f32.mrb[0].mxu0
        %1029 = vdwg.mxu0
        %v1030 = vadd.f32 %v344, %v968
        %v1031 = vadd.f32 %v345, %v971
        %v1032 = vadd.f32 %v346, %v976
        %v1033 = vadd.f32 %v347, %v979
        %v1034 = vadd.f32 %v348, %v984
        %v1035 = vadd.f32 %v349, %v987
        %v1036 = vadd.f32 %v350, %v992
        %v1037 = vadd.f32 %v351, %v995
        %v1038 = vadd.f32 %v352, %v1000
        %v1039 = vadd.f32 %v353, %v1003
        %v1040 = vadd.f32 %v354, %v1008
        %v1041 = vadd.f32 %v355, %v1011
        %v1042 = vadd.f32 %v356, %v1016
        %v1043 = vadd.f32 %v357, %v1019
        %v1044 = vadd.f32 %v358, %v1024
        %v1045 = vadd.f32 %v359, %v1027
        %1046 = vst [vmem:[%s342] sm:$0xff] %v1030
        %1047 = vst [vmem:[%s342 + $0x8] sm:$0xff] %v1031
        %1048 = vst [vmem:[%s342 + $0x10] sm:$0xff] %v1032
        %1049 = vst [vmem:[%s342 + $0x18] sm:$0xff] %v1033
        %1050 = vst [vmem:[%s342 + $0x20] sm:$0xff] %v1034
        %1051 = vst [vmem:[%s342 + $0x28] sm:$0xff] %v1035
        %1052 = vst [vmem:[%s342 + $0x30] sm:$0xff] %v1036
        %1053 = vst [vmem:[%s342 + $0x38] sm:$0xff] %v1037
        %1054 = vst [vmem:[%s342 + $0x40] sm:$0xff] %v1038
        %1055 = vst [vmem:[%s342 + $0x48] sm:$0xff] %v1039
        %1056 = vst [vmem:[%s342 + $0x50] sm:$0xff] %v1040
        %1057 = vst [vmem:[%s342 + $0x58] sm:$0xff] %v1041
        %1058 = vst [vmem:[%s342 + $0x60] sm:$0xff] %v1042
        %1059 = vst [vmem:[%s342 + $0x68] sm:$0xff] %v1043
        %1060 = vst [vmem:[%s342 + $0x70] sm:$0xff] %v1044
        %1061 = vst [vmem:[%s342 + $0x78] sm:$0xff] %v1045
        %s1062 = sand.u32 %s165, 1
        %s1063 = scalar_lea.sflag [#allocation4], %s1062
        %s1064 = sand.u32 %s165, 1
        %s1065 = smul.addr %s1064, 128
        %s1066 = scalar_lea.vmem [#allocation11], %s1065
        // Predicated region
        $region61: #{visual_transformer_forward.3} parent=39 // pred_check
          %p1067 = pneg %p175
        $region62: #{visual_transformer_forward.3} parent=39 // pred_check_branch
          %1069 = sbr.rel (%p1067) target = $region64
        $region63: #{visual_transformer_forward.3} parent=39 // pred_region
          %s1071 = ssub.s32 2048, 2048
          %1072 = vsyncadd %s1063, %s1071
          %s1073 = smul.addr %s30, 32
          %s1074 = sadd.s32 %s31, %s1073
          %s1075 = smul.addr %s1074, 128
          %s1076 = scalar_lea.hbm %s5, %s1075
          %s1077 = sshll.u32 %s1066, 4
          %s1078 = int_to_ptr.vmem [resolvable:$true] %s1077
          %1083 = dma.vmem_to_hbm [thread:$0]  %s1078, 2048, %s1076, %s1063, 128, 256, 8
        $region64: #{visual_transformer_forward.3} parent=39 // pred_fallthru
          _
      $region40: #{visual_transformer_forward.3} parent=5 // pred_fallthru
        _
      %p1084 = scmp.le.s32.totalorder 2, %s21
      // Predicated region
      $region65: #{visual_transformer_forward.3} parent=5 // pred_check
        %p1085 = pneg %p1084
      $region66: #{visual_transformer_forward.3} parent=5 // pred_check_branch
        %1087 = sbr.rel (%p1085) target = $region68
      $region67: #{visual_transformer_forward.3} parent=5 // pred_region
        %s1088 = ssub.s32 %s21, 2
        // Predicated region
        $region69: #{visual_transformer_forward.3} parent=67 // pred_check
          %p1089 = pneg %p181
        $region70: #{visual_transformer_forward.3} parent=67 // pred_check_branch
          %1091 = sbr.rel (%p1089) target = $region72
        $region71: #{visual_transformer_forward.3} parent=67 // pred_region
          %s1092 = sand.u32 %s166, 1
          %s1093 = scalar_lea.sflag [#allocation4], %s1092
          %s1094 = sand.u32 %s166, 1
          %s1095 = smul.addr %s1094, 128
          %s1096 = scalar_lea.vmem [#allocation11], %s1095
          %1097 = dma.done %s1093, 2048
        $region72: #{visual_transformer_forward.3} parent=67 // pred_fallthru
          _
      $region68: #{visual_transformer_forward.3} parent=5 // pred_fallthru
        _
    $region6: #{visual_transformer_forward.3} parent=1 // loop_footer
      %s25 = sadd.s32 1, %s21
    $region7: #{visual_transformer_forward.3} parent=1 // loop_footer_branch
      %20 = sbr.rel target = $region3
    $region8: #{visual_transformer_forward.3} parent=1 // loop_exit
      _
    %1098 = vsyncpa [#allocation3], 1
    %s1099 = scalar_lea.sflag [#allocation3], 1
    %1100 = vsyncpa %s1099, 1
    %1101 = vsyncpa [#allocation6], 1
    %s1102 = scalar_lea.sflag [#allocation6], 1
    %1103 = vsyncpa %s1102, 1
    %1104 = vsyncpa [#allocation9], 1
    %1105 = vsyncpa [#allocation4], 1
    %s1106 = scalar_lea.sflag [#allocation4], 1
    %1107 = vsyncpa %s1106, 1

// kernel: visual_transformer_forward.2
$region0: #{visual_transformer_forward.2}
  #allocation0 [shape = 'u32[]', space=smem, size = 0x4, offset = 0x4, fixed_abs, tag = 'smem constant byte address 0x4 - core index']
  #allocation1 [shape = 'u32[144,128]{1,0:T(1,128)}', space=vmem, size = 0x12000, scoped, tag = 'internal scratch']
  #allocation2 [shape = 'f32[24,1]{1,0:T(8,128)}', space=vmem, size = 0x3000, scoped, tag = 'scratch operand']
  #allocation3 [shape = 'f32[24,1]{1,0:T(8,128)}', space=vmem, size = 0x3000, scoped, tag = 'scratch operand']
  #allocation4 [shape = 'f32[24,128]{1,0:T(8,128)}', space=vmem, size = 0x3000, scoped, tag = 'scratch operand']
  %s0 = inlined_call_operand.hbm [shape: f32[2,128,256], index: 0, kind: input, shape index: {}]
  %s1 = inlined_call_operand.hbm [shape: bf16[152,128], index: 1, kind: input, shape index: {}]
  %s2 = inlined_call_operand.hbm [shape: bf16[384,128], index: 2, kind: input, shape index: {}]
  %s3 = inlined_call_operand.hbm [shape: bf16[128,128], index: 3, kind: input, shape index: {}]
  %s4 = inlined_call_operand.hbm [shape: bf16[128,128], index: 4, kind: input, shape index: {}]
  %s5 = inlined_call_operand.hbm [shape: f32[24,128], index: 5, kind: input, shape index: {}]
  %s6 = inlined_call_operand.hbm [shape: f32[24,128], index: 6, kind: input, shape index: {}]
  %s7 = inlined_call_operand.hbm [shape: f32[2,24,128], index: 7, kind: output, shape index: {}]
  %s8 = sld [smem:[#allocation0]]
  $region97: #{visual_transformer_forward.2} parent=0
    _
  %s10 = ssub.s32 1, %s8
  %s11 = scalar_select 0, %s10, %s8
  $region1: #{visual_transformer_forward.2} parent=0
    #allocation5 [shape = 'u8[131072]{0}', space=vmem, size = 0x20000, scoped, tag = 'input window, operand 0']
    #allocation6 [shape = 's32[2]{0}', space=sflag, size = 0x8, scoped, tag = 'scoped memory for visual_transformer_forward.2']
    #allocation7 [shape = 's32[2]{0}', space=sflag, size = 0x8, scoped, tag = 'scoped memory for visual_transformer_forward.2']
    #allocation8 [shape = 'u8[38912]{0}', space=vmem, size = 0x9800, scoped, tag = 'input window, operand 1, single buffered']
    #allocation9 [shape = 's32[1]{0}', space=sflag, size = 0x4, scoped, tag = 'scoped memory for visual_transformer_forward.2']
    #allocation10 [shape = 'u8[98304]{0}', space=vmem, size = 0x18000, scoped, tag = 'input window, operand 2, single buffered']
    #allocation11 [shape = 'u8[32768]{0}', space=vmem, size = 0x8000, scoped, tag = 'input window, operand 3, single buffered']
    #allocation12 [shape = 's32[1]{0}', space=sflag, size = 0x4, scoped, tag = 'scoped memory for visual_transformer_forward.2']
    #allocation13 [shape = 'u8[32768]{0}', space=vmem, size = 0x8000, scoped, tag = 'input window, operand 4, single buffered']
    #allocation14 [shape = 'u8[12288]{0}', space=vmem, size = 0x3000, scoped, tag = 'input window, operand 5, single buffered']
    #allocation15 [shape = 's32[1]{0}', space=sflag, size = 0x4, scoped, tag = 'scoped memory for visual_transformer_forward.2']
    #allocation16 [shape = 'u8[12288]{0}', space=vmem, size = 0x3000, scoped, tag = 'input window, operand 6, single buffered']
    #allocation17 [shape = 'u8[24576]{0}', space=vmem, size = 0x6000, scoped, tag = 'output window, operand 0']
    %12 = vsyncpa [#allocation6], 0
    %s13 = scalar_lea.sflag [#allocation6], 1
    %14 = vsyncpa %s13, 0
    %15 = vsyncpa [#allocation9], 0
    %16 = vsyncpa [#allocation12], 0
    %17 = vsyncpa [#allocation15], 0
    %18 = vsyncpa [#allocation7], 0
    %s19 = scalar_lea.sflag [#allocation7], 1
    %20 = vsyncpa %s19, 0
    loop: start=0, step=1, limit=6
    $region2: #{visual_transformer_forward.2} parent=1 // loop_pre_header
      _
    $region3: #{visual_transformer_forward.2} parent=1 // loop_header
      %s22 = sphi 0, %s26
      %p23 = scmp.ge.s32.totalorder %s22, 6
      %s29 = sphi 0, %s41
      %s30 = sphi 0, %s37
      %s31 = sphi 0, %s29
      %s32 = sphi 0, %s30
      %s33 = sphi 0, %s31
      %s34 = sphi 0, %s32
      %s46 = sphi 0, %s48
      %s49 = sphi 0, %s46
      %s50 = sphi 0, %s49
      %s66 = sphi 0, %s50
      %s70 = sphi 0, %s70
      %s72 = sphi 0, %s70
      %s73 = sphi 0, %s72
      %s87 = sphi 0, %s73
      %s91 = sphi 0, %s91
      %s93 = sphi 0, %s91
      %s94 = sphi 0, %s93
      %s108 = sphi 0, %s94
      %s112 = sphi 0, %s112
      %s114 = sphi 0, %s112
      %s115 = sphi 0, %s114
      %s129 = sphi 0, %s115
      %s133 = sphi 0, %s133
      %s135 = sphi 0, %s133
      %s136 = sphi 0, %s135
      %s150 = sphi 0, %s136
      %s154 = sphi 0, %s154
      %s156 = sphi 0, %s154
      %s157 = sphi 0, %s156
      %s171 = sphi 0, %s157
      %s175 = sphi 0, %s175
      %s177 = sphi 0, %s175
      %s178 = sphi 0, %s177
      %s192 = sphi 0, %s178
      %s198 = sphi 0, %s200
      %s201 = sphi 0, %s198
      %s202 = sphi 0, %s201
      %s218 = sphi 0, %s202
    $region4: #{visual_transformer_forward.2} parent=1 // loop_header_branch
      %25 = sbr.rel (%p23) target = $region8
    $region5: #{visual_transformer_forward.2} parent=1 // loop_body
      %s27 = ssub.s32 %s22, 1
      %s28 = ssub.s32 %s22, 2
      %s35 = sadd.s32 1, %s30
      %p36 = scmp.ge.s32.totalorder %s35, 2
      %s37 = scalar_select %p36, 0, %s35
      %s38 = sadd.s32 1, %s29
      %s39 = scalar_select %p36, %s38, %s29
      %p40 = scmp.ge.s32.totalorder %s39, 2
      %s41 = scalar_select %p40, 0, %s39
      %s42 = ssub.s32 %s29, %s41
      %s43 = ssub.s32 %s30, %s37
      %s44 = sor.u32 %s42, %s43
      %p45 = scmp.eq.s32.totalorder %s44, 0
      %s47 = sadd.s32 %s46, 1
      %s48 = scalar_select %p45, %s46, %s47
      %p51 = pneg %p45
      %p52 = scmp.eq.s32.totalorder %s22, 3
      %p53 = por %p51, %p52
      %p54 = scmp.ne.s32.totalorder %s46, %s49
      %p55 = scmp.eq.s32.totalorder %s22, 0
      %p56 = por %p54, %p55
      %p57 = scmp.ne.s32.totalorder %s46, %s49
      %p58 = scmp.eq.s32.totalorder %s27, 3
      %p59 = por %p57, %p58
      %p60 = scmp.ne.s32.totalorder %s49, %s50
      %p61 = scmp.eq.s32.totalorder %s27, 0
      %p62 = por %p60, %p61
      %p63 = scmp.ne.s32.totalorder %s49, %s50
      %p64 = scmp.eq.s32.totalorder %s28, 3
      %p65 = por %p63, %p64
      %p67 = scmp.ne.s32.totalorder %s50, %s66
      %p68 = scmp.eq.s32.totalorder %s28, 0
      %p69 = por %p67, %p68
      %s71 = sadd.s32 %s70, 1
      %p74 = scmp.eq.s32.totalorder %s22, 3
      %p75 = scmp.ne.s32.totalorder %s70, %s72
      %p76 = scmp.eq.s32.totalorder %s22, 0
      %p77 = por %p75, %p76
      %p78 = scmp.ne.s32.totalorder %s70, %s72
      %p79 = scmp.eq.s32.totalorder %s27, 3
      %p80 = por %p78, %p79
      %p81 = scmp.ne.s32.totalorder %s72, %s73
      %p82 = scmp.eq.s32.totalorder %s27, 0
      %p83 = por %p81, %p82
      %p84 = scmp.ne.s32.totalorder %s72, %s73
      %p85 = scmp.eq.s32.totalorder %s28, 3
      %p86 = por %p84, %p85
      %p88 = scmp.ne.s32.totalorder %s73, %s87
      %p89 = scmp.eq.s32.totalorder %s28, 0
      %p90 = por %p88, %p89
      %s92 = sadd.s32 %s91, 1
      %p95 = scmp.eq.s32.totalorder %s22, 3
      %p96 = scmp.ne.s32.totalorder %s91, %s93
      %p97 = scmp.eq.s32.totalorder %s22, 0
      %p98 = por %p96, %p97
      %p99 = scmp.ne.s32.totalorder %s91, %s93
      %p100 = scmp.eq.s32.totalorder %s27, 3
      %p101 = por %p99, %p100
      %p102 = scmp.ne.s32.totalorder %s93, %s94
      %p103 = scmp.eq.s32.totalorder %s27, 0
      %p104 = por %p102, %p103
      %p105 = scmp.ne.s32.totalorder %s93, %s94
      %p106 = scmp.eq.s32.totalorder %s28, 3
      %p107 = por %p105, %p106
      %p109 = scmp.ne.s32.totalorder %s94, %s108
      %p110 = scmp.eq.s32.totalorder %s28, 0
      %p111 = por %p109, %p110
      %s113 = sadd.s32 %s112, 1
      %p116 = scmp.eq.s32.totalorder %s22, 3
      %p117 = scmp.ne.s32.totalorder %s112, %s114
      %p118 = scmp.eq.s32.totalorder %s22, 0
      %p119 = por %p117, %p118
      %p120 = scmp.ne.s32.totalorder %s112, %s114
      %p121 = scmp.eq.s32.totalorder %s27, 3
      %p122 = por %p120, %p121
      %p123 = scmp.ne.s32.totalorder %s114, %s115
      %p124 = scmp.eq.s32.totalorder %s27, 0
      %p125 = por %p123, %p124
      %p126 = scmp.ne.s32.totalorder %s114, %s115
      %p127 = scmp.eq.s32.totalorder %s28, 3
      %p128 = por %p126, %p127
      %p130 = scmp.ne.s32.totalorder %s115, %s129
      %p131 = scmp.eq.s32.totalorder %s28, 0
      %p132 = por %p130, %p131
      %s134 = sadd.s32 %s133, 1
      %p137 = scmp.eq.s32.totalorder %s22, 3
      %p138 = scmp.ne.s32.totalorder %s133, %s135
      %p139 = scmp.eq.s32.totalorder %s22, 0
      %p140 = por %p138, %p139
      %p141 = scmp.ne.s32.totalorder %s133, %s135
      %p142 = scmp.eq.s32.totalorder %s27, 3
      %p143 = por %p141, %p142
      %p144 = scmp.ne.s32.totalorder %s135, %s136
      %p145 = scmp.eq.s32.totalorder %s27, 0
      %p146 = por %p144, %p145
      %p147 = scmp.ne.s32.totalorder %s135, %s136
      %p148 = scmp.eq.s32.totalorder %s28, 3
      %p149 = por %p147, %p148
      %p151 = scmp.ne.s32.totalorder %s136, %s150
      %p152 = scmp.eq.s32.totalorder %s28, 0
      %p153 = por %p151, %p152
      %s155 = sadd.s32 %s154, 1
      %p158 = scmp.eq.s32.totalorder %s22, 3
      %p159 = scmp.ne.s32.totalorder %s154, %s156
      %p160 = scmp.eq.s32.totalorder %s22, 0
      %p161 = por %p159, %p160
      %p162 = scmp.ne.s32.totalorder %s154, %s156
      %p163 = scmp.eq.s32.totalorder %s27, 3
      %p164 = por %p162, %p163
      %p165 = scmp.ne.s32.totalorder %s156, %s157
      %p166 = scmp.eq.s32.totalorder %s27, 0
      %p167 = por %p165, %p166
      %p168 = scmp.ne.s32.totalorder %s156, %s157
      %p169 = scmp.eq.s32.totalorder %s28, 3
      %p170 = por %p168, %p169
      %p172 = scmp.ne.s32.totalorder %s157, %s171
      %p173 = scmp.eq.s32.totalorder %s28, 0
      %p174 = por %p172, %p173
      %s176 = sadd.s32 %s175, 1
      %p179 = scmp.eq.s32.totalorder %s22, 3
      %p180 = scmp.ne.s32.totalorder %s175, %s177
      %p181 = scmp.eq.s32.totalorder %s22, 0
      %p182 = por %p180, %p181
      %p183 = scmp.ne.s32.totalorder %s175, %s177
      %p184 = scmp.eq.s32.totalorder %s27, 3
      %p185 = por %p183, %p184
      %p186 = scmp.ne.s32.totalorder %s177, %s178
      %p187 = scmp.eq.s32.totalorder %s27, 0
      %p188 = por %p186, %p187
      %p189 = scmp.ne.s32.totalorder %s177, %s178
      %p190 = scmp.eq.s32.totalorder %s28, 3
      %p191 = por %p189, %p190
      %p193 = scmp.ne.s32.totalorder %s178, %s192
      %p194 = scmp.eq.s32.totalorder %s28, 0
      %p195 = por %p193, %p194
      %s196 = ssub.s32 %s29, %s41
      %p197 = scmp.eq.s32.totalorder %s196, 0
      %s199 = sadd.s32 %s198, 1
      %s200 = scalar_select %p197, %s198, %s199
      %p203 = pneg %p197
      %p204 = scmp.eq.s32.totalorder %s22, 3
      %p205 = por %p203, %p204
      %p206 = scmp.ne.s32.totalorder %s198, %s201
      %p207 = scmp.eq.s32.totalorder %s22, 0
      %p208 = por %p206, %p207
      %p209 = scmp.ne.s32.totalorder %s198, %s201
      %p210 = scmp.eq.s32.totalorder %s27, 3
      %p211 = por %p209, %p210
      %p212 = scmp.ne.s32.totalorder %s201, %s202
      %p213 = scmp.eq.s32.totalorder %s27, 0
      %p214 = por %p212, %p213
      %p215 = scmp.ne.s32.totalorder %s201, %s202
      %p216 = scmp.eq.s32.totalorder %s28, 3
      %p217 = por %p215, %p216
      %p219 = scmp.ne.s32.totalorder %s202, %s218
      %p220 = scmp.eq.s32.totalorder %s28, 0
      %p221 = por %p219, %p220
      %p222 = scmp.le.s32.totalorder 1, %s22
      %p223 = scmp.lt.s32.totalorder %s22, 5
      %p224 = pnand %p222, %p223
      %p225 = pneg %p224
      // Predicated region
      $region9: #{visual_transformer_forward.2} parent=5 // pred_check
        _
      $region10: #{visual_transformer_forward.2} parent=5 // pred_check_branch
        %227 = sbr.rel (%p224) target = $region12
      $region11: #{visual_transformer_forward.2} parent=5 // pred_region
        %s228 = ssub.s32 %s22, 1
        // Predicated region
        $region13: #{visual_transformer_forward.2} parent=11 // pred_check
          %p229 = pneg %p83
        $region14: #{visual_transformer_forward.2} parent=11 // pred_check_branch
          %231 = sbr.rel (%p229) target = $region16
        $region15: #{visual_transformer_forward.2} parent=11 // pred_region
          %s233 = ssub.s32 1216, 1216
          %234 = vsyncadd [#allocation9], %s233
          %s235 = sshll.u32 [#allocation8], 4
          %s236 = int_to_ptr.vmem [resolvable:$true] %s235
          %241 = dma.hbm_to_vmem [thread:$0]  %s1, 1216, %s236, [#allocation9], 64, 64, 4
        $region16: #{visual_transformer_forward.2} parent=11 // pred_fallthru
          _
        // Predicated region
        $region17: #{visual_transformer_forward.2} parent=11 // pred_check
          %p242 = pneg %p104
        $region18: #{visual_transformer_forward.2} parent=11 // pred_check_branch
          %244 = sbr.rel (%p242) target = $region20
        $region19: #{visual_transformer_forward.2} parent=11 // pred_region
          %s246 = ssub.s32 3072, 3072
          %247 = vsyncadd [#allocation9], %s246
          %s248 = sshll.u32 [#allocation10], 4
          %s249 = int_to_ptr.vmem [resolvable:$true] %s248
          %254 = dma.hbm_to_vmem [thread:$0]  %s2, 3072, %s249, [#allocation9], 64, 64, 4
        $region20: #{visual_transformer_forward.2} parent=11 // pred_fallthru
          _
        // Predicated region
        $region21: #{visual_transformer_forward.2} parent=11 // pred_check
          %p255 = pneg %p125
        $region22: #{visual_transformer_forward.2} parent=11 // pred_check_branch
          %257 = sbr.rel (%p255) target = $region24
        $region23: #{visual_transformer_forward.2} parent=11 // pred_region
          %s259 = ssub.s32 1024, 1024
          %260 = vsyncadd [#allocation12], %s259
          %s261 = sshll.u32 [#allocation11], 4
          %s262 = int_to_ptr.vmem [resolvable:$true] %s261
          %267 = dma.hbm_to_vmem [thread:$0]  %s3, 1024, %s262, [#allocation12], 64, 64, 4
        $region24: #{visual_transformer_forward.2} parent=11 // pred_fallthru
          _
        // Predicated region
        $region25: #{visual_transformer_forward.2} parent=11 // pred_check
          %p268 = pneg %p146
        $region26: #{visual_transformer_forward.2} parent=11 // pred_check_branch
          %270 = sbr.rel (%p268) target = $region28
        $region27: #{visual_transformer_forward.2} parent=11 // pred_region
          %s272 = ssub.s32 1024, 1024
          %273 = vsyncadd [#allocation12], %s272
          %s274 = sshll.u32 [#allocation13], 4
          %s275 = int_to_ptr.vmem [resolvable:$true] %s274
          %280 = dma.hbm_to_vmem [thread:$0]  %s4, 1024, %s275, [#allocation12], 64, 64, 4
        $region28: #{visual_transformer_forward.2} parent=11 // pred_fallthru
          _
        // Predicated region
        $region29: #{visual_transformer_forward.2} parent=11 // pred_check
          %p281 = pneg %p167
        $region30: #{visual_transformer_forward.2} parent=11 // pred_check_branch
          %283 = sbr.rel (%p281) target = $region32
        $region31: #{visual_transformer_forward.2} parent=11 // pred_region
          %s285 = ssub.s32 384, 384
          %286 = vsyncadd [#allocation15], %s285
          %s287 = sshll.u32 [#allocation14], 4
          %s288 = int_to_ptr.vmem [resolvable:$true] %s287
          %293 = dma.hbm_to_vmem [thread:$0]  %s5, 384, %s288, [#allocation15], 128, 128, 8
        $region32: #{visual_transformer_forward.2} parent=11 // pred_fallthru
          _
        // Predicated region
        $region33: #{visual_transformer_forward.2} parent=11 // pred_check
          %p294 = pneg %p188
        $region34: #{visual_transformer_forward.2} parent=11 // pred_check_branch
          %296 = sbr.rel (%p294) target = $region36
        $region35: #{visual_transformer_forward.2} parent=11 // pred_region
          %s298 = ssub.s32 384, 384
          %299 = vsyncadd [#allocation15], %s298
          %s300 = sshll.u32 [#allocation16], 4
          %s301 = int_to_ptr.vmem [resolvable:$true] %s300
          %306 = dma.hbm_to_vmem [thread:$0]  %s6, 384, %s301, [#allocation15], 128, 128, 8
        $region36: #{visual_transformer_forward.2} parent=11 // pred_fallthru
          _
      $region12: #{visual_transformer_forward.2} parent=5 // pred_fallthru
        _
      %p307 = scmp.lt.s32.totalorder %s22, 4
      // Predicated region
      $region37: #{visual_transformer_forward.2} parent=5 // pred_check
        %p308 = pneg %p307
      $region38: #{visual_transformer_forward.2} parent=5 // pred_check_branch
        %310 = sbr.rel (%p308) target = $region40
      $region39: #{visual_transformer_forward.2} parent=5 // pred_region
        // Predicated region
        $region41: #{visual_transformer_forward.2} parent=39 // pred_check
          %p311 = pneg %p56
        $region42: #{visual_transformer_forward.2} parent=39 // pred_check_branch
          %313 = sbr.rel (%p311) target = $region44
        $region43: #{visual_transformer_forward.2} parent=39 // pred_region
          %s314 = sand.u32 %s46, 1
          %s315 = scalar_lea.sflag [#allocation6], %s314
          %s316 = sand.u32 %s46, 1
          %s317 = smul.addr %s316, 128
          %s318 = scalar_lea.vmem [#allocation5], %s317
          %s320 = ssub.s32 2048, 2048
          %321 = vsyncadd %s315, %s320
          %s322 = smul.addr %s29, 32
          %s323 = sadd.s32 %s30, %s322
          %s324 = smul.addr %s323, 128
          %s325 = scalar_lea.hbm %s0, %s324
          %s326 = sshll.u32 %s318, 4
          %s327 = int_to_ptr.vmem [resolvable:$true] %s326
          %332 = dma.hbm_to_vmem [thread:$0]  %s325, 2048, %s327, %s315, 256, 128, 8
        $region44: #{visual_transformer_forward.2} parent=39 // pred_fallthru
          _
      $region40: #{visual_transformer_forward.2} parent=5 // pred_fallthru
        _
      %p333 = scmp.le.s32.totalorder 1, %s22
      %p334 = scmp.lt.s32.totalorder %s22, 5
      %p335 = pnand %p333, %p334
      %p336 = pneg %p335
      // Predicated region
      $region45: #{visual_transformer_forward.2} parent=5 // pred_check
        _
      $region46: #{visual_transformer_forward.2} parent=5 // pred_check_branch
        %338 = sbr.rel (%p335) target = $region48
      $region47: #{visual_transformer_forward.2} parent=5 // pred_region
        %s339 = ssub.s32 %s22, 1
        %s340 = sand.u32 %s49, 1
        %s341 = scalar_lea.sflag [#allocation6], %s340
        %s342 = sand.u32 %s49, 1
        %s343 = smul.addr %s342, 128
        %s344 = scalar_lea.vmem [#allocation5], %s343
        // Predicated region
        $region49: #{visual_transformer_forward.2} parent=47 // pred_check
          %p345 = pneg %p62
        $region50: #{visual_transformer_forward.2} parent=47 // pred_check_branch
          %347 = sbr.rel (%p345) target = $region52
        $region51: #{visual_transformer_forward.2} parent=47 // pred_region
          %348 = dma.done %s341, 2048
        $region52: #{visual_transformer_forward.2} parent=47 // pred_fallthru
          _
        // Predicated region
        $region53: #{visual_transformer_forward.2} parent=47 // pred_check
          %p349 = pneg %p83
        $region54: #{visual_transformer_forward.2} parent=47 // pred_check_branch
          %351 = sbr.rel (%p349) target = $region56
        $region55: #{visual_transformer_forward.2} parent=47 // pred_region
          %352 = dma.done [#allocation9], 1216
        $region56: #{visual_transformer_forward.2} parent=47 // pred_fallthru
          _
        // Predicated region
        $region57: #{visual_transformer_forward.2} parent=47 // pred_check
          %p353 = pneg %p104
        $region58: #{visual_transformer_forward.2} parent=47 // pred_check_branch
          %355 = sbr.rel (%p353) target = $region60
        $region59: #{visual_transformer_forward.2} parent=47 // pred_region
          %356 = dma.done [#allocation9], 3072
        $region60: #{visual_transformer_forward.2} parent=47 // pred_fallthru
          _
        // Predicated region
        $region61: #{visual_transformer_forward.2} parent=47 // pred_check
          %p357 = pneg %p125
        $region62: #{visual_transformer_forward.2} parent=47 // pred_check_branch
          %359 = sbr.rel (%p357) target = $region64
        $region63: #{visual_transformer_forward.2} parent=47 // pred_region
          %360 = dma.done [#allocation12], 1024
        $region64: #{visual_transformer_forward.2} parent=47 // pred_fallthru
          _
        // Predicated region
        $region65: #{visual_transformer_forward.2} parent=47 // pred_check
          %p361 = pneg %p146
        $region66: #{visual_transformer_forward.2} parent=47 // pred_check_branch
          %363 = sbr.rel (%p361) target = $region68
        $region67: #{visual_transformer_forward.2} parent=47 // pred_region
          %364 = dma.done [#allocation12], 1024
        $region68: #{visual_transformer_forward.2} parent=47 // pred_fallthru
          _
        // Predicated region
        $region69: #{visual_transformer_forward.2} parent=47 // pred_check
          %p365 = pneg %p167
        $region70: #{visual_transformer_forward.2} parent=47 // pred_check_branch
          %367 = sbr.rel (%p365) target = $region72
        $region71: #{visual_transformer_forward.2} parent=47 // pred_region
          %368 = dma.done [#allocation15], 384
        $region72: #{visual_transformer_forward.2} parent=47 // pred_fallthru
          _
        // Predicated region
        $region73: #{visual_transformer_forward.2} parent=47 // pred_check
          %p369 = pneg %p188
        $region74: #{visual_transformer_forward.2} parent=47 // pred_check_branch
          %371 = sbr.rel (%p369) target = $region76
        $region75: #{visual_transformer_forward.2} parent=47 // pred_region
          %372 = dma.done [#allocation15], 384
        $region76: #{visual_transformer_forward.2} parent=47 // pred_fallthru
          _
        %s373 = sand.u32 %s49, 1
        %s374 = scalar_lea.sflag [#allocation6], %s373
        %s375 = sand.u32 %s49, 1
        %s376 = smul.addr %s375, 128
        %s377 = scalar_lea.vmem [#allocation5], %s376
        %p378 = pneg %p62
        %p379 = pneg %p59
        %p380 = pneg %p83
        %p381 = pneg %p80
        %p382 = pneg %p104
        %p383 = pneg %p101
        %p384 = pneg %p125
        %p385 = pneg %p122
        %p386 = pneg %p146
        %p387 = pneg %p143
        %p388 = pneg %p167
        %p389 = pneg %p164
        %p390 = pneg %p188
        %p391 = pneg %p185
        %p392 = pneg %p214
        %p393 = pneg %p211
        %s394 = sand.u32 %s201, 1
        %s395 = scalar_lea.sflag [#allocation7], %s394
        %s396 = sand.u32 %s201, 1
        %s397 = smul.addr %s396, 24
        %s398 = scalar_lea.vmem [#allocation17], %s397
        %p400 = scmp.eq.s32.totalorder %s32, 0
        // Predicated region
        $region77: #{visual_transformer_forward.2} parent=47 // pred_check
          %p401 = pneg %p400
        $region78: #{visual_transformer_forward.2} parent=47 // pred_check_branch
          %403 = sbr.rel (%p401) target = $region80
        $region79: #{visual_transformer_forward.2} parent=47 // pred_region
          %vm404 = vcmask 7168
          %405 = vst.msk [vmem:[#allocation2] sm:$0xff] %vm404, -inf
          %406 = vst.msk [vmem:[#allocation2 + $0x8] sm:$0xff] %vm404, -inf
          %407 = vst.msk [vmem:[#allocation2 + $0x10] sm:$0xff] %vm404, -inf
          %408 = vst.msk [vmem:[#allocation3] sm:$0xff] %vm404, 0.0
          %409 = vst.msk [vmem:[#allocation3 + $0x8] sm:$0xff] %vm404, 0.0
          %410 = vst.msk [vmem:[#allocation3 + $0x10] sm:$0xff] %vm404, 0.0
          %411 = vst [vmem:[#allocation4] sm:$0xff] 0.0
          %412 = vst [vmem:[#allocation4 + $0x8] sm:$0xff] 0.0
          %413 = vst [vmem:[#allocation4 + $0x10] sm:$0xff] 0.0
        $region80: #{visual_transformer_forward.2} parent=47 // pred_fallthru
          _
        %v414 = vld [vmem:[%s344] sm:$0xff]
        %v415 = vld [vmem:[%s344 + $0x8] sm:$0xff]
        %v416 = vld [vmem:[%s344 + $0x10] sm:$0xff]
        %v417 = vld [vmem:[%s344 + $0x18] sm:$0xff]
        %v418 = vld [vmem:[%s344 + $0x20] sm:$0xff]
        %v419 = vld [vmem:[%s344 + $0x28] sm:$0xff]
        %v420 = vld [vmem:[%s344 + $0x30] sm:$0xff]
        %v421 = vld [vmem:[%s344 + $0x38] sm:$0xff]
        %v422 = vld [vmem:[%s344 + $0x40] sm:$0xff]
        %v423 = vld [vmem:[%s344 + $0x48] sm:$0xff]
        %v424 = vld [vmem:[%s344 + $0x50] sm:$0xff]
        %v425 = vld [vmem:[%s344 + $0x58] sm:$0xff]
        %v426 = vld [vmem:[%s344 + $0x60] sm:$0xff]
        %v427 = vld [vmem:[%s344 + $0x68] sm:$0xff]
        %v428 = vld [vmem:[%s344 + $0x70] sm:$0xff]
        %v429 = vld [vmem:[%s344 + $0x78] sm:$0xff]
        %v430 = vld [vmem:[#allocation8] sm:$0xf]
        %v431 = vld [vmem:[#allocation8 + $0x4] sm:$0xf]
        %v432 = vld [vmem:[#allocation8 + $0x8] sm:$0xf]
        %v433 = vld [vmem:[#allocation8 + $0xc] sm:$0xf]
        %v434 = vld [vmem:[#allocation8 + $0x10] sm:$0xf]
        %v435 = vld [vmem:[#allocation8 + $0x14] sm:$0xf]
        %v436 = vld [vmem:[#allocation8 + $0x18] sm:$0xf]
        %v437 = vld [vmem:[#allocation8 + $0x1c] sm:$0xf]
        %v438 = vld [vmem:[#allocation8 + $0x20] sm:$0xf]
        %v439 = vld [vmem:[#allocation8 + $0x24] sm:$0xf]
        %v440 = vld [vmem:[#allocation8 + $0x28] sm:$0xf]
        %v441 = vld [vmem:[#allocation8 + $0x2c] sm:$0xf]
        %v442 = vld [vmem:[#allocation8 + $0x30] sm:$0xf]
        %v443 = vld [vmem:[#allocation8 + $0x34] sm:$0xf]
        %v444 = vld [vmem:[#allocation8 + $0x38] sm:$0xf]
        %v445 = vld [vmem:[#allocation8 + $0x3c] sm:$0xf]
        %v446 = vld [vmem:[#allocation8 + $0x40] sm:$0xf]
        %v447 = vld [vmem:[#allocation8 + $0x44] sm:$0xf]
        %v448 = vld [vmem:[#allocation8 + $0x48] sm:$0xf]
        %v449 = vpack.c.bf16 %v415, %v414
        %v450 = vpack.c.bf16 %v417, %v416
        %v451 = vpack.c.bf16 %v419, %v418
        %v452 = vpack.c.bf16 %v421, %v420
        %v453 = vpack.c.bf16 %v423, %v422
        %v454 = vpack.c.bf16 %v425, %v424
        %v455 = vpack.c.bf16 %v427, %v426
        %v456 = vpack.c.bf16 %v429, %v428
        %v476 = vunpack.c.l.b16 %v430
        %v477 = vunpack.c.l.b16 %v431
        %v478 = vunpack.c.l.b16 %v432
        %v479 = vunpack.c.l.b16 %v433
        %v480 = vunpack.c.l.b16 %v434
        %v481 = vunpack.c.l.b16 %v435
        %v482 = vunpack.c.l.b16 %v436
        %v483 = vunpack.c.l.b16 %v437
        %v484 = vunpack.c.l.b16 %v438
        %v485 = vunpack.c.l.b16 %v439
        %v486 = vunpack.c.l.b16 %v440
        %v487 = vunpack.c.l.b16 %v441
        %v488 = vunpack.c.l.b16 %v442
        %v489 = vunpack.c.l.b16 %v443
        %v490 = vunpack.c.l.b16 %v444
        %v491 = vunpack.c.l.b16 %v445
        %v492 = vunpack.c.l.b16 %v446
        %v493 = vunpack.c.l.b16 %v447
        %v494 = vunpack.c.l.b16 %v448
        %v495 = vpack.c.b16 %v477, %v476
        %v496 = vpack.c.b16 %v479, %v478
        %v497 = vpack.c.b16 %v481, %v480
        %v498 = vpack.c.b16 %v483, %v482
        %v499 = vpack.c.b16 %v485, %v484
        %v500 = vpack.c.b16 %v487, %v486
        %v501 = vpack.c.b16 %v489, %v488
        %v502 = vpack.c.b16 %v491, %v490
        %v503 = vpack.c.b16 %v493, %v492
        %v504 = vpack.c.b16 %v494, %v494
        %515 = vmatprep.subr.bf16.mxu0 0
        %516 = vmatpush1.bf16.msra.mxu0 %v449
        %517 = vmatprep.subr.bf16.mxu0 0
        %518 = vmatpush1.bf16.msra.mxu0 %v450
        %519 = vmatprep.subr.bf16.mxu0 0
        %520 = vmatpush1.bf16.msra.mxu0 %v451
        %521 = vmatprep.subr.bf16.mxu0 0
        %522 = vmatpush1.bf16.msra.mxu0 %v452
        %523 = vmatprep.subr.bf16.mxu0 0
        %524 = vmatpush1.bf16.msra.mxu0 %v453
        %525 = vmatprep.subr.bf16.mxu0 0
        %526 = vmatpush1.bf16.msra.mxu0 %v454
        %527 = vmatprep.subr.bf16.mxu0 0
        %528 = vmatpush1.bf16.msra.mxu0 %v455
        %529 = vmatprep.subr.bf16.mxu0 0
        %530 = vmatpush1.bf16.msra.mxu0 %v456
        %531 = vmatprep.subr.bf16.mxu0 0
        %532 = vmatpush1.bf16.msra.mxu0 0
        %533 = vmatprep.subr.bf16.mxu0 0
        %534 = vmatpush1.bf16.msra.mxu0 0
        %535 = vmatprep.subr.bf16.mxu0 0
        %536 = vmatpush1.bf16.msra.mxu0 0
        %537 = vmatprep.subr.bf16.mxu0 0
        %538 = vmatpush1.bf16.msra.mxu0 0
        %539 = vmatprep.subr.bf16.mxu0 0
        %540 = vmatpush1.bf16.msra.mxu0 0
        %541 = vmatprep.subr.bf16.mxu0 0
        %542 = vmatpush1.bf16.msra.mxu0 0
        %543 = vmatprep.subr.bf16.mxu0 0
        %544 = vmatpush1.bf16.msra.mxu0 0
        %545 = vmatprep.subr.bf16.mxu0 0
        %546 = vmatpush1.bf16.msra.mxu0 0
        %547 = vmatprep.mubr.bf16.mxu0 0
        %548 = vmatmul.mubr.bf16.gmra.mrb[0].mxu0 %v495
        %v549 = vpop.f32.mrb[0].mxu0
        %v550 = vadd.f32 0.0, %v549
        %v551 = vpop.f32.mrb[0].mxu0
        %v552 = vpop.f32.mrb[0].mxu0
        %v553 = vadd.f32 0.0, %v552
        %v554 = vpop.f32.mrb[0].mxu0
        %555 = vmatprep.mubr.bf16.mxu0 0
        %556 = vmatmul.mubr.bf16.gmra.mrb[0].mxu0 %v496
        %v557 = vpop.f32.mrb[0].mxu0
        %v558 = vadd.f32 0.0, %v557
        %v559 = vpop.f32.mrb[0].mxu0
        %v560 = vpop.f32.mrb[0].mxu0
        %v561 = vadd.f32 0.0, %v560
        %v562 = vpop.f32.mrb[0].mxu0
        %563 = vmatprep.mubr.bf16.mxu0 0
        %564 = vmatmul.mubr.bf16.gmra.mrb[0].mxu0 %v497
        %v565 = vpop.f32.mrb[0].mxu0
        %v566 = vadd.f32 0.0, %v565
        %v567 = vpop.f32.mrb[0].mxu0
        %v568 = vpop.f32.mrb[0].mxu0
        %v569 = vadd.f32 0.0, %v568
        %v570 = vpop.f32.mrb[0].mxu0
        %571 = vmatprep.mubr.bf16.mxu0 0
        %572 = vmatmul.mubr.bf16.gmra.mrb[0].mxu0 %v498
        %v573 = vpop.f32.mrb[0].mxu0
        %v574 = vadd.f32 0.0, %v573
        %v575 = vpop.f32.mrb[0].mxu0
        %v576 = vpop.f32.mrb[0].mxu0
        %v577 = vadd.f32 0.0, %v576
        %v578 = vpop.f32.mrb[0].mxu0
        %579 = vmatprep.mubr.bf16.mxu0 0
        %580 = vmatmul.mubr.bf16.gmra.mrb[0].mxu0 %v499
        %v581 = vpop.f32.mrb[0].mxu0
        %v582 = vadd.f32 0.0, %v581
        %v583 = vpop.f32.mrb[0].mxu0
        %v584 = vpop.f32.mrb[0].mxu0
        %v585 = vadd.f32 0.0, %v584
        %v586 = vpop.f32.mrb[0].mxu0
        %587 = vmatprep.mubr.bf16.mxu0 0
        %588 = vmatmul.mubr.bf16.gmra.mrb[0].mxu0 %v500
        %v589 = vpop.f32.mrb[0].mxu0
        %v590 = vadd.f32 0.0, %v589
        %v591 = vpop.f32.mrb[0].mxu0
        %v592 = vpop.f32.mrb[0].mxu0
        %v593 = vadd.f32 0.0, %v592
        %v594 = vpop.f32.mrb[0].mxu0
        %595 = vmatprep.mubr.bf16.mxu0 0
        %596 = vmatmul.mubr.bf16.gmra.mrb[0].mxu0 %v501
        %v597 = vpop.f32.mrb[0].mxu0
        %v598 = vadd.f32 0.0, %v597
        %v599 = vpop.f32.mrb[0].mxu0
        %v600 = vpop.f32.mrb[0].mxu0
        %v601 = vadd.f32 0.0, %v600
        %v602 = vpop.f32.mrb[0].mxu0
        %603 = vmatprep.mubr.bf16.mxu0 0
        %604 = vmatmul.mubr.bf16.gmra.mrb[0].mxu0 %v502
        %v605 = vpop.f32.mrb[0].mxu0
        %v606 = vadd.f32 0.0, %v605
        %v607 = vpop.f32.mrb[0].mxu0
        %v608 = vpop.f32.mrb[0].mxu0
        %v609 = vadd.f32 0.0, %v608
        %v610 = vpop.f32.mrb[0].mxu0
        %611 = vmatprep.mubr.bf16.mxu0 0
        %612 = vmatmul.mubr.bf16.gmra.mrb[0].mxu0 %v503
        %v613 = vpop.f32.mrb[0].mxu0
        %v614 = vadd.f32 0.0, %v613
        %v615 = vpop.f32.mrb[0].mxu0
        %v616 = vpop.f32.mrb[0].mxu0
        %v617 = vadd.f32 0.0, %v616
        %v618 = vpop.f32.mrb[0].mxu0
        %619 = vmatprep.mubr.bf16.mxu0 0
        %620 = vmatmul.mubr.bf16.gmra.mrb[0].mxu0 %v504
        %v621 = vpop.f32.mrb[0].mxu0
        %v622 = vadd.f32 0.0, %v621
        %v623 = vpop.f32.mrb[0].mxu0
        %v624 = vpop.f32.mrb[0].mxu0
        %v625 = vpop.f32.mrb[0].mxu0
        %626 = vdwg.mxu0
        %v627 = vld [vmem:[#allocation2] sm:$0xff]
        %v628 = vld [vmem:[#allocation2 + $0x8] sm:$0xff]
        %v629 = vld [vmem:[#allocation2 + $0x10] sm:$0xff]
        %630 = vmax.xlane.f32.xlu0 %v550
        %v631 = vpop.xlane.xlu0 %630
        %632 = vmax.xlane.f32.xlu0 %v553
        %v633 = vpop.xlane.xlu0 %632
        %634 = vmax.xlane.f32.xlu0 %v558
        %v635 = vpop.xlane.xlu0 %634
        %v636 = vmax.f32 %v627, %v631
        %v637 = vmax.f32 %v628, %v633
        %v638 = vmax.f32 %v629, %v635
        %v639 = vsub.f32 %v627, %v636
        %v640 = vsub.f32 %v628, %v637
        %v641 = vsub.f32 %v629, %v638
        %v642 = vmul.f32 %v639, 1.442695
        %v643 = vpow.pop %v642
        %v644 = vmul.f32 %v640, 1.442695
        %v645 = vpow.pop %v644
        %v646 = vmul.f32 %v641, 1.442695
        %v647 = vpow.pop %v646
        %649 = vset.pattern.permute.xlu0 0
        %650 = vperm.xlu0 %649, %v636
        %v651 = vpop.permute.xlu0 %650
        %654 = vset.pattern.permute.xlu0 0
        %655 = vperm.xlu0 %654, %v637
        %v656 = vpop.permute.xlu0 %655
        %659 = vset.pattern.permute.xlu0 0
        %660 = vperm.xlu0 %659, %v638
        %v661 = vpop.permute.xlu0 %660
        %v663 = vsub.f32 %v550, %v651
        %v664 = vsub.f32 %v553, %v656
        %v665 = vsub.f32 %v558, %v661
        %v666 = vmul.f32 %v663, 1.442695
        %v667 = vpow.pop %v666
        %v668 = vmul.f32 %v664, 1.442695
        %v669 = vpow.pop %v668
        %v670 = vmul.f32 %v665, 1.442695
        %v671 = vpow.pop %v670
        %v672 = vld [vmem:[#allocation3] sm:$0xff]
        %v673 = vld [vmem:[#allocation3 + $0x8] sm:$0xff]
        %v674 = vld [vmem:[#allocation3 + $0x10] sm:$0xff]
        %v675 = vmul.f32 %v643, %v672
        %v676 = vmul.f32 %v645, %v673
        %v677 = vmul.f32 %v647, %v674
        %678 = vadd.xlane.f32.xlu0 %v667
        %v679 = vpop.xlane.xlu0 %678
        %680 = vadd.xlane.f32.xlu0 %v669
        %v681 = vpop.xlane.xlu0 %680
        %682 = vadd.xlane.f32.xlu0 %v671
        %v683 = vpop.xlane.xlu0 %682
        %v684 = vadd.f32 %v675, %v679
        %v685 = vadd.f32 %v676, %v681
        %v686 = vadd.f32 %v677, %v683
        %vm687 = vcmask 7168
        %688 = vst.msk [vmem:[#allocation3] sm:$0xff] %vm687, %v684
        %689 = vst.msk [vmem:[#allocation3 + $0x8] sm:$0xff] %vm687, %v685
        %690 = vst.msk [vmem:[#allocation3 + $0x10] sm:$0xff] %vm687, %v686
        %v691 = vld [vmem:[#allocation4] sm:$0xff]
        %v692 = vld [vmem:[#allocation4 + $0x8] sm:$0xff]
        %v693 = vld [vmem:[#allocation4 + $0x10] sm:$0xff]
        %695 = vset.pattern.permute.xlu0 0
        %696 = vperm.xlu0 %695, %v643
        %v697 = vpop.permute.xlu0 %696
        %700 = vset.pattern.permute.xlu0 0
        %701 = vperm.xlu0 %700, %v645
        %v702 = vpop.permute.xlu0 %701
        %705 = vset.pattern.permute.xlu0 0
        %706 = vperm.xlu0 %705, %v647
        %v707 = vpop.permute.xlu0 %706
        %v709 = vmul.f32 %v697, %v691
        %v710 = vmul.f32 %v702, %v692
        %v711 = vmul.f32 %v707, %v693
        %v712 = vpack.c.bf16 %v669, %v667
        %v713 = vpack.c.bf16 %v671, %v671
        %v714 = vpack.c.bf16 %v566, %v561
        %v715 = vpack.c.bf16 %v574, %v569
        %v716 = vpack.c.bf16 %v582, %v577
        %v717 = vpack.c.bf16 %v590, %v585
        %v718 = vpack.c.bf16 %v598, %v593
        %v719 = vpack.c.bf16 %v606, %v601
        %v720 = vpack.c.bf16 %v614, %v609
        %v721 = vpack.c.bf16 %v622, %v617
        %722 = vmatprep.subr.bf16.mxu0 0
        %723 = vmatpush1.bf16.xpose.msra.mxu0 %v714
        %724 = vmatprep.subr.bf16.mxu0 0
        %725 = vmatpush1.bf16.xpose.msra.mxu0 %v715
        %726 = vmatprep.subr.bf16.mxu0 0
        %727 = vmatpush1.bf16.xpose.msra.mxu0 %v716
        %728 = vmatprep.subr.bf16.mxu0 0
        %729 = vmatpush1.bf16.xpose.msra.mxu0 %v717
        %730 = vmatprep.subr.bf16.mxu0 0
        %731 = vmatpush1.bf16.xpose.msra.mxu0 %v718
        %732 = vmatprep.subr.bf16.mxu0 0
        %733 = vmatpush1.bf16.xpose.msra.mxu0 %v719
        %734 = vmatprep.subr.bf16.mxu0 0
        %735 = vmatpush1.bf16.xpose.msra.mxu0 %v720
        %736 = vmatprep.subr.bf16.mxu0 0
        %737 = vmatpush1.bf16.xpose.msra.mxu0 %v721
        %738 = vmatprep.subr.bf16.mxu0 0
        %739 = vmatpush1.bf16.xpose.msra.mxu0 0
        %740 = vmatprep.subr.bf16.mxu0 0
        %741 = vmatpush1.bf16.xpose.msra.mxu0 0
        %742 = vmatprep.subr.bf16.mxu0 0
        %743 = vmatpush1.bf16.xpose.msra.mxu0 0
        %744 = vmatprep.subr.bf16.mxu0 0
        %745 = vmatpush1.bf16.xpose.msra.mxu0 0
        %746 = vmatprep.subr.bf16.mxu0 0
        %747 = vmatpush1.bf16.xpose.msra.mxu0 0
        %748 = vmatprep.subr.bf16.mxu0 0
        %749 = vmatpush1.bf16.xpose.msra.mxu0 0
        %750 = vmatprep.subr.bf16.mxu0 0
        %751 = vmatpush1.bf16.xpose.msra.mxu0 0
        %752 = vmatprep.subr.bf16.mxu0 0
        %753 = vmatpush1.bf16.xpose.msra.mxu0 0
        %754 = vmatprep.mubr.bf16.mxu0 0
        %755 = vmatmul.mubr.bf16.gmra.mrb[0].mxu0 %v712
        %v756 = vpop.f32.mrb[0].mxu0
        %v757 = vadd.f32 0.0, %v756
        %v758 = vpop.f32.mrb[0].mxu0
        %v759 = vpop.f32.mrb[0].mxu0
        %v760 = vadd.f32 0.0, %v759
        %v761 = vpop.f32.mrb[0].mxu0
        %762 = vmatprep.mubr.bf16.mxu0 0
        %763 = vmatmul.mubr.bf16.gmra.mrb[0].mxu0 %v713
        %v764 = vpop.f32.mrb[0].mxu0
        %v765 = vadd.f32 0.0, %v764
        %v766 = vpop.f32.mrb[0].mxu0
        %v767 = vpop.f32.mrb[0].mxu0
        %v768 = vpop.f32.mrb[0].mxu0
        %769 = vdwg.mxu0
        %v770 = vadd.f32 %v709, %v757
        %v771 = vadd.f32 %v710, %v760
        %v772 = vadd.f32 %v711, %v765
        %773 = vst [vmem:[#allocation4] sm:$0xff] %v770
        %774 = vst [vmem:[#allocation4 + $0x8] sm:$0xff] %v771
        %775 = vst [vmem:[#allocation4 + $0x10] sm:$0xff] %v772
        %776 = vst.msk [vmem:[#allocation2] sm:$0xff] %vm687, %v636
        %777 = vst.msk [vmem:[#allocation2 + $0x8] sm:$0xff] %vm687, %v637
        %778 = vst.msk [vmem:[#allocation2 + $0x10] sm:$0xff] %vm687, %v638
        %p779 = scmp.eq.s32.totalorder %s32, 1
        // Predicated region
        $region81: #{visual_transformer_forward.2} parent=47 // pred_check
          %p780 = pneg %p779
        $region82: #{visual_transformer_forward.2} parent=47 // pred_check_branch
          %782 = sbr.rel (%p780) target = $region84
        $region83: #{visual_transformer_forward.2} parent=47 // pred_region
          %v783 = vld [vmem:[#allocation4] sm:$0xff]
          %v784 = vld [vmem:[#allocation4 + $0x8] sm:$0xff]
          %v785 = vld [vmem:[#allocation4 + $0x10] sm:$0xff]
          %v786 = vld [vmem:[#allocation3] sm:$0xff]
          %v787 = vld [vmem:[#allocation3 + $0x8] sm:$0xff]
          %v788 = vld [vmem:[#allocation3 + $0x10] sm:$0xff]
          %v789 = vrcp.pop %v786
          %v790 = vrcp.pop %v787
          %v791 = vrcp.pop %v788
          %793 = vset.pattern.permute.xlu0 0
          %794 = vperm.xlu0 %793, %v789
          %v795 = vpop.permute.xlu0 %794
          %798 = vset.pattern.permute.xlu0 0
          %799 = vperm.xlu0 %798, %v790
          %v800 = vpop.permute.xlu0 %799
          %803 = vset.pattern.permute.xlu0 0
          %804 = vperm.xlu0 %803, %v791
          %v805 = vpop.permute.xlu0 %804
          %v807 = vmul.f32 %v783, %v795
          %v808 = vmul.f32 %v784, %v800
          %v809 = vmul.f32 %v785, %v805
          %v810 = vld [vmem:[#allocation10] sm:$0xf]
          %v811 = vld [vmem:[#allocation10 + $0x4] sm:$0xf]
          %v812 = vld [vmem:[#allocation10 + $0x8] sm:$0xf]
          %v813 = vld [vmem:[#allocation10 + $0xc] sm:$0xf]
          %v814 = vld [vmem:[#allocation10 + $0x10] sm:$0xf]
          %v815 = vld [vmem:[#allocation10 + $0x14] sm:$0xf]
          %v816 = vld [vmem:[#allocation10 + $0x18] sm:$0xf]
          %v817 = vld [vmem:[#allocation10 + $0x1c] sm:$0xf]
          %v818 = vld [vmem:[#allocation10 + $0x20] sm:$0xf]
          %v819 = vld [vmem:[#allocation10 + $0x24] sm:$0xf]
          %v820 = vld [vmem:[#allocation10 + $0x28] sm:$0xf]
          %v821 = vld [vmem:[#allocation10 + $0x2c] sm:$0xf]
          %v822 = vld [vmem:[#allocation10 + $0x30] sm:$0xf]
          %v823 = vld [vmem:[#allocation10 + $0x34] sm:$0xf]
          %v824 = vld [vmem:[#allocation10 + $0x38] sm:$0xf]
          %v825 = vld [vmem:[#allocation10 + $0x3c] sm:$0xf]
          %v826 = vld [vmem:[#allocation10 + $0x40] sm:$0xf]
          %v827 = vld [vmem:[#allocation10 + $0x44] sm:$0xf]
          %v828 = vld [vmem:[#allocation10 + $0x48] sm:$0xf]
          %v829 = vld [vmem:[#allocation10 + $0x4c] sm:$0xf]
          %v830 = vld [vmem:[#allocation10 + $0x50] sm:$0xf]
          %v831 = vld [vmem:[#allocation10 + $0x54] sm:$0xf]
          %v832 = vld [vmem:[#allocation10 + $0x58] sm:$0xf]
          %v833 = vld [vmem:[#allocation10 + $0x5c] sm:$0xf]
          %v834 = vld [vmem:[#allocation10 + $0x60] sm:$0xf]
          %v835 = vld [vmem:[#allocation10 + $0x64] sm:$0xf]
          %v836 = vld [vmem:[#allocation10 + $0x68] sm:$0xf]
          %v837 = vld [vmem:[#allocation10 + $0x6c] sm:$0xf]
          %v838 = vld [vmem:[#allocation10 + $0x70] sm:$0xf]
          %v839 = vld [vmem:[#allocation10 + $0x74] sm:$0xf]
          %v840 = vld [vmem:[#allocation10 + $0x78] sm:$0xf]
          %v841 = vld [vmem:[#allocation10 + $0x7c] sm:$0xf]
          %v842 = vld [vmem:[#allocation10 + $0x80] sm:$0xf]
          %v843 = vld [vmem:[#allocation10 + $0x84] sm:$0xf]
          %v844 = vld [vmem:[#allocation10 + $0x88] sm:$0xf]
          %v845 = vld [vmem:[#allocation10 + $0x8c] sm:$0xf]
          %v846 = vld [vmem:[#allocation10 + $0x90] sm:$0xf]
          %v847 = vld [vmem:[#allocation10 + $0x94] sm:$0xf]
          %v848 = vld [vmem:[#allocation10 + $0x98] sm:$0xf]
          %v849 = vld [vmem:[#allocation10 + $0x9c] sm:$0xf]
          %v850 = vld [vmem:[#allocation10 + $0xa0] sm:$0xf]
          %v851 = vld [vmem:[#allocation10 + $0xa4] sm:$0xf]
          %v852 = vld [vmem:[#allocation10 + $0xa8] sm:$0xf]
          %v853 = vld [vmem:[#allocation10 + $0xac] sm:$0xf]
          %v854 = vld [vmem:[#allocation10 + $0xb0] sm:$0xf]
          %v855 = vld [vmem:[#allocation10 + $0xb4] sm:$0xf]
          %v856 = vld [vmem:[#allocation10 + $0xb8] sm:$0xf]
          %v857 = vld [vmem:[#allocation10 + $0xbc] sm:$0xf]
          %v858 = vpack.c.bf16 %v808, %v807
          %v859 = vpack.c.bf16 %v809, %v809
          %v908 = vunpack.c.l.b16 %v810
          %v909 = vunpack.c.l.b16 %v811
          %v910 = vunpack.c.l.b16 %v812
          %v911 = vunpack.c.l.b16 %v813
          %v912 = vunpack.c.l.b16 %v814
          %v913 = vunpack.c.l.b16 %v815
          %v914 = vunpack.c.l.b16 %v816
          %v915 = vunpack.c.l.b16 %v817
          %v916 = vunpack.c.l.b16 %v818
          %v917 = vunpack.c.l.b16 %v819
          %v918 = vunpack.c.l.b16 %v820
          %v919 = vunpack.c.l.b16 %v821
          %v920 = vunpack.c.l.b16 %v822
          %v921 = vunpack.c.l.b16 %v823
          %v922 = vunpack.c.l.b16 %v824
          %v923 = vunpack.c.l.b16 %v825
          %v924 = vunpack.c.l.b16 %v826
          %v925 = vunpack.c.l.b16 %v827
          %v926 = vunpack.c.l.b16 %v828
          %v927 = vunpack.c.l.b16 %v829
          %v928 = vunpack.c.l.b16 %v830
          %v929 = vunpack.c.l.b16 %v831
          %v930 = vunpack.c.l.b16 %v832
          %v931 = vunpack.c.l.b16 %v833
          %v932 = vunpack.c.l.b16 %v834
          %v933 = vunpack.c.l.b16 %v835
          %v934 = vunpack.c.l.b16 %v836
          %v935 = vunpack.c.l.b16 %v837
          %v936 = vunpack.c.l.b16 %v838
          %v937 = vunpack.c.l.b16 %v839
          %v938 = vunpack.c.l.b16 %v840
          %v939 = vunpack.c.l.b16 %v841
          %v940 = vunpack.c.l.b16 %v842
          %v941 = vunpack.c.l.b16 %v843
          %v942 = vunpack.c.l.b16 %v844
          %v943 = vunpack.c.l.b16 %v845
          %v944 = vunpack.c.l.b16 %v846
          %v945 = vunpack.c.l.b16 %v847
          %v946 = vunpack.c.l.b16 %v848
          %v947 = vunpack.c.l.b16 %v849
          %v948 = vunpack.c.l.b16 %v850
          %v949 = vunpack.c.l.b16 %v851
          %v950 = vunpack.c.l.b16 %v852
          %v951 = vunpack.c.l.b16 %v853
          %v952 = vunpack.c.l.b16 %v854
          %v953 = vunpack.c.l.b16 %v855
          %v954 = vunpack.c.l.b16 %v856
          %v955 = vunpack.c.l.b16 %v857
          %v956 = vpack.c.b16 %v909, %v908
          %v957 = vpack.c.b16 %v911, %v910
          %v958 = vpack.c.b16 %v913, %v912
          %v959 = vpack.c.b16 %v915, %v914
          %v960 = vpack.c.b16 %v917, %v916
          %v961 = vpack.c.b16 %v919, %v918
          %v962 = vpack.c.b16 %v921, %v920
          %v963 = vpack.c.b16 %v923, %v922
          %v964 = vpack.c.b16 %v925, %v924
          %v965 = vpack.c.b16 %v927, %v926
          %v966 = vpack.c.b16 %v929, %v928
          %v967 = vpack.c.b16 %v931, %v930
          %v968 = vpack.c.b16 %v933, %v932
          %v969 = vpack.c.b16 %v935, %v934
          %v970 = vpack.c.b16 %v937, %v936
          %v971 = vpack.c.b16 %v939, %v938
          %v972 = vpack.c.b16 %v941, %v940
          %v973 = vpack.c.b16 %v943, %v942
          %v974 = vpack.c.b16 %v945, %v944
          %v975 = vpack.c.b16 %v947, %v946
          %v976 = vpack.c.b16 %v949, %v948
          %v977 = vpack.c.b16 %v951, %v950
          %v978 = vpack.c.b16 %v953, %v952
          %v979 = vpack.c.b16 %v955, %v954
          %1004 = vmatprep.subr.bf16.mxu0 0
          %1005 = vmatpush1.bf16.xpose.msra.mxu0 %v956
          %1006 = vmatprep.subr.bf16.mxu0 0
          %1007 = vmatpush1.bf16.xpose.msra.mxu0 %v957
          %1008 = vmatprep.subr.bf16.mxu0 0
          %1009 = vmatpush1.bf16.xpose.msra.mxu0 %v958
          %1010 = vmatprep.subr.bf16.mxu0 0
          %1011 = vmatpush1.bf16.xpose.msra.mxu0 %v959
          %1012 = vmatprep.subr.bf16.mxu0 0
          %1013 = vmatpush1.bf16.xpose.msra.mxu0 %v960
          %1014 = vmatprep.subr.bf16.mxu0 0
          %1015 = vmatpush1.bf16.xpose.msra.mxu0 %v961
          %1016 = vmatprep.subr.bf16.mxu0 0
          %1017 = vmatpush1.bf16.xpose.msra.mxu0 %v962
          %1018 = vmatprep.subr.bf16.mxu0 0
          %1019 = vmatpush1.bf16.xpose.msra.mxu0 %v963
          %1020 = vmatprep.subr.bf16.mxu0 0
          %1021 = vmatpush1.bf16.xpose.msra.mxu0 %v964
          %1022 = vmatprep.subr.bf16.mxu0 0
          %1023 = vmatpush1.bf16.xpose.msra.mxu0 %v965
          %1024 = vmatprep.subr.bf16.mxu0 0
          %1025 = vmatpush1.bf16.xpose.msra.mxu0 %v966
          %1026 = vmatprep.subr.bf16.mxu0 0
          %1027 = vmatpush1.bf16.xpose.msra.mxu0 %v967
          %1028 = vmatprep.subr.bf16.mxu0 0
          %1029 = vmatpush1.bf16.xpose.msra.mxu0 %v968
          %1030 = vmatprep.subr.bf16.mxu0 0
          %1031 = vmatpush1.bf16.xpose.msra.mxu0 %v969
          %1032 = vmatprep.subr.bf16.mxu0 0
          %1033 = vmatpush1.bf16.xpose.msra.mxu0 %v970
          %1034 = vmatprep.subr.bf16.mxu0 0
          %1035 = vmatpush1.bf16.xpose.msra.mxu0 %v971
          %1036 = vmatprep.mubr.bf16.mxu0 0
          %1037 = vmatmul.mubr.bf16.gmra.mrb[0].mxu0 %v858
          %v1038 = vpop.f32.mrb[0].mxu0
          %v1039 = vadd.f32 0.0, %v1038
          %v1040 = vpop.f32.mrb[0].mxu0
          %v1041 = vadd.f32 0.0, %v1040
          %v1042 = vpop.f32.mrb[0].mxu0
          %v1043 = vadd.f32 0.0, %v1042
          %v1044 = vpop.f32.mrb[0].mxu0
          %v1045 = vadd.f32 0.0, %v1044
          %1046 = vmatprep.mubr.bf16.mxu0 0
          %1047 = vmatmul.mubr.bf16.gmra.mrb[0].mxu0 %v859
          %v1048 = vpop.f32.mrb[0].mxu0
          %v1049 = vadd.f32 0.0, %v1048
          %v1050 = vpop.f32.mrb[0].mxu0
          %v1051 = vadd.f32 0.0, %v1050
          %v1052 = vpop.f32.mrb[0].mxu0
          %v1053 = vpop.f32.mrb[0].mxu0
          %1054 = vdwg.mxu0
          %1055 = vmatprep.subr.bf16.mxu0 0
          %1056 = vmatpush1.bf16.xpose.msra.mxu0 %v972
          %1057 = vmatprep.subr.bf16.mxu0 0
          %1058 = vmatpush1.bf16.xpose.msra.mxu0 %v973
          %1059 = vmatprep.subr.bf16.mxu0 0
          %1060 = vmatpush1.bf16.xpose.msra.mxu0 %v974
          %1061 = vmatprep.subr.bf16.mxu0 0
          %1062 = vmatpush1.bf16.xpose.msra.mxu0 %v975
          %1063 = vmatprep.subr.bf16.mxu0 0
          %1064 = vmatpush1.bf16.xpose.msra.mxu0 %v976
          %1065 = vmatprep.subr.bf16.mxu0 0
          %1066 = vmatpush1.bf16.xpose.msra.mxu0 %v977
          %1067 = vmatprep.subr.bf16.mxu0 0
          %1068 = vmatpush1.bf16.xpose.msra.mxu0 %v978
          %1069 = vmatprep.subr.bf16.mxu0 0
          %1070 = vmatpush1.bf16.xpose.msra.mxu0 %v979
          %1071 = vmatprep.subr.bf16.mxu0 0
          %1072 = vmatpush1.bf16.xpose.msra.mxu0 0
          %1073 = vmatprep.subr.bf16.mxu0 0
          %1074 = vmatpush1.bf16.xpose.msra.mxu0 0
          %1075 = vmatprep.subr.bf16.mxu0 0
          %1076 = vmatpush1.bf16.xpose.msra.mxu0 0
          %1077 = vmatprep.subr.bf16.mxu0 0
          %1078 = vmatpush1.bf16.xpose.msra.mxu0 0
          %1079 = vmatprep.subr.bf16.mxu0 0
          %1080 = vmatpush1.bf16.xpose.msra.mxu0 0
          %1081 = vmatprep.subr.bf16.mxu0 0
          %1082 = vmatpush1.bf16.xpose.msra.mxu0 0
          %1083 = vmatprep.subr.bf16.mxu0 0
          %1084 = vmatpush1.bf16.xpose.msra.mxu0 0
          %1085 = vmatprep.subr.bf16.mxu0 0
          %1086 = vmatpush1.bf16.xpose.msra.mxu0 0
          %1087 = vmatprep.mubr.bf16.mxu0 0
          %1088 = vmatmul.mubr.bf16.gmra.mrb[0].mxu0 %v858
          %v1089 = vpop.f32.mrb[0].mxu0
          %v1090 = vadd.f32 0.0, %v1089
          %v1091 = vpop.f32.mrb[0].mxu0
          %v1092 = vpop.f32.mrb[0].mxu0
          %v1093 = vadd.f32 0.0, %v1092
          %v1094 = vpop.f32.mrb[0].mxu0
          %1095 = vmatprep.mubr.bf16.mxu0 0
          %1096 = vmatmul.mubr.bf16.gmra.mrb[0].mxu0 %v859
          %v1097 = vpop.f32.mrb[0].mxu0
          %v1098 = vadd.f32 0.0, %v1097
          %v1099 = vpop.f32.mrb[0].mxu0
          %v1100 = vpop.f32.mrb[0].mxu0
          %v1101 = vpop.f32.mrb[0].mxu0
          %1102 = vdwg.mxu0
          %1103 = vmatprep.subr.mxu0 0.0
          %1104 = vmatpush1.xpose.msra.mxu0 %v1039
          %1105 = vmatprep.subr.mxu0 0.0
          %1106 = vmatpush1.xpose.msra.mxu0 %v1043
          %1107 = vmatprep.subr.mxu0 0.0
          %1108 = vmatpush1.xpose.msra.mxu0 %v1049
          %1109 = vmatprep.subr.mxu0 0.0
          %1110 = vmatpush1.xpose.msra.mxu0 0.0
          %1111 = vmatprep.subr.mxu0 0.0
          %1112 = vmatpush1.xpose.msra.mxu0 0.0
          %1113 = vmatprep.subr.mxu0 0.0
          %1114 = vmatpush1.xpose.msra.mxu0 0.0
          %1115 = vmatprep.subr.mxu0 0.0
          %1116 = vmatpush1.xpose.msra.mxu0 0.0
          %1117 = vmatprep.subr.mxu0 0.0
          %1118 = vmatpush1.xpose.msra.mxu0 0.0
          %1119 = vmatprep.subr.mxu0 0.0
          %1120 = vmatpush1.xpose.msra.mxu0 0.0
          %1121 = vmatprep.subr.mxu0 0.0
          %1122 = vmatpush1.xpose.msra.mxu0 0.0
          %1123 = vmatprep.subr.mxu0 0.0
          %1124 = vmatpush1.xpose.msra.mxu0 0.0
          %1125 = vmatprep.subr.mxu0 0.0
          %1126 = vmatpush1.xpose.msra.mxu0 0.0
          %1127 = vmatprep.subr.mxu0 0.0
          %1128 = vmatpush1.xpose.msra.mxu0 0.0
          %1129 = vmatprep.subr.mxu0 0.0
          %1130 = vmatpush1.xpose.msra.mxu0 0.0
          %1131 = vmatprep.subr.mxu0 0.0
          %1132 = vmatpush1.xpose.msra.mxu0 0.0
          %1133 = vmatprep.subr.mxu0 0.0
          %1134 = vmatpush1.xpose.msra.mxu0 0.0
          %1135 = vmatprep.subr.mxu0 0.0
          %1136 = vmatpush1.xpose.msra.mxu0 0.0
          %1137 = vmatprep.subr.mxu0 0.0
          %1138 = vmatpush1.xpose.msra.mxu0 0.0
          %1139 = vmatprep.subr.mxu0 0.0
          %1140 = vmatpush1.xpose.msra.mxu0 0.0
          %1141 = vmatprep.subr.mxu0 0.0
          %1142 = vmatpush1.xpose.msra.mxu0 0.0
          %1143 = vmatprep.subr.mxu0 0.0
          %1144 = vmatpush1.xpose.msra.mxu0 0.0
          %1145 = vmatprep.subr.mxu0 0.0
          %1146 = vmatpush1.xpose.msra.mxu0 0.0
          %1147 = vmatprep.subr.mxu0 0.0
          %1148 = vmatpush1.xpose.msra.mxu0 0.0
          %1149 = vmatprep.subr.mxu0 0.0
          %1150 = vmatpush1.xpose.msra.mxu0 0.0
          %1151 = vmatprep.subr.mxu0 0.0
          %1152 = vmatpush1.xpose.msra.mxu0 0.0
          %1153 = vmatprep.subr.mxu0 0.0
          %1154 = vmatpush1.xpose.msra.mxu0 0.0
          %1155 = vmatprep.subr.mxu0 0.0
          %1156 = vmatpush1.xpose.msra.mxu0 0.0
          %1157 = vmatprep.subr.mxu0 0.0
          %1158 = vmatpush1.xpose.msra.mxu0 0.0
          %1159 = vmatprep.subr.mxu0 0.0
          %1160 = vmatpush1.xpose.msra.mxu0 0.0
          %1161 = vmatprep.subr.mxu0 0.0
          %1162 = vmatpush1.xpose.msra.mxu0 0.0
          %1163 = vmatprep.subr.mxu0 0.0
          %1164 = vmatpush1.xpose.msra.mxu0 0.0
          %1165 = vmatprep.subr.mxu0 0.0
          %1166 = vmatpush1.xpose.msra.mxu0 0.0
          %1167 = vmatprep.mubr.f32.mxu0 0.0
          %1168 = vmatmul.mubr.f32.gmra.mrb[0].mxu0 %v1041
          %v1169 = vpop.f32.mrb[0].mxu0
          %v1170 = vadd.f32 0.0, %v1169
          %v1171 = vpop.f32.mrb[0].mxu0
          %1172 = vmatprep.mubr.f32.mxu0 0.0
          %1173 = vmatmul.mubr.f32.gmra.mrb[0].mxu0 %v1045
          %v1174 = vpop.f32.mrb[0].mxu0
          %v1175 = vadd.f32 0.0, %v1174
          %v1176 = vpop.f32.mrb[0].mxu0
          %1177 = vmatprep.mubr.f32.mxu0 0.0
          %1178 = vmatmul.mubr.f32.gmra.mrb[0].mxu0 %v1051
          %v1179 = vpop.f32.mrb[0].mxu0
          %v1180 = vadd.f32 0.0, %v1179
          %v1181 = vpop.f32.mrb[0].mxu0
          %1182 = vdwg.mxu0
          %vm1183 = vcmask 195584
          %v1184 = vsel %vm1183, %v1170, -inf
          %1185 = vmax.xlane.f32.xlu0 %v1184
          %v1186 = vpop.xlane.xlu0 %1185
          %v1187 = vsel %vm1183, %v1175, -inf
          %1188 = vmax.xlane.f32.xlu0 %v1187
          %v1189 = vpop.xlane.xlu0 %1188
          %v1190 = vsel %vm1183, %v1180, -inf
          %1191 = vmax.xlane.f32.xlu0 %v1190
          %v1192 = vpop.xlane.xlu0 %1191
          %v1193 = vsub.f32 %v1170, %v1186
          %v1194 = vsub.f32 %v1175, %v1189
          %v1195 = vsub.f32 %v1180, %v1192
          %v1196 = vmul.f32 %v1193, 1.442695
          %v1197 = vpow.pop %v1196
          %v1198 = vmul.f32 %v1194, 1.442695
          %v1199 = vpow.pop %v1198
          %v1200 = vmul.f32 %v1195, 1.442695
          %v1201 = vpow.pop %v1200
          %v1202 = vsel %vm1183, %v1197, 0.0
          %1203 = vadd.xlane.f32.xlu0 %v1202
          %v1204 = vpop.xlane.xlu0 %1203
          %v1205 = vsel %vm1183, %v1199, 0.0
          %1206 = vadd.xlane.f32.xlu0 %v1205
          %v1207 = vpop.xlane.xlu0 %1206
          %v1208 = vsel %vm1183, %v1201, 0.0
          %1209 = vadd.xlane.f32.xlu0 %v1208
          %v1210 = vpop.xlane.xlu0 %1209
          %v1211 = vrcp.pop %v1204
          %v1212 = vrcp.pop %v1207
          %v1213 = vrcp.pop %v1210
          %v1214 = vmul.f32 %v1197, %v1211
          %v1215 = vmul.f32 %v1199, %v1212
          %v1216 = vmul.f32 %v1201, %v1213
          %v1218 = vsel %vm1183, %v1214, 0
          %v1221 = vsel %vm1183, %v1215, 0
          %v1224 = vsel %vm1183, %v1216, 0
          %1226 = vmatprep.subr.mxu0 0.0
          %1227 = vmatpush1.msra.mxu0 %v1090
          %1228 = vmatprep.subr.mxu0 0.0
          %1229 = vmatpush1.msra.mxu0 %v1093
          %1230 = vmatprep.subr.mxu0 0.0
          %1231 = vmatpush1.msra.mxu0 %v1098
          %1232 = vmatprep.subr.mxu0 0.0
          %1233 = vmatpush1.msra.mxu0 0.0
          %1234 = vmatprep.subr.mxu0 0.0
          %1235 = vmatpush1.msra.mxu0 0.0
          %1236 = vmatprep.subr.mxu0 0.0
          %1237 = vmatpush1.msra.mxu0 0.0
          %1238 = vmatprep.subr.mxu0 0.0
          %1239 = vmatpush1.msra.mxu0 0.0
          %1240 = vmatprep.subr.mxu0 0.0
          %1241 = vmatpush1.msra.mxu0 0.0
          %1242 = vmatprep.subr.mxu0 0.0
          %1243 = vmatpush1.msra.mxu0 0.0
          %1244 = vmatprep.subr.mxu0 0.0
          %1245 = vmatpush1.msra.mxu0 0.0
          %1246 = vmatprep.subr.mxu0 0.0
          %1247 = vmatpush1.msra.mxu0 0.0
          %1248 = vmatprep.subr.mxu0 0.0
          %1249 = vmatpush1.msra.mxu0 0.0
          %1250 = vmatprep.subr.mxu0 0.0
          %1251 = vmatpush1.msra.mxu0 0.0
          %1252 = vmatprep.subr.mxu0 0.0
          %1253 = vmatpush1.msra.mxu0 0.0
          %1254 = vmatprep.subr.mxu0 0.0
          %1255 = vmatpush1.msra.mxu0 0.0
          %1256 = vmatprep.subr.mxu0 0.0
          %1257 = vmatpush1.msra.mxu0 0.0
          %1258 = vmatprep.subr.mxu0 0.0
          %1259 = vmatpush1.msra.mxu0 0.0
          %1260 = vmatprep.subr.mxu0 0.0
          %1261 = vmatpush1.msra.mxu0 0.0
          %1262 = vmatprep.subr.mxu0 0.0
          %1263 = vmatpush1.msra.mxu0 0.0
          %1264 = vmatprep.subr.mxu0 0.0
          %1265 = vmatpush1.msra.mxu0 0.0
          %1266 = vmatprep.subr.mxu0 0.0
          %1267 = vmatpush1.msra.mxu0 0.0
          %1268 = vmatprep.subr.mxu0 0.0
          %1269 = vmatpush1.msra.mxu0 0.0
          %1270 = vmatprep.subr.mxu0 0.0
          %1271 = vmatpush1.msra.mxu0 0.0
          %1272 = vmatprep.subr.mxu0 0.0
          %1273 = vmatpush1.msra.mxu0 0.0
          %1274 = vmatprep.subr.mxu0 0.0
          %1275 = vmatpush1.msra.mxu0 0.0
          %1276 = vmatprep.subr.mxu0 0.0
          %1277 = vmatpush1.msra.mxu0 0.0
          %1278 = vmatprep.subr.mxu0 0.0
          %1279 = vmatpush1.msra.mxu0 0.0
          %1280 = vmatprep.subr.mxu0 0.0
          %1281 = vmatpush1.msra.mxu0 0.0
          %1282 = vmatprep.subr.mxu0 0.0
          %1283 = vmatpush1.msra.mxu0 0.0
          %1284 = vmatprep.subr.mxu0 0.0
          %1285 = vmatpush1.msra.mxu0 0.0
          %1286 = vmatprep.subr.mxu0 0.0
          %1287 = vmatpush1.msra.mxu0 0.0
          %1288 = vmatprep.subr.mxu0 0.0
          %1289 = vmatpush1.msra.mxu0 0.0
          %1290 = vmatprep.mubr.f32.mxu0 0.0
          %1291 = vmatmul.mubr.f32.gmra.mrb[0].mxu0 %v1218
          %v1292 = vpop.f32.mrb[0].mxu0
          %v1293 = vadd.f32 0.0, %v1292
          %v1294 = vpop.f32.mrb[0].mxu0
          %1295 = vmatprep.mubr.f32.mxu0 0.0
          %1296 = vmatmul.mubr.f32.gmra.mrb[0].mxu0 %v1221
          %v1297 = vpop.f32.mrb[0].mxu0
          %v1298 = vadd.f32 0.0, %v1297
          %v1299 = vpop.f32.mrb[0].mxu0
          %1300 = vmatprep.mubr.f32.mxu0 0.0
          %1301 = vmatmul.mubr.f32.gmra.mrb[0].mxu0 %v1224
          %v1302 = vpop.f32.mrb[0].mxu0
          %v1303 = vadd.f32 0.0, %v1302
          %v1304 = vpop.f32.mrb[0].mxu0
          %1305 = vdwg.mxu0
          %v1306 = vadd.f32 %v807, %v1293
          %v1307 = vadd.f32 %v808, %v1298
          %v1308 = vadd.f32 %v809, %v1303
          %v1309 = vld [vmem:[#allocation14] sm:$0xff]
          %v1310 = vld [vmem:[#allocation14 + $0x8] sm:$0xff]
          %v1311 = vld [vmem:[#allocation14 + $0x10] sm:$0xff]
          %v1312 = vld [vmem:[#allocation16] sm:$0xff]
          %v1313 = vld [vmem:[#allocation16 + $0x8] sm:$0xff]
          %v1314 = vld [vmem:[#allocation16 + $0x10] sm:$0xff]
          %v1315 = vadd.f32 %v1306, %v1307
          %v1316 = vadd.f32 %v1315, %v1308
          %1317 = vadd.xlane.f32.xlu0 %v1316
          %v1318 = vpop.xlane.xlu0 %1317
          %v1319 = vrot.slane %v1318, 4
          %v1320 = vadd.f32 %v1318, %v1319
          %v1321 = vrot.slane %v1320, 2
          %v1322 = vadd.f32 %v1320, %v1321
          %v1323 = vrot.slane %v1322, 1
          %v1324 = vadd.f32 %v1322, %v1323
          %s1325 = vtos %v1324
          %v1326 = vrcp.pop 3072.0
          %s1327 = vtos %v1326
          %s1328 = smul.f32 %s1325, %s1327
          %v1329 = vstv %s1328
          %v1330 = vsub.f32 %v1306, %v1329
          %v1331 = vsub.f32 %v1307, %v1329
          %v1332 = vsub.f32 %v1308, %v1329
          %v1333 = vmul.f32 %v1330, %v1330
          %v1334 = vmul.f32 %v1331, %v1331
          %v1335 = vmul.f32 %v1332, %v1332
          %v1336 = vadd.f32 %v1333, %v1334
          %v1337 = vadd.f32 %v1336, %v1335
          %1338 = vadd.xlane.f32.xlu0 %v1337
          %v1339 = vpop.xlane.xlu0 %1338
          %v1340 = vrot.slane %v1339, 4
          %v1341 = vadd.f32 %v1339, %v1340
          %v1342 = vrot.slane %v1341, 2
          %v1343 = vadd.f32 %v1341, %v1342
          %v1344 = vrot.slane %v1343, 1
          %v1345 = vadd.f32 %v1343, %v1344
          %s1346 = vtos %v1345
          %v1347 = vrcp.pop 3072.0
          %s1348 = vtos %v1347
          %s1349 = smul.f32 %s1346, %s1348
          %s1350 = sadd.f32 %s1349, 1e-05
          %v1351 = vstv %s1350
          %v1352 = vrsqrt.pop %v1351
          %s1353 = vtos %v1352
          %v1354 = vstv %s1353
          %v1355 = vmul.f32 %v1330, %v1354
          %v1356 = vmul.f32 %v1331, %v1354
          %v1357 = vmul.f32 %v1332, %v1354
          %v1358 = vmul.f32 %v1355, %v1309
          %v1359 = vmul.f32 %v1356, %v1310
          %v1360 = vmul.f32 %v1357, %v1311
          %v1361 = vadd.f32 %v1358, %v1312
          %v1362 = vadd.f32 %v1359, %v1313
          %v1363 = vadd.f32 %v1360, %v1314
          %v1364 = vld [vmem:[#allocation11] sm:$0xf]
          %v1365 = vld [vmem:[#allocation11 + $0x4] sm:$0xf]
          %v1366 = vld [vmem:[#allocation11 + $0x8] sm:$0xf]
          %v1367 = vld [vmem:[#allocation11 + $0xc] sm:$0xf]
          %v1368 = vld [vmem:[#allocation11 + $0x10] sm:$0xf]
          %v1369 = vld [vmem:[#allocation11 + $0x14] sm:$0xf]
          %v1370 = vld [vmem:[#allocation11 + $0x18] sm:$0xf]
          %v1371 = vld [vmem:[#allocation11 + $0x1c] sm:$0xf]
          %v1372 = vld [vmem:[#allocation11 + $0x20] sm:$0xf]
          %v1373 = vld [vmem:[#allocation11 + $0x24] sm:$0xf]
          %v1374 = vld [vmem:[#allocation11 + $0x28] sm:$0xf]
          %v1375 = vld [vmem:[#allocation11 + $0x2c] sm:$0xf]
          %v1376 = vld [vmem:[#allocation11 + $0x30] sm:$0xf]
          %v1377 = vld [vmem:[#allocation11 + $0x34] sm:$0xf]
          %v1378 = vld [vmem:[#allocation11 + $0x38] sm:$0xf]
          %v1379 = vld [vmem:[#allocation11 + $0x3c] sm:$0xf]
          %v1380 = vpack.c.bf16 %v1362, %v1361
          %v1381 = vpack.c.bf16 %v1363, %v1363
          %v1398 = vunpack.c.l.b16 %v1364
          %v1399 = vunpack.c.l.b16 %v1365
          %v1400 = vunpack.c.l.b16 %v1366
          %v1401 = vunpack.c.l.b16 %v1367
          %v1402 = vunpack.c.l.b16 %v1368
          %v1403 = vunpack.c.l.b16 %v1369
          %v1404 = vunpack.c.l.b16 %v1370
          %v1405 = vunpack.c.l.b16 %v1371
          %v1406 = vunpack.c.l.b16 %v1372
          %v1407 = vunpack.c.l.b16 %v1373
          %v1408 = vunpack.c.l.b16 %v1374
          %v1409 = vunpack.c.l.b16 %v1375
          %v1410 = vunpack.c.l.b16 %v1376
          %v1411 = vunpack.c.l.b16 %v1377
          %v1412 = vunpack.c.l.b16 %v1378
          %v1413 = vunpack.c.l.b16 %v1379
          %v1414 = vpack.c.b16 %v1399, %v1398
          %v1415 = vpack.c.b16 %v1401, %v1400
          %v1416 = vpack.c.b16 %v1403, %v1402
          %v1417 = vpack.c.b16 %v1405, %v1404
          %v1418 = vpack.c.b16 %v1407, %v1406
          %v1419 = vpack.c.b16 %v1409, %v1408
          %v1420 = vpack.c.b16 %v1411, %v1410
          %v1421 = vpack.c.b16 %v1413, %v1412
          %1430 = vmatprep.subr.bf16.mxu0 0
          %1431 = vmatpush1.bf16.xpose.msra.mxu0 %v1414
          %1432 = vmatprep.subr.bf16.mxu0 0
          %1433 = vmatpush1.bf16.xpose.msra.mxu0 %v1415
          %1434 = vmatprep.subr.bf16.mxu0 0
          %1435 = vmatpush1.bf16.xpose.msra.mxu0 %v1416
          %1436 = vmatprep.subr.bf16.mxu0 0
          %1437 = vmatpush1.bf16.xpose.msra.mxu0 %v1417
          %1438 = vmatprep.subr.bf16.mxu0 0
          %1439 = vmatpush1.bf16.xpose.msra.mxu0 %v1418
          %1440 = vmatprep.subr.bf16.mxu0 0
          %1441 = vmatpush1.bf16.xpose.msra.mxu0 %v1419
          %1442 = vmatprep.subr.bf16.mxu0 0
          %1443 = vmatpush1.bf16.xpose.msra.mxu0 %v1420
          %1444 = vmatprep.subr.bf16.mxu0 0
          %1445 = vmatpush1.bf16.xpose.msra.mxu0 %v1421
          %1446 = vmatprep.subr.bf16.mxu0 0
          %1447 = vmatpush1.bf16.xpose.msra.mxu0 0
          %1448 = vmatprep.subr.bf16.mxu0 0
          %1449 = vmatpush1.bf16.xpose.msra.mxu0 0
          %1450 = vmatprep.subr.bf16.mxu0 0
          %1451 = vmatpush1.bf16.xpose.msra.mxu0 0
          %1452 = vmatprep.subr.bf16.mxu0 0
          %1453 = vmatpush1.bf16.xpose.msra.mxu0 0
          %1454 = vmatprep.subr.bf16.mxu0 0
          %1455 = vmatpush1.bf16.xpose.msra.mxu0 0
          %1456 = vmatprep.subr.bf16.mxu0 0
          %1457 = vmatpush1.bf16.xpose.msra.mxu0 0
          %1458 = vmatprep.subr.bf16.mxu0 0
          %1459 = vmatpush1.bf16.xpose.msra.mxu0 0
          %1460 = vmatprep.subr.bf16.mxu0 0
          %1461 = vmatpush1.bf16.xpose.msra.mxu0 0
          %1462 = vmatprep.mubr.bf16.mxu0 0
          %1463 = vmatmul.mubr.bf16.gmra.mrb[0].mxu0 %v1380
          %v1464 = vpop.f32.mrb[0].mxu0
          %v1465 = vadd.f32 0.0, %v1464
          %v1466 = vpop.f32.mrb[0].mxu0
          %v1467 = vpop.f32.mrb[0].mxu0
          %v1468 = vadd.f32 0.0, %v1467
          %v1469 = vpop.f32.mrb[0].mxu0
          %1470 = vmatprep.mubr.bf16.mxu0 0
          %1471 = vmatmul.mubr.bf16.gmra.mrb[0].mxu0 %v1381
          %v1472 = vpop.f32.mrb[0].mxu0
          %v1473 = vadd.f32 0.0, %v1472
          %v1474 = vpop.f32.mrb[0].mxu0
          %v1475 = vpop.f32.mrb[0].mxu0
          %v1476 = vpop.f32.mrb[0].mxu0
          %1477 = vdwg.mxu0
          %v1478 = vmax.f32 %v1465, 0.0
          %v1479 = vmax.f32 %v1468, 0.0
          %v1480 = vmax.f32 %v1473, 0.0
          %v1481 = vld [vmem:[#allocation13] sm:$0xf]
          %v1482 = vld [vmem:[#allocation13 + $0x4] sm:$0xf]
          %v1483 = vld [vmem:[#allocation13 + $0x8] sm:$0xf]
          %v1484 = vld [vmem:[#allocation13 + $0xc] sm:$0xf]
          %v1485 = vld [vmem:[#allocation13 + $0x10] sm:$0xf]
          %v1486 = vld [vmem:[#allocation13 + $0x14] sm:$0xf]
          %v1487 = vld [vmem:[#allocation13 + $0x18] sm:$0xf]
          %v1488 = vld [vmem:[#allocation13 + $0x1c] sm:$0xf]
          %v1489 = vld [vmem:[#allocation13 + $0x20] sm:$0xf]
          %v1490 = vld [vmem:[#allocation13 + $0x24] sm:$0xf]
          %v1491 = vld [vmem:[#allocation13 + $0x28] sm:$0xf]
          %v1492 = vld [vmem:[#allocation13 + $0x2c] sm:$0xf]
          %v1493 = vld [vmem:[#allocation13 + $0x30] sm:$0xf]
          %v1494 = vld [vmem:[#allocation13 + $0x34] sm:$0xf]
          %v1495 = vld [vmem:[#allocation13 + $0x38] sm:$0xf]
          %v1496 = vld [vmem:[#allocation13 + $0x3c] sm:$0xf]
          %v1497 = vpack.c.bf16 %v1479, %v1478
          %v1498 = vpack.c.bf16 %v1480, %v1480
          %v1515 = vunpack.c.l.b16 %v1481
          %v1516 = vunpack.c.l.b16 %v1482
          %v1517 = vunpack.c.l.b16 %v1483
          %v1518 = vunpack.c.l.b16 %v1484
          %v1519 = vunpack.c.l.b16 %v1485
          %v1520 = vunpack.c.l.b16 %v1486
          %v1521 = vunpack.c.l.b16 %v1487
          %v1522 = vunpack.c.l.b16 %v1488
          %v1523 = vunpack.c.l.b16 %v1489
          %v1524 = vunpack.c.l.b16 %v1490
          %v1525 = vunpack.c.l.b16 %v1491
          %v1526 = vunpack.c.l.b16 %v1492
          %v1527 = vunpack.c.l.b16 %v1493
          %v1528 = vunpack.c.l.b16 %v1494
          %v1529 = vunpack.c.l.b16 %v1495
          %v1530 = vunpack.c.l.b16 %v1496
          %v1531 = vpack.c.b16 %v1516, %v1515
          %v1532 = vpack.c.b16 %v1518, %v1517
          %v1533 = vpack.c.b16 %v1520, %v1519
          %v1534 = vpack.c.b16 %v1522, %v1521
          %v1535 = vpack.c.b16 %v1524, %v1523
          %v1536 = vpack.c.b16 %v1526, %v1525
          %v1537 = vpack.c.b16 %v1528, %v1527
          %v1538 = vpack.c.b16 %v1530, %v1529
          %1547 = vmatprep.subr.bf16.mxu0 0
          %1548 = vmatpush1.bf16.xpose.msra.mxu0 %v1531
          %1549 = vmatprep.subr.bf16.mxu0 0
          %1550 = vmatpush1.bf16.xpose.msra.mxu0 %v1532
          %1551 = vmatprep.subr.bf16.mxu0 0
          %1552 = vmatpush1.bf16.xpose.msra.mxu0 %v1533
          %1553 = vmatprep.subr.bf16.mxu0 0
          %1554 = vmatpush1.bf16.xpose.msra.mxu0 %v1534
          %1555 = vmatprep.subr.bf16.mxu0 0
          %1556 = vmatpush1.bf16.xpose.msra.mxu0 %v1535
          %1557 = vmatprep.subr.bf16.mxu0 0
          %1558 = vmatpush1.bf16.xpose.msra.mxu0 %v1536
          %1559 = vmatprep.subr.bf16.mxu0 0
          %1560 = vmatpush1.bf16.xpose.msra.mxu0 %v1537
          %1561 = vmatprep.subr.bf16.mxu0 0
          %1562 = vmatpush1.bf16.xpose.msra.mxu0 %v1538
          %1563 = vmatprep.subr.bf16.mxu0 0
          %1564 = vmatpush1.bf16.xpose.msra.mxu0 0
          %1565 = vmatprep.subr.bf16.mxu0 0
          %1566 = vmatpush1.bf16.xpose.msra.mxu0 0
          %1567 = vmatprep.subr.bf16.mxu0 0
          %1568 = vmatpush1.bf16.xpose.msra.mxu0 0
          %1569 = vmatprep.subr.bf16.mxu0 0
          %1570 = vmatpush1.bf16.xpose.msra.mxu0 0
          %1571 = vmatprep.subr.bf16.mxu0 0
          %1572 = vmatpush1.bf16.xpose.msra.mxu0 0
          %1573 = vmatprep.subr.bf16.mxu0 0
          %1574 = vmatpush1.bf16.xpose.msra.mxu0 0
          %1575 = vmatprep.subr.bf16.mxu0 0
          %1576 = vmatpush1.bf16.xpose.msra.mxu0 0
          %1577 = vmatprep.subr.bf16.mxu0 0
          %1578 = vmatpush1.bf16.xpose.msra.mxu0 0
          %1579 = vmatprep.mubr.bf16.mxu0 0
          %1580 = vmatmul.mubr.bf16.gmra.mrb[0].mxu0 %v1497
          %v1581 = vpop.f32.mrb[0].mxu0
          %v1582 = vadd.f32 0.0, %v1581
          %v1583 = vpop.f32.mrb[0].mxu0
          %v1584 = vpop.f32.mrb[0].mxu0
          %v1585 = vadd.f32 0.0, %v1584
          %v1586 = vpop.f32.mrb[0].mxu0
          %1587 = vmatprep.mubr.bf16.mxu0 0
          %1588 = vmatmul.mubr.bf16.gmra.mrb[0].mxu0 %v1498
          %v1589 = vpop.f32.mrb[0].mxu0
          %v1590 = vadd.f32 0.0, %v1589
          %v1591 = vpop.f32.mrb[0].mxu0
          %v1592 = vpop.f32.mrb[0].mxu0
          %v1593 = vpop.f32.mrb[0].mxu0
          %1594 = vdwg.mxu0
          %v1595 = vadd.f32 %v1361, %v1582
          %v1596 = vadd.f32 %v1362, %v1585
          %v1597 = vadd.f32 %v1363, %v1590
          %v1598 = vadd.f32 %v1595, %v1596
          %v1599 = vadd.f32 %v1598, %v1597
          %1600 = vadd.xlane.f32.xlu0 %v1599
          %v1601 = vpop.xlane.xlu0 %1600
          %v1602 = vrot.slane %v1601, 4
          %v1603 = vadd.f32 %v1601, %v1602
          %v1604 = vrot.slane %v1603, 2
          %v1605 = vadd.f32 %v1603, %v1604
          %v1606 = vrot.slane %v1605, 1
          %v1607 = vadd.f32 %v1605, %v1606
          %s1608 = vtos %v1607
          %v1609 = vrcp.pop 3072.0
          %s1610 = vtos %v1609
          %s1611 = smul.f32 %s1608, %s1610
          %v1612 = vstv %s1611
          %v1613 = vsub.f32 %v1595, %v1612
          %v1614 = vsub.f32 %v1596, %v1612
          %v1615 = vsub.f32 %v1597, %v1612
          %v1616 = vmul.f32 %v1613, %v1613
          %v1617 = vmul.f32 %v1614, %v1614
          %v1618 = vmul.f32 %v1615, %v1615
          %v1619 = vadd.f32 %v1616, %v1617
          %v1620 = vadd.f32 %v1619, %v1618
          %1621 = vadd.xlane.f32.xlu0 %v1620
          %v1622 = vpop.xlane.xlu0 %1621
          %v1623 = vrot.slane %v1622, 4
          %v1624 = vadd.f32 %v1622, %v1623
          %v1625 = vrot.slane %v1624, 2
          %v1626 = vadd.f32 %v1624, %v1625
          %v1627 = vrot.slane %v1626, 1
          %v1628 = vadd.f32 %v1626, %v1627
          %s1629 = vtos %v1628
          %v1630 = vrcp.pop 3072.0
          %s1631 = vtos %v1630
          %s1632 = smul.f32 %s1629, %s1631
          %s1633 = sadd.f32 %s1632, 1e-05
          %v1634 = vstv %s1633
          %v1635 = vrsqrt.pop %v1634
          %s1636 = vtos %v1635
          %v1637 = vstv %s1636
          %v1638 = vmul.f32 %v1613, %v1637
          %v1639 = vmul.f32 %v1614, %v1637
          %v1640 = vmul.f32 %v1615, %v1637
          %v1641 = vmul.f32 %v1638, %v1309
          %v1642 = vmul.f32 %v1639, %v1310
          %v1643 = vmul.f32 %v1640, %v1311
          %v1644 = vadd.f32 %v1641, %v1312
          %v1645 = vadd.f32 %v1642, %v1313
          %v1646 = vadd.f32 %v1643, %v1314
          %1647 = vst [vmem:[%s398] sm:$0xff] %v1644
          %1648 = vst [vmem:[%s398 + $0x8] sm:$0xff] %v1645
          %1649 = vst [vmem:[%s398 + $0x10] sm:$0xff] %v1646
        $region84: #{visual_transformer_forward.2} parent=47 // pred_fallthru
          _
        %s1650 = sand.u32 %s201, 1
        %s1651 = scalar_lea.sflag [#allocation7], %s1650
        %s1652 = sand.u32 %s201, 1
        %s1653 = smul.addr %s1652, 24
        %s1654 = scalar_lea.vmem [#allocation17], %s1653
        // Predicated region
        $region85: #{visual_transformer_forward.2} parent=47 // pred_check
          %p1655 = pneg %p211
        $region86: #{visual_transformer_forward.2} parent=47 // pred_check_branch
          %1657 = sbr.rel (%p1655) target = $region88
        $region87: #{visual_transformer_forward.2} parent=47 // pred_region
          %s1659 = ssub.s32 384, 384
          %1660 = vsyncadd %s1651, %s1659
          %s1661 = smul.addr %s31, 3
          %s1662 = smul.addr %s1661, 128
          %s1663 = scalar_lea.hbm %s7, %s1662
          %s1664 = sshll.u32 %s1654, 4
          %s1665 = int_to_ptr.vmem [resolvable:$true] %s1664
          %1670 = dma.vmem_to_hbm [thread:$0]  %s1665, 384, %s1663, %s1651, 128, 128, 8
        $region88: #{visual_transformer_forward.2} parent=47 // pred_fallthru
          _
      $region48: #{visual_transformer_forward.2} parent=5 // pred_fallthru
        _
      %p1671 = scmp.le.s32.totalorder 2, %s22
      // Predicated region
      $region89: #{visual_transformer_forward.2} parent=5 // pred_check
        %p1672 = pneg %p1671
      $region90: #{visual_transformer_forward.2} parent=5 // pred_check_branch
        %1674 = sbr.rel (%p1672) target = $region92
      $region91: #{visual_transformer_forward.2} parent=5 // pred_region
        %s1675 = ssub.s32 %s22, 2
        // Predicated region
        $region93: #{visual_transformer_forward.2} parent=91 // pred_check
          %p1676 = pneg %p217
        $region94: #{visual_transformer_forward.2} parent=91 // pred_check_branch
          %1678 = sbr.rel (%p1676) target = $region96
        $region95: #{visual_transformer_forward.2} parent=91 // pred_region
          %s1679 = sand.u32 %s202, 1
          %s1680 = scalar_lea.sflag [#allocation7], %s1679
          %s1681 = sand.u32 %s202, 1
          %s1682 = smul.addr %s1681, 24
          %s1683 = scalar_lea.vmem [#allocation17], %s1682
          %1684 = dma.done %s1680, 384
        $region96: #{visual_transformer_forward.2} parent=91 // pred_fallthru
          _
      $region92: #{visual_transformer_forward.2} parent=5 // pred_fallthru
        _
    $region6: #{visual_transformer_forward.2} parent=1 // loop_footer
      %s26 = sadd.s32 1, %s22
    $region7: #{visual_transformer_forward.2} parent=1 // loop_footer_branch
      %21 = sbr.rel target = $region3
    $region8: #{visual_transformer_forward.2} parent=1 // loop_exit
      _
    %1685 = vsyncpa [#allocation6], 1
    %s1686 = scalar_lea.sflag [#allocation6], 1
    %1687 = vsyncpa %s1686, 1
    %1688 = vsyncpa [#allocation9], 1
    %1689 = vsyncpa [#allocation12], 1
    %1690 = vsyncpa [#allocation15], 1
    %1691 = vsyncpa [#allocation7], 1
    %s1692 = scalar_lea.sflag [#allocation7], 1
    %1693 = vsyncpa %s1692, 1

</llo_original>
